<compile_context>
chip_gen: v7x
topology: tpu7x:2x2x1
jax: 0.10.0
libtpu: 0.0.40
codegen_flags: <defaults>
</compile_context>

<pallas_src>
import jax
import jax.numpy as jnp
from jax.experimental import pallas as pl
from jax.experimental.pallas import tpu as pltpu  # noqa: F401  (kept for TPU backend)

# ---------------------------------------------------------------------------
# Model hyper-parameters (consistent with the PyTorch module's forward).
# ---------------------------------------------------------------------------
NUM_LAYERS = 2
EMBED_SIZE = 32
NUM_HEADS = 4
HEAD_DIM = 16                       # hard-coded 16 in the PyTorch module
PROJ_DIM = HEAD_DIM * NUM_HEADS     # 64
QKV_DIM = 3 * PROJ_DIM              # 192
BN_EPS = 1e-5

BATCH = 2
NUM_NODES = 8
M = BATCH * NUM_NODES               # 16 flattened rows


# ---------------------------------------------------------------------------
# Single fused kernel: whole Encoder forward on the (B*N, *) slab.
# ---------------------------------------------------------------------------
def _encoder_kernel(x_ref, wemb_ref, bemb_ref, wqkv_ref, wo_ref,
                    gamma_ref, beta_ref, o_ref):
    # --- embedding Linear(2 -> E) with bias ------------------------------
    h = (jnp.dot(x_ref[...], wemb_ref[...], preferred_element_type=jnp.float32)
         + bemb_ref[...])                                          # (M, E)

    inv_scale = 1.0 / (HEAD_DIM ** 0.5)

    for l in range(NUM_LAYERS):                 # static unroll (L == 2)
        wqkv = wqkv_ref[l]                      # (E, 3*PROJ), VMEM-resident
        wo = wo_ref[l]                          # (PROJ, E)

        # One fused QKV projection for the whole (B*N, E) slab.
        qkv = jnp.dot(h, wqkv, preferred_element_type=jnp.float32)  # (M, 192)

        batch_outs = []
        for b in range(BATCH):                  # static loop (B == 2)
            qkv_b = qkv[b * NUM_NODES:(b + 1) * NUM_NODES, :]       # (N, 192)
            acc = jnp.zeros((NUM_NODES, EMBED_SIZE), jnp.float32)
            for hd in range(NUM_HEADS):         # static loop (H == 4)
                q_h = qkv_b[:, hd * HEAD_DIM:(hd + 1) * HEAD_DIM]
                k_h = qkv_b[:, PROJ_DIM + hd * HEAD_DIM:
                               PROJ_DIM + (hd + 1) * HEAD_DIM]
                v_h = qkv_b[:, 2 * PROJ_DIM + hd * HEAD_DIM:
                               2 * PROJ_DIM + (hd + 1) * HEAD_DIM]
                s = jnp.dot(q_h, k_h.T,
                            preferred_element_type=jnp.float32) * inv_scale
                s = s - jnp.max(s, axis=-1, keepdims=True)
                p = jnp.exp(s)
                p = p / jnp.sum(p, axis=-1, keepdims=True)
                ctx = jnp.dot(p, v_h, preferred_element_type=jnp.float32)
                # Fold the output projection per head (no concatenate):
                acc = acc + jnp.dot(
                    ctx, wo[hd * HEAD_DIM:(hd + 1) * HEAD_DIM, :],
                    preferred_element_type=jnp.float32)
            batch_outs.append(acc)
        a_flat = jnp.concatenate(batch_outs, axis=0)                # (M, E)

        # --- residual + BatchNorm1d (training-mode batch statistics) -----
        # NOTE: reduction is over the full B*N axis (never tiled/sharded),
        # matching PyTorch's h.view(-1, E) -> BatchNorm1d in train mode.
        s_flat = h + a_flat
        mean = jnp.mean(s_flat, axis=0, keepdims=True)              # (1, E)
        var = jnp.mean((s_flat - mean) ** 2, axis=0, keepdims=True)  # biased
        inv = jax.lax.rsqrt(var + BN_EPS)
        h = (s_flat - mean) * inv * gamma_ref[l] + beta_ref[l]

    o_ref[...] = h


def encoder_forward(x, params):
    b, n, _ = x.shape
    assert b == BATCH and n == NUM_NODES

    # Stack per-layer weights so everything rides into VMEM once.
    wqkv = jnp.stack(
        [jnp.concatenate([lp["wq"], lp["wk"], lp["wv"]], axis=1)
         for lp in params["layers"]], axis=0)                       # (L, E, 192)
    wo = jnp.stack([lp["wo"] for lp in params["layers"]], axis=0)   # (L, 64, E)
    gamma = jnp.stack([lp["gamma"] for lp in params["layers"]], axis=0)  # (L,1,E)
    beta = jnp.stack([lp["beta"] for lp in params["layers"]], axis=0)    # (L,1,E)

    out_flat = pl.pallas_call(
        _encoder_kernel,
        out_shape=jax.ShapeDtypeStruct((b * n, EMBED_SIZE), jnp.float32),
    )(x.reshape(b * n, 2), params["w_emb"], params["b_emb"],
      wqkv, wo, gamma, beta)
    return out_flat.reshape(b, n, EMBED_SIZE)
    # NOTE: Encoder.lina / Encoder.linb are defined in __init__ but never used
    # in forward(), so they are intentionally not implemented here.


# ---------------------------------------------------------------------------
# Pure-JAX reference (mirrors the PyTorch math) for a correctness check.
# ---------------------------------------------------------------------------
def reference_forward(x, params):
    b, n, _ = x.shape
    h = x @ params["w_emb"] + params["b_emb"]
    for lp in params["layers"]:
        q = (h @ lp["wq"]).reshape(b, n, NUM_HEADS, HEAD_DIM).transpose(0, 2, 1, 3)
        k = (h @ lp["wk"]).reshape(b, n, NUM_HEADS, HEAD_DIM).transpose(0, 2, 1, 3)
        v = (h @ lp["wv"]).reshape(b, n, NUM_HEADS, HEAD_DIM).transpose(0, 2, 1, 3)
        u = jnp.einsum("bhnd,bhmd->bhnm", q, k) / (HEAD_DIM ** 0.5)
        p = jax.nn.softmax(u, axis=-1)
        o = jnp.einsum("bhnm,bhmd->bhnd", p, v)
        o = o.transpose(0, 2, 1, 3).reshape(b, n, PROJ_DIM) @ lp["wo"]
        s = (h + o).reshape(b * n, EMBED_SIZE)
        mean = s.mean(axis=0, keepdims=True)
        var = ((s - mean) ** 2).mean(axis=0, keepdims=True)
        s = (s - mean) / jnp.sqrt(var + BN_EPS) * lp["gamma"] + lp["beta"]
        h = s.reshape(b, n, EMBED_SIZE)
    return h


# ---------------------------------------------------------------------------
# Deterministic parameter init (weights stored as (in, out)).
# ---------------------------------------------------------------------------
def init_params(key):
    keys = jax.random.split(key, 2 + 4 * NUM_LAYERS)
    params = {
        "w_emb": 0.3 * jax.random.normal(keys[0], (2, EMBED_SIZE), jnp.float32),
        "b_emb": 0.1 * jax.random.normal(keys[1], (1, EMBED_SIZE), jnp.float32),
        "layers": [],
    }
    for i in range(NUM_LAYERS):
        k0, k1, k2, k3 = keys[2 + 4 * i: 6 + 4 * i]
        params["layers"].append(
            {
                "wq": 0.2 * jax.random.normal(k0, (EMBED_SIZE, PROJ_DIM), jnp.float32),
                "wk": 0.2 * jax.random.normal(k1, (EMBED_SIZE, PROJ_DIM), jnp.float32),
                "wv": 0.2 * jax.random.normal(k2, (EMBED_SIZE, PROJ_DIM), jnp.float32),
                "wo": 0.2 * jax.random.normal(k3, (PROJ_DIM, EMBED_SIZE), jnp.float32),
                "gamma": jnp.ones((1, EMBED_SIZE), jnp.float32),   # BN weight init
                "beta": jnp.zeros((1, EMBED_SIZE), jnp.float32),   # BN bias init
            }
        )
    return params


if __name__ == "__main__":
    key = jax.random.PRNGKey(0)
    pkey, xkey = jax.random.split(key)
    params = init_params(pkey)
    # Input: (batch, num_nodes, 2) coordinates, as expected by Encoder.forward.
    x = jax.random.uniform(xkey, (BATCH, NUM_NODES, 2), jnp.float32)

    out = jax.block_until_ready(encoder_forward(x, params))
    ref = jax.block_until_ready(reference_forward(x, params))

    assert out.shape == (BATCH, NUM_NODES, EMBED_SIZE)
    assert jnp.allclose(out, ref, rtol=1e-4, atol=1e-4), "mismatch vs reference"
    print("KERNEL_OK")
</pallas_src>

<mosaic_0001>
module attributes {stable_mosaic.version = 11 : i64} {
  func.func @_encoder_kernel(%arg0: memref<16x2xf32, #tpu.memory_space<vmem>>, %arg1: memref<2x32xf32, #tpu.memory_space<vmem>>, %arg2: memref<1x32xf32, #tpu.memory_space<vmem>>, %arg3: memref<2x32x192xf32, #tpu.memory_space<vmem>>, %arg4: memref<2x64x32xf32, #tpu.memory_space<vmem>>, %arg5: memref<2x1x32xf32, #tpu.memory_space<vmem>>, %arg6: memref<2x1x32xf32, #tpu.memory_space<vmem>>, %arg7: memref<16x32xf32, #tpu.memory_space<vmem>>) attributes {dimension_semantics = [], scalar_prefetch = 0 : i64, scratch_operands = 0 : i64, tpu.core_type = #tpu.core_type<tc>} {
    %c0 = arith.constant 0 : index
    %c0_0 = arith.constant 0 : index
    %0 = vector.load %arg0[%c0, %c0_0] : memref<16x2xf32, #tpu.memory_space<vmem>>, vector<16x2xf32>
    %c0_1 = arith.constant 0 : index
    %c0_2 = arith.constant 0 : index
    %1 = vector.load %arg1[%c0_1, %c0_2] : memref<2x32xf32, #tpu.memory_space<vmem>>, vector<2x32xf32>
    %cst = arith.constant dense<0.000000e+00> : vector<16x32xf32>
    %2 = tpu.matmul %0, %1, %cst {dimension_numbers = #tpu.dot_dimension_numbers<[1], [0], [0], [1], [0, 0, 1, 1], [], []>} : vector<16x2xf32>, vector<2x32xf32>, vector<16x32xf32> -> vector<16x32xf32>
    %c0_3 = arith.constant 0 : index
    %c0_4 = arith.constant 0 : index
    %3 = vector.load %arg2[%c0_3, %c0_4] : memref<1x32xf32, #tpu.memory_space<vmem>>, vector<1x32xf32>
    %4 = vector.broadcast %3 : vector<1x32xf32> to vector<16x32xf32>
    %5 = arith.addf %2, %4 : vector<16x32xf32>
    %c0_5 = arith.constant 0 : index
    %c0_6 = arith.constant 0 : index
    %c0_7 = arith.constant 0 : index
    %6 = vector.load %arg3[%c0_5, %c0_6, %c0_7] : memref<2x32x192xf32, #tpu.memory_space<vmem>>, vector<1x32x192xf32>
    %7 = vector.shape_cast %6 : vector<1x32x192xf32> to vector<32x192xf32>
    %c0_8 = arith.constant 0 : index
    %c0_9 = arith.constant 0 : index
    %c0_10 = arith.constant 0 : index
    %8 = vector.load %arg4[%c0_8, %c0_9, %c0_10] : memref<2x64x32xf32, #tpu.memory_space<vmem>>, vector<1x64x32xf32>
    %9 = vector.shape_cast %8 : vector<1x64x32xf32> to vector<64x32xf32>
    %cst_11 = arith.constant dense<0.000000e+00> : vector<16x192xf32>
    %10 = tpu.matmul %5, %7, %cst_11 {dimension_numbers = #tpu.dot_dimension_numbers<[1], [0], [0], [1], [0, 0, 1, 1], [], []>} : vector<16x32xf32>, vector<32x192xf32>, vector<16x192xf32> -> vector<16x192xf32>
    %11 = vector.extract_strided_slice %10 {offsets = [0, 0], sizes = [8, 192], strides = [1, 1]} : vector<16x192xf32> to vector<8x192xf32>
    %cst_12 = arith.constant 0.000000e+00 : f32
    %12 = vector.broadcast %cst_12 : f32 to vector<8x32xf32>
    %13 = vector.extract_strided_slice %11 {offsets = [0, 0], sizes = [8, 16], strides = [1, 1]} : vector<8x192xf32> to vector<8x16xf32>
    %14 = vector.extract_strided_slice %11 {offsets = [0, 64], sizes = [8, 16], strides = [1, 1]} : vector<8x192xf32> to vector<8x16xf32>
    %15 = vector.extract_strided_slice %11 {offsets = [0, 128], sizes = [8, 16], strides = [1, 1]} : vector<8x192xf32> to vector<8x16xf32>
    %16 = tpu.transpose %14, [1, 0] : vector<8x16xf32> -> vector<16x8xf32>
    %cst_13 = arith.constant dense<0.000000e+00> : vector<8x8xf32>
    %17 = tpu.matmul %13, %16, %cst_13 {dimension_numbers = #tpu.dot_dimension_numbers<[1], [0], [0], [1], [0, 0, 1, 1], [], []>} : vector<8x16xf32>, vector<16x8xf32>, vector<8x8xf32> -> vector<8x8xf32>
    %cst_14 = arith.constant 2.500000e-01 : f32
    %18 = vector.broadcast %cst_14 : f32 to vector<8x8xf32>
    %19 = arith.mulf %17, %18 : vector<8x8xf32>
    %cst_15 = arith.constant dense<0xFF800000> : vector<8xf32>
    %20 = vector.multi_reduction <maximumf>, %19, %cst_15 [1] : vector<8x8xf32> to vector<8xf32>
    %21 = vector.shape_cast %20 : vector<8xf32> to vector<8x1xf32>
    %22 = vector.broadcast %21 : vector<8x1xf32> to vector<8x8xf32>
    %23 = arith.subf %19, %22 : vector<8x8xf32>
    %24 = math.exp %23 : vector<8x8xf32>
    %cst_16 = arith.constant dense<0.000000e+00> : vector<8xf32>
    %25 = vector.multi_reduction <add>, %24, %cst_16 [1] : vector<8x8xf32> to vector<8xf32>
    %26 = vector.shape_cast %25 : vector<8xf32> to vector<8x1xf32>
    %27 = vector.broadcast %26 : vector<8x1xf32> to vector<8x8xf32>
    %28 = arith.divf %24, %27 : vector<8x8xf32>
    %cst_17 = arith.constant dense<0.000000e+00> : vector<8x16xf32>
    %29 = tpu.matmul %28, %15, %cst_17 {dimension_numbers = #tpu.dot_dimension_numbers<[1], [0], [0], [1], [0, 0, 1, 1], [], []>} : vector<8x8xf32>, vector<8x16xf32>, vector<8x16xf32> -> vector<8x16xf32>
    %30 = vector.extract_strided_slice %9 {offsets = [0, 0], sizes = [16, 32], strides = [1, 1]} : vector<64x32xf32> to vector<16x32xf32>
    %cst_18 = arith.constant dense<0.000000e+00> : vector<8x32xf32>
    %31 = tpu.matmul %29, %30, %cst_18 {dimension_numbers = #tpu.dot_dimension_numbers<[1], [0], [0], [1], [0, 0, 1, 1], [], []>} : vector<8x16xf32>, vector<16x32xf32>, vector<8x32xf32> -> vector<8x32xf32>
    %32 = arith.addf %12, %31 : vector<8x32xf32>
    %33 = vector.extract_strided_slice %11 {offsets = [0, 16], sizes = [8, 16], strides = [1, 1]} : vector<8x192xf32> to vector<8x16xf32>
    %34 = vector.extract_strided_slice %11 {offsets = [0, 80], sizes = [8, 16], strides = [1, 1]} : vector<8x192xf32> to vector<8x16xf32>
    %35 = vector.extract_strided_slice %11 {offsets = [0, 144], sizes = [8, 16], strides = [1, 1]} : vector<8x192xf32> to vector<8x16xf32>
    %36 = tpu.transpose %34, [1, 0] : vector<8x16xf32> -> vector<16x8xf32>
    %cst_19 = arith.constant dense<0.000000e+00> : vector<8x8xf32>
    %37 = tpu.matmul %33, %36, %cst_19 {dimension_numbers = #tpu.dot_dimension_numbers<[1], [0], [0], [1], [0, 0, 1, 1], [], []>} : vector<8x16xf32>, vector<16x8xf32>, vector<8x8xf32> -> vector<8x8xf32>
    %cst_20 = arith.constant 2.500000e-01 : f32
    %38 = vector.broadcast %cst_20 : f32 to vector<8x8xf32>
    %39 = arith.mulf %37, %38 : vector<8x8xf32>
    %cst_21 = arith.constant dense<0xFF800000> : vector<8xf32>
    %40 = vector.multi_reduction <maximumf>, %39, %cst_21 [1] : vector<8x8xf32> to vector<8xf32>
    %41 = vector.shape_cast %40 : vector<8xf32> to vector<8x1xf32>
    %42 = vector.broadcast %41 : vector<8x1xf32> to vector<8x8xf32>
    %43 = arith.subf %39, %42 : vector<8x8xf32>
    %44 = math.exp %43 : vector<8x8xf32>
    %cst_22 = arith.constant dense<0.000000e+00> : vector<8xf32>
    %45 = vector.multi_reduction <add>, %44, %cst_22 [1] : vector<8x8xf32> to vector<8xf32>
    %46 = vector.shape_cast %45 : vector<8xf32> to vector<8x1xf32>
    %47 = vector.broadcast %46 : vector<8x1xf32> to vector<8x8xf32>
    %48 = arith.divf %44, %47 : vector<8x8xf32>
    %cst_23 = arith.constant dense<0.000000e+00> : vector<8x16xf32>
    %49 = tpu.matmul %48, %35, %cst_23 {dimension_numbers = #tpu.dot_dimension_numbers<[1], [0], [0], [1], [0, 0, 1, 1], [], []>} : vector<8x8xf32>, vector<8x16xf32>, vector<8x16xf32> -> vector<8x16xf32>
    %50 = vector.extract_strided_slice %9 {offsets = [16, 0], sizes = [16, 32], strides = [1, 1]} : vector<64x32xf32> to vector<16x32xf32>
    %cst_24 = arith.constant dense<0.000000e+00> : vector<8x32xf32>
    %51 = tpu.matmul %49, %50, %cst_24 {dimension_numbers = #tpu.dot_dimension_numbers<[1], [0], [0], [1], [0, 0, 1, 1], [], []>} : vector<8x16xf32>, vector<16x32xf32>, vector<8x32xf32> -> vector<8x32xf32>
    %52 = arith.addf %32, %51 : vector<8x32xf32>
    %53 = vector.extract_strided_slice %11 {offsets = [0, 32], sizes = [8, 16], strides = [1, 1]} : vector<8x192xf32> to vector<8x16xf32>
    %54 = vector.extract_strided_slice %11 {offsets = [0, 96], sizes = [8, 16], strides = [1, 1]} : vector<8x192xf32> to vector<8x16xf32>
    %55 = vector.extract_strided_slice %11 {offsets = [0, 160], sizes = [8, 16], strides = [1, 1]} : vector<8x192xf32> to vector<8x16xf32>
    %56 = tpu.transpose %54, [1, 0] : vector<8x16xf32> -> vector<16x8xf32>
    %cst_25 = arith.constant dense<0.000000e+00> : vector<8x8xf32>
    %57 = tpu.matmul %53, %56, %cst_25 {dimension_numbers = #tpu.dot_dimension_numbers<[1], [0], [0], [1], [0, 0, 1, 1], [], []>} : vector<8x16xf32>, vector<16x8xf32>, vector<8x8xf32> -> vector<8x8xf32>
    %cst_26 = arith.constant 2.500000e-01 : f32
    %58 = vector.broadcast %cst_26 : f32 to vector<8x8xf32>
    %59 = arith.mulf %57, %58 : vector<8x8xf32>
    %cst_27 = arith.constant dense<0xFF800000> : vector<8xf32>
    %60 = vector.multi_reduction <maximumf>, %59, %cst_27 [1] : vector<8x8xf32> to vector<8xf32>
    %61 = vector.shape_cast %60 : vector<8xf32> to vector<8x1xf32>
    %62 = vector.broadcast %61 : vector<8x1xf32> to vector<8x8xf32>
    %63 = arith.subf %59, %62 : vector<8x8xf32>
    %64 = math.exp %63 : vector<8x8xf32>
    %cst_28 = arith.constant dense<0.000000e+00> : vector<8xf32>
    %65 = vector.multi_reduction <add>, %64, %cst_28 [1] : vector<8x8xf32> to vector<8xf32>
    %66 = vector.shape_cast %65 : vector<8xf32> to vector<8x1xf32>
    %67 = vector.broadcast %66 : vector<8x1xf32> to vector<8x8xf32>
    %68 = arith.divf %64, %67 : vector<8x8xf32>
    %cst_29 = arith.constant dense<0.000000e+00> : vector<8x16xf32>
    %69 = tpu.matmul %68, %55, %cst_29 {dimension_numbers = #tpu.dot_dimension_numbers<[1], [0], [0], [1], [0, 0, 1, 1], [], []>} : vector<8x8xf32>, vector<8x16xf32>, vector<8x16xf32> -> vector<8x16xf32>
    %70 = vector.extract_strided_slice %9 {offsets = [32, 0], sizes = [16, 32], strides = [1, 1]} : vector<64x32xf32> to vector<16x32xf32>
    %cst_30 = arith.constant dense<0.000000e+00> : vector<8x32xf32>
    %71 = tpu.matmul %69, %70, %cst_30 {dimension_numbers = #tpu.dot_dimension_numbers<[1], [0], [0], [1], [0, 0, 1, 1], [], []>} : vector<8x16xf32>, vector<16x32xf32>, vector<8x32xf32> -> vector<8x32xf32>
    %72 = arith.addf %52, %71 : vector<8x32xf32>
    %73 = vector.extract_strided_slice %11 {offsets = [0, 48], sizes = [8, 16], strides = [1, 1]} : vector<8x192xf32> to vector<8x16xf32>
    %74 = vector.extract_strided_slice %11 {offsets = [0, 112], sizes = [8, 16], strides = [1, 1]} : vector<8x192xf32> to vector<8x16xf32>
    %75 = vector.extract_strided_slice %11 {offsets = [0, 176], sizes = [8, 16], strides = [1, 1]} : vector<8x192xf32> to vector<8x16xf32>
    %76 = tpu.transpose %74, [1, 0] : vector<8x16xf32> -> vector<16x8xf32>
    %cst_31 = arith.constant dense<0.000000e+00> : vector<8x8xf32>
    %77 = tpu.matmul %73, %76, %cst_31 {dimension_numbers = #tpu.dot_dimension_numbers<[1], [0], [0], [1], [0, 0, 1, 1], [], []>} : vector<8x16xf32>, vector<16x8xf32>, vector<8x8xf32> -> vector<8x8xf32>
    %cst_32 = arith.constant 2.500000e-01 : f32
    %78 = vector.broadcast %cst_32 : f32 to vector<8x8xf32>
    %79 = arith.mulf %77, %78 : vector<8x8xf32>
    %cst_33 = arith.constant dense<0xFF800000> : vector<8xf32>
    %80 = vector.multi_reduction <maximumf>, %79, %cst_33 [1] : vector<8x8xf32> to vector<8xf32>
    %81 = vector.shape_cast %80 : vector<8xf32> to vector<8x1xf32>
    %82 = vector.broadcast %81 : vector<8x1xf32> to vector<8x8xf32>
    %83 = arith.subf %79, %82 : vector<8x8xf32>
    %84 = math.exp %83 : vector<8x8xf32>
    %cst_34 = arith.constant dense<0.000000e+00> : vector<8xf32>
    %85 = vector.multi_reduction <add>, %84, %cst_34 [1] : vector<8x8xf32> to vector<8xf32>
    %86 = vector.shape_cast %85 : vector<8xf32> to vector<8x1xf32>
    %87 = vector.broadcast %86 : vector<8x1xf32> to vector<8x8xf32>
    %88 = arith.divf %84, %87 : vector<8x8xf32>
    %cst_35 = arith.constant dense<0.000000e+00> : vector<8x16xf32>
    %89 = tpu.matmul %88, %75, %cst_35 {dimension_numbers = #tpu.dot_dimension_numbers<[1], [0], [0], [1], [0, 0, 1, 1], [], []>} : vector<8x8xf32>, vector<8x16xf32>, vector<8x16xf32> -> vector<8x16xf32>
    %90 = vector.extract_strided_slice %9 {offsets = [48, 0], sizes = [16, 32], strides = [1, 1]} : vector<64x32xf32> to vector<16x32xf32>
    %cst_36 = arith.constant dense<0.000000e+00> : vector<8x32xf32>
    %91 = tpu.matmul %89, %90, %cst_36 {dimension_numbers = #tpu.dot_dimension_numbers<[1], [0], [0], [1], [0, 0, 1, 1], [], []>} : vector<8x16xf32>, vector<16x32xf32>, vector<8x32xf32> -> vector<8x32xf32>
    %92 = arith.addf %72, %91 : vector<8x32xf32>
    %93 = vector.extract_strided_slice %10 {offsets = [8, 0], sizes = [8, 192], strides = [1, 1]} : vector<16x192xf32> to vector<8x192xf32>
    %cst_37 = arith.constant 0.000000e+00 : f32
    %94 = vector.broadcast %cst_37 : f32 to vector<8x32xf32>
    %95 = vector.extract_strided_slice %93 {offsets = [0, 0], sizes = [8, 16], strides = [1, 1]} : vector<8x192xf32> to vector<8x16xf32>
    %96 = vector.extract_strided_slice %93 {offsets = [0, 64], sizes = [8, 16], strides = [1, 1]} : vector<8x192xf32> to vector<8x16xf32>
    %97 = vector.extract_strided_slice %93 {offsets = [0, 128], sizes = [8, 16], strides = [1, 1]} : vector<8x192xf32> to vector<8x16xf32>
    %98 = tpu.transpose %96, [1, 0] : vector<8x16xf32> -> vector<16x8xf32>
    %cst_38 = arith.constant dense<0.000000e+00> : vector<8x8xf32>
    %99 = tpu.matmul %95, %98, %cst_38 {dimension_numbers = #tpu.dot_dimension_numbers<[1], [0], [0], [1], [0, 0, 1, 1], [], []>} : vector<8x16xf32>, vector<16x8xf32>, vector<8x8xf32> -> vector<8x8xf32>
    %cst_39 = arith.constant 2.500000e-01 : f32
    %100 = vector.broadcast %cst_39 : f32 to vector<8x8xf32>
    %101 = arith.mulf %99, %100 : vector<8x8xf32>
    %cst_40 = arith.constant dense<0xFF800000> : vector<8xf32>
    %102 = vector.multi_reduction <maximumf>, %101, %cst_40 [1] : vector<8x8xf32> to vector<8xf32>
    %103 = vector.shape_cast %102 : vector<8xf32> to vector<8x1xf32>
    %104 = vector.broadcast %103 : vector<8x1xf32> to vector<8x8xf32>
    %105 = arith.subf %101, %104 : vector<8x8xf32>
    %106 = math.exp %105 : vector<8x8xf32>
    %cst_41 = arith.constant dense<0.000000e+00> : vector<8xf32>
    %107 = vector.multi_reduction <add>, %106, %cst_41 [1] : vector<8x8xf32> to vector<8xf32>
    %108 = vector.shape_cast %107 : vector<8xf32> to vector<8x1xf32>
    %109 = vector.broadcast %108 : vector<8x1xf32> to vector<8x8xf32>
    %110 = arith.divf %106, %109 : vector<8x8xf32>
    %cst_42 = arith.constant dense<0.000000e+00> : vector<8x16xf32>
    %111 = tpu.matmul %110, %97, %cst_42 {dimension_numbers = #tpu.dot_dimension_numbers<[1], [0], [0], [1], [0, 0, 1, 1], [], []>} : vector<8x8xf32>, vector<8x16xf32>, vector<8x16xf32> -> vector<8x16xf32>
    %112 = vector.extract_strided_slice %9 {offsets = [0, 0], sizes = [16, 32], strides = [1, 1]} : vector<64x32xf32> to vector<16x32xf32>
    %cst_43 = arith.constant dense<0.000000e+00> : vector<8x32xf32>
    %113 = tpu.matmul %111, %112, %cst_43 {dimension_numbers = #tpu.dot_dimension_numbers<[1], [0], [0], [1], [0, 0, 1, 1], [], []>} : vector<8x16xf32>, vector<16x32xf32>, vector<8x32xf32> -> vector<8x32xf32>
    %114 = arith.addf %94, %113 : vector<8x32xf32>
    %115 = vector.extract_strided_slice %93 {offsets = [0, 16], sizes = [8, 16], strides = [1, 1]} : vector<8x192xf32> to vector<8x16xf32>
    %116 = vector.extract_strided_slice %93 {offsets = [0, 80], sizes = [8, 16], strides = [1, 1]} : vector<8x192xf32> to vector<8x16xf32>
    %117 = vector.extract_strided_slice %93 {offsets = [0, 144], sizes = [8, 16], strides = [1, 1]} : vector<8x192xf32> to vector<8x16xf32>
    %118 = tpu.transpose %116, [1, 0] : vector<8x16xf32> -> vector<16x8xf32>
    %cst_44 = arith.constant dense<0.000000e+00> : vector<8x8xf32>
    %119 = tpu.matmul %115, %118, %cst_44 {dimension_numbers = #tpu.dot_dimension_numbers<[1], [0], [0], [1], [0, 0, 1, 1], [], []>} : vector<8x16xf32>, vector<16x8xf32>, vector<8x8xf32> -> vector<8x8xf32>
    %cst_45 = arith.constant 2.500000e-01 : f32
    %120 = vector.broadcast %cst_45 : f32 to vector<8x8xf32>
    %121 = arith.mulf %119, %120 : vector<8x8xf32>
    %cst_46 = arith.constant dense<0xFF800000> : vector<8xf32>
    %122 = vector.multi_reduction <maximumf>, %121, %cst_46 [1] : vector<8x8xf32> to vector<8xf32>
    %123 = vector.shape_cast %122 : vector<8xf32> to vector<8x1xf32>
    %124 = vector.broadcast %123 : vector<8x1xf32> to vector<8x8xf32>
    %125 = arith.subf %121, %124 : vector<8x8xf32>
    %126 = math.exp %125 : vector<8x8xf32>
    %cst_47 = arith.constant dense<0.000000e+00> : vector<8xf32>
    %127 = vector.multi_reduction <add>, %126, %cst_47 [1] : vector<8x8xf32> to vector<8xf32>
    %128 = vector.shape_cast %127 : vector<8xf32> to vector<8x1xf32>
    %129 = vector.broadcast %128 : vector<8x1xf32> to vector<8x8xf32>
    %130 = arith.divf %126, %129 : vector<8x8xf32>
    %cst_48 = arith.constant dense<0.000000e+00> : vector<8x16xf32>
    %131 = tpu.matmul %130, %117, %cst_48 {dimension_numbers = #tpu.dot_dimension_numbers<[1], [0], [0], [1], [0, 0, 1, 1], [], []>} : vector<8x8xf32>, vector<8x16xf32>, vector<8x16xf32> -> vector<8x16xf32>
    %132 = vector.extract_strided_slice %9 {offsets = [16, 0], sizes = [16, 32], strides = [1, 1]} : vector<64x32xf32> to vector<16x32xf32>
    %cst_49 = arith.constant dense<0.000000e+00> : vector<8x32xf32>
    %133 = tpu.matmul %131, %132, %cst_49 {dimension_numbers = #tpu.dot_dimension_numbers<[1], [0], [0], [1], [0, 0, 1, 1], [], []>} : vector<8x16xf32>, vector<16x32xf32>, vector<8x32xf32> -> vector<8x32xf32>
    %134 = arith.addf %114, %133 : vector<8x32xf32>
    %135 = vector.extract_strided_slice %93 {offsets = [0, 32], sizes = [8, 16], strides = [1, 1]} : vector<8x192xf32> to vector<8x16xf32>
    %136 = vector.extract_strided_slice %93 {offsets = [0, 96], sizes = [8, 16], strides = [1, 1]} : vector<8x192xf32> to vector<8x16xf32>
    %137 = vector.extract_strided_slice %93 {offsets = [0, 160], sizes = [8, 16], strides = [1, 1]} : vector<8x192xf32> to vector<8x16xf32>
    %138 = tpu.transpose %136, [1, 0] : vector<8x16xf32> -> vector<16x8xf32>
    %cst_50 = arith.constant dense<0.000000e+00> : vector<8x8xf32>
    %139 = tpu.matmul %135, %138, %cst_50 {dimension_numbers = #tpu.dot_dimension_numbers<[1], [0], [0], [1], [0, 0, 1, 1], [], []>} : vector<8x16xf32>, vector<16x8xf32>, vector<8x8xf32> -> vector<8x8xf32>
    %cst_51 = arith.constant 2.500000e-01 : f32
    %140 = vector.broadcast %cst_51 : f32 to vector<8x8xf32>
    %141 = arith.mulf %139, %140 : vector<8x8xf32>
    %cst_52 = arith.constant dense<0xFF800000> : vector<8xf32>
    %142 = vector.multi_reduction <maximumf>, %141, %cst_52 [1] : vector<8x8xf32> to vector<8xf32>
    %143 = vector.shape_cast %142 : vector<8xf32> to vector<8x1xf32>
    %144 = vector.broadcast %143 : vector<8x1xf32> to vector<8x8xf32>
    %145 = arith.subf %141, %144 : vector<8x8xf32>
    %146 = math.exp %145 : vector<8x8xf32>
    %cst_53 = arith.constant dense<0.000000e+00> : vector<8xf32>
    %147 = vector.multi_reduction <add>, %146, %cst_53 [1] : vector<8x8xf32> to vector<8xf32>
    %148 = vector.shape_cast %147 : vector<8xf32> to vector<8x1xf32>
    %149 = vector.broadcast %148 : vector<8x1xf32> to vector<8x8xf32>
    %150 = arith.divf %146, %149 : vector<8x8xf32>
    %cst_54 = arith.constant dense<0.000000e+00> : vector<8x16xf32>
    %151 = tpu.matmul %150, %137, %cst_54 {dimension_numbers = #tpu.dot_dimension_numbers<[1], [0], [0], [1], [0, 0, 1, 1], [], []>} : vector<8x8xf32>, vector<8x16xf32>, vector<8x16xf32> -> vector<8x16xf32>
    %152 = vector.extract_strided_slice %9 {offsets = [32, 0], sizes = [16, 32], strides = [1, 1]} : vector<64x32xf32> to vector<16x32xf32>
    %cst_55 = arith.constant dense<0.000000e+00> : vector<8x32xf32>
    %153 = tpu.matmul %151, %152, %cst_55 {dimension_numbers = #tpu.dot_dimension_numbers<[1], [0], [0], [1], [0, 0, 1, 1], [], []>} : vector<8x16xf32>, vector<16x32xf32>, vector<8x32xf32> -> vector<8x32xf32>
    %154 = arith.addf %134, %153 : vector<8x32xf32>
    %155 = vector.extract_strided_slice %93 {offsets = [0, 48], sizes = [8, 16], strides = [1, 1]} : vector<8x192xf32> to vector<8x16xf32>
    %156 = vector.extract_strided_slice %93 {offsets = [0, 112], sizes = [8, 16], strides = [1, 1]} : vector<8x192xf32> to vector<8x16xf32>
    %157 = vector.extract_strided_slice %93 {offsets = [0, 176], sizes = [8, 16], strides = [1, 1]} : vector<8x192xf32> to vector<8x16xf32>
    %158 = tpu.transpose %156, [1, 0] : vector<8x16xf32> -> vector<16x8xf32>
    %cst_56 = arith.constant dense<0.000000e+00> : vector<8x8xf32>
    %159 = tpu.matmul %155, %158, %cst_56 {dimension_numbers = #tpu.dot_dimension_numbers<[1], [0], [0], [1], [0, 0, 1, 1], [], []>} : vector<8x16xf32>, vector<16x8xf32>, vector<8x8xf32> -> vector<8x8xf32>
    %cst_57 = arith.constant 2.500000e-01 : f32
    %160 = vector.broadcast %cst_57 : f32 to vector<8x8xf32>
    %161 = arith.mulf %159, %160 : vector<8x8xf32>
    %cst_58 = arith.constant dense<0xFF800000> : vector<8xf32>
    %162 = vector.multi_reduction <maximumf>, %161, %cst_58 [1] : vector<8x8xf32> to vector<8xf32>
    %163 = vector.shape_cast %162 : vector<8xf32> to vector<8x1xf32>
    %164 = vector.broadcast %163 : vector<8x1xf32> to vector<8x8xf32>
    %165 = arith.subf %161, %164 : vector<8x8xf32>
    %166 = math.exp %165 : vector<8x8xf32>
    %cst_59 = arith.constant dense<0.000000e+00> : vector<8xf32>
    %167 = vector.multi_reduction <add>, %166, %cst_59 [1] : vector<8x8xf32> to vector<8xf32>
    %168 = vector.shape_cast %167 : vector<8xf32> to vector<8x1xf32>
    %169 = vector.broadcast %168 : vector<8x1xf32> to vector<8x8xf32>
    %170 = arith.divf %166, %169 : vector<8x8xf32>
    %cst_60 = arith.constant dense<0.000000e+00> : vector<8x16xf32>
    %171 = tpu.matmul %170, %157, %cst_60 {dimension_numbers = #tpu.dot_dimension_numbers<[1], [0], [0], [1], [0, 0, 1, 1], [], []>} : vector<8x8xf32>, vector<8x16xf32>, vector<8x16xf32> -> vector<8x16xf32>
    %172 = vector.extract_strided_slice %9 {offsets = [48, 0], sizes = [16, 32], strides = [1, 1]} : vector<64x32xf32> to vector<16x32xf32>
    %cst_61 = arith.constant dense<0.000000e+00> : vector<8x32xf32>
    %173 = tpu.matmul %171, %172, %cst_61 {dimension_numbers = #tpu.dot_dimension_numbers<[1], [0], [0], [1], [0, 0, 1, 1], [], []>} : vector<8x16xf32>, vector<16x32xf32>, vector<8x32xf32> -> vector<8x32xf32>
    %174 = arith.addf %154, %173 : vector<8x32xf32>
    %175 = tpu.concatenate %92, %174 in 0 : vector<8x32xf32>, vector<8x32xf32> -> vector<16x32xf32>
    %176 = arith.addf %5, %175 : vector<16x32xf32>
    %cst_62 = arith.constant dense<0.000000e+00> : vector<32xf32>
    %177 = vector.multi_reduction <add>, %176, %cst_62 [0] : vector<16x32xf32> to vector<32xf32>
    %178 = vector.shape_cast %177 : vector<32xf32> to vector<1x32xf32>
    %cst_63 = arith.constant 1.600000e+01 : f32
    %179 = vector.broadcast %cst_63 : f32 to vector<1x32xf32>
    %180 = arith.divf %178, %179 : vector<1x32xf32>
    %181 = vector.broadcast %180 : vector<1x32xf32> to vector<16x32xf32>
    %182 = arith.subf %176, %181 : vector<16x32xf32>
    %183 = arith.mulf %182, %182 : vector<16x32xf32>
    %cst_64 = arith.constant dense<0.000000e+00> : vector<32xf32>
    %184 = vector.multi_reduction <add>, %183, %cst_64 [0] : vector<16x32xf32> to vector<32xf32>
    %185 = vector.shape_cast %184 : vector<32xf32> to vector<1x32xf32>
    %cst_65 = arith.constant 1.600000e+01 : f32
    %186 = vector.broadcast %cst_65 : f32 to vector<1x32xf32>
    %187 = arith.divf %185, %186 : vector<1x32xf32>
    %cst_66 = arith.constant 9.99999974E-6 : f32
    %188 = vector.broadcast %cst_66 : f32 to vector<1x32xf32>
    %189 = arith.addf %187, %188 : vector<1x32xf32>
    %190 = math.rsqrt %189 : vector<1x32xf32>
    %191 = vector.broadcast %180 : vector<1x32xf32> to vector<16x32xf32>
    %192 = arith.subf %176, %191 : vector<16x32xf32>
    %193 = vector.broadcast %190 : vector<1x32xf32> to vector<16x32xf32>
    %194 = arith.mulf %192, %193 : vector<16x32xf32>
    %c0_67 = arith.constant 0 : index
    %c0_68 = arith.constant 0 : index
    %c0_69 = arith.constant 0 : index
    %195 = vector.load %arg5[%c0_67, %c0_68, %c0_69] : memref<2x1x32xf32, #tpu.memory_space<vmem>>, vector<1x1x32xf32>
    %196 = vector.shape_cast %195 : vector<1x1x32xf32> to vector<1x32xf32>
    %197 = vector.broadcast %196 : vector<1x32xf32> to vector<16x32xf32>
    %198 = arith.mulf %194, %197 : vector<16x32xf32>
    %c0_70 = arith.constant 0 : index
    %c0_71 = arith.constant 0 : index
    %c0_72 = arith.constant 0 : index
    %199 = vector.load %arg6[%c0_70, %c0_71, %c0_72] : memref<2x1x32xf32, #tpu.memory_space<vmem>>, vector<1x1x32xf32>
    %200 = vector.shape_cast %199 : vector<1x1x32xf32> to vector<1x32xf32>
    %201 = vector.broadcast %200 : vector<1x32xf32> to vector<16x32xf32>
    %202 = arith.addf %198, %201 : vector<16x32xf32>
    %c1 = arith.constant 1 : index
    %c0_73 = arith.constant 0 : index
    %c0_74 = arith.constant 0 : index
    %203 = vector.load %arg3[%c1, %c0_73, %c0_74] : memref<2x32x192xf32, #tpu.memory_space<vmem>>, vector<1x32x192xf32>
    %204 = vector.shape_cast %203 : vector<1x32x192xf32> to vector<32x192xf32>
    %c1_75 = arith.constant 1 : index
    %c0_76 = arith.constant 0 : index
    %c0_77 = arith.constant 0 : index
    %205 = vector.load %arg4[%c1_75, %c0_76, %c0_77] : memref<2x64x32xf32, #tpu.memory_space<vmem>>, vector<1x64x32xf32>
    %206 = vector.shape_cast %205 : vector<1x64x32xf32> to vector<64x32xf32>
    %cst_78 = arith.constant dense<0.000000e+00> : vector<16x192xf32>
    %207 = tpu.matmul %202, %204, %cst_78 {dimension_numbers = #tpu.dot_dimension_numbers<[1], [0], [0], [1], [0, 0, 1, 1], [], []>} : vector<16x32xf32>, vector<32x192xf32>, vector<16x192xf32> -> vector<16x192xf32>
    %208 = vector.extract_strided_slice %207 {offsets = [0, 0], sizes = [8, 192], strides = [1, 1]} : vector<16x192xf32> to vector<8x192xf32>
    %cst_79 = arith.constant 0.000000e+00 : f32
    %209 = vector.broadcast %cst_79 : f32 to vector<8x32xf32>
    %210 = vector.extract_strided_slice %208 {offsets = [0, 0], sizes = [8, 16], strides = [1, 1]} : vector<8x192xf32> to vector<8x16xf32>
    %211 = vector.extract_strided_slice %208 {offsets = [0, 64], sizes = [8, 16], strides = [1, 1]} : vector<8x192xf32> to vector<8x16xf32>
    %212 = vector.extract_strided_slice %208 {offsets = [0, 128], sizes = [8, 16], strides = [1, 1]} : vector<8x192xf32> to vector<8x16xf32>
    %213 = tpu.transpose %211, [1, 0] : vector<8x16xf32> -> vector<16x8xf32>
    %cst_80 = arith.constant dense<0.000000e+00> : vector<8x8xf32>
    %214 = tpu.matmul %210, %213, %cst_80 {dimension_numbers = #tpu.dot_dimension_numbers<[1], [0], [0], [1], [0, 0, 1, 1], [], []>} : vector<8x16xf32>, vector<16x8xf32>, vector<8x8xf32> -> vector<8x8xf32>
    %cst_81 = arith.constant 2.500000e-01 : f32
    %215 = vector.broadcast %cst_81 : f32 to vector<8x8xf32>
    %216 = arith.mulf %214, %215 : vector<8x8xf32>
    %cst_82 = arith.constant dense<0xFF800000> : vector<8xf32>
    %217 = vector.multi_reduction <maximumf>, %216, %cst_82 [1] : vector<8x8xf32> to vector<8xf32>
    %218 = vector.shape_cast %217 : vector<8xf32> to vector<8x1xf32>
    %219 = vector.broadcast %218 : vector<8x1xf32> to vector<8x8xf32>
    %220 = arith.subf %216, %219 : vector<8x8xf32>
    %221 = math.exp %220 : vector<8x8xf32>
    %cst_83 = arith.constant dense<0.000000e+00> : vector<8xf32>
    %222 = vector.multi_reduction <add>, %221, %cst_83 [1] : vector<8x8xf32> to vector<8xf32>
    %223 = vector.shape_cast %222 : vector<8xf32> to vector<8x1xf32>
    %224 = vector.broadcast %223 : vector<8x1xf32> to vector<8x8xf32>
    %225 = arith.divf %221, %224 : vector<8x8xf32>
    %cst_84 = arith.constant dense<0.000000e+00> : vector<8x16xf32>
    %226 = tpu.matmul %225, %212, %cst_84 {dimension_numbers = #tpu.dot_dimension_numbers<[1], [0], [0], [1], [0, 0, 1, 1], [], []>} : vector<8x8xf32>, vector<8x16xf32>, vector<8x16xf32> -> vector<8x16xf32>
    %227 = vector.extract_strided_slice %206 {offsets = [0, 0], sizes = [16, 32], strides = [1, 1]} : vector<64x32xf32> to vector<16x32xf32>
    %cst_85 = arith.constant dense<0.000000e+00> : vector<8x32xf32>
    %228 = tpu.matmul %226, %227, %cst_85 {dimension_numbers = #tpu.dot_dimension_numbers<[1], [0], [0], [1], [0, 0, 1, 1], [], []>} : vector<8x16xf32>, vector<16x32xf32>, vector<8x32xf32> -> vector<8x32xf32>
    %229 = arith.addf %209, %228 : vector<8x32xf32>
    %230 = vector.extract_strided_slice %208 {offsets = [0, 16], sizes = [8, 16], strides = [1, 1]} : vector<8x192xf32> to vector<8x16xf32>
    %231 = vector.extract_strided_slice %208 {offsets = [0, 80], sizes = [8, 16], strides = [1, 1]} : vector<8x192xf32> to vector<8x16xf32>
    %232 = vector.extract_strided_slice %208 {offsets = [0, 144], sizes = [8, 16], strides = [1, 1]} : vector<8x192xf32> to vector<8x16xf32>
    %233 = tpu.transpose %231, [1, 0] : vector<8x16xf32> -> vector<16x8xf32>
    %cst_86 = arith.constant dense<0.000000e+00> : vector<8x8xf32>
    %234 = tpu.matmul %230, %233, %cst_86 {dimension_numbers = #tpu.dot_dimension_numbers<[1], [0], [0], [1], [0, 0, 1, 1], [], []>} : vector<8x16xf32>, vector<16x8xf32>, vector<8x8xf32> -> vector<8x8xf32>
    %cst_87 = arith.constant 2.500000e-01 : f32
    %235 = vector.broadcast %cst_87 : f32 to vector<8x8xf32>
    %236 = arith.mulf %234, %235 : vector<8x8xf32>
    %cst_88 = arith.constant dense<0xFF800000> : vector<8xf32>
    %237 = vector.multi_reduction <maximumf>, %236, %cst_88 [1] : vector<8x8xf32> to vector<8xf32>
    %238 = vector.shape_cast %237 : vector<8xf32> to vector<8x1xf32>
    %239 = vector.broadcast %238 : vector<8x1xf32> to vector<8x8xf32>
    %240 = arith.subf %236, %239 : vector<8x8xf32>
    %241 = math.exp %240 : vector<8x8xf32>
    %cst_89 = arith.constant dense<0.000000e+00> : vector<8xf32>
    %242 = vector.multi_reduction <add>, %241, %cst_89 [1] : vector<8x8xf32> to vector<8xf32>
    %243 = vector.shape_cast %242 : vector<8xf32> to vector<8x1xf32>
    %244 = vector.broadcast %243 : vector<8x1xf32> to vector<8x8xf32>
    %245 = arith.divf %241, %244 : vector<8x8xf32>
    %cst_90 = arith.constant dense<0.000000e+00> : vector<8x16xf32>
    %246 = tpu.matmul %245, %232, %cst_90 {dimension_numbers = #tpu.dot_dimension_numbers<[1], [0], [0], [1], [0, 0, 1, 1], [], []>} : vector<8x8xf32>, vector<8x16xf32>, vector<8x16xf32> -> vector<8x16xf32>
    %247 = vector.extract_strided_slice %206 {offsets = [16, 0], sizes = [16, 32], strides = [1, 1]} : vector<64x32xf32> to vector<16x32xf32>
    %cst_91 = arith.constant dense<0.000000e+00> : vector<8x32xf32>
    %248 = tpu.matmul %246, %247, %cst_91 {dimension_numbers = #tpu.dot_dimension_numbers<[1], [0], [0], [1], [0, 0, 1, 1], [], []>} : vector<8x16xf32>, vector<16x32xf32>, vector<8x32xf32> -> vector<8x32xf32>
    %249 = arith.addf %229, %248 : vector<8x32xf32>
    %250 = vector.extract_strided_slice %208 {offsets = [0, 32], sizes = [8, 16], strides = [1, 1]} : vector<8x192xf32> to vector<8x16xf32>
    %251 = vector.extract_strided_slice %208 {offsets = [0, 96], sizes = [8, 16], strides = [1, 1]} : vector<8x192xf32> to vector<8x16xf32>
    %252 = vector.extract_strided_slice %208 {offsets = [0, 160], sizes = [8, 16], strides = [1, 1]} : vector<8x192xf32> to vector<8x16xf32>
    %253 = tpu.transpose %251, [1, 0] : vector<8x16xf32> -> vector<16x8xf32>
    %cst_92 = arith.constant dense<0.000000e+00> : vector<8x8xf32>
    %254 = tpu.matmul %250, %253, %cst_92 {dimension_numbers = #tpu.dot_dimension_numbers<[1], [0], [0], [1], [0, 0, 1, 1], [], []>} : vector<8x16xf32>, vector<16x8xf32>, vector<8x8xf32> -> vector<8x8xf32>
    %cst_93 = arith.constant 2.500000e-01 : f32
    %255 = vector.broadcast %cst_93 : f32 to vector<8x8xf32>
    %256 = arith.mulf %254, %255 : vector<8x8xf32>
    %cst_94 = arith.constant dense<0xFF800000> : vector<8xf32>
    %257 = vector.multi_reduction <maximumf>, %256, %cst_94 [1] : vector<8x8xf32> to vector<8xf32>
    %258 = vector.shape_cast %257 : vector<8xf32> to vector<8x1xf32>
    %259 = vector.broadcast %258 : vector<8x1xf32> to vector<8x8xf32>
    %260 = arith.subf %256, %259 : vector<8x8xf32>
    %261 = math.exp %260 : vector<8x8xf32>
    %cst_95 = arith.constant dense<0.000000e+00> : vector<8xf32>
    %262 = vector.multi_reduction <add>, %261, %cst_95 [1] : vector<8x8xf32> to vector<8xf32>
    %263 = vector.shape_cast %262 : vector<8xf32> to vector<8x1xf32>
    %264 = vector.broadcast %263 : vector<8x1xf32> to vector<8x8xf32>
    %265 = arith.divf %261, %264 : vector<8x8xf32>
    %cst_96 = arith.constant dense<0.000000e+00> : vector<8x16xf32>
    %266 = tpu.matmul %265, %252, %cst_96 {dimension_numbers = #tpu.dot_dimension_numbers<[1], [0], [0], [1], [0, 0, 1, 1], [], []>} : vector<8x8xf32>, vector<8x16xf32>, vector<8x16xf32> -> vector<8x16xf32>
    %267 = vector.extract_strided_slice %206 {offsets = [32, 0], sizes = [16, 32], strides = [1, 1]} : vector<64x32xf32> to vector<16x32xf32>
    %cst_97 = arith.constant dense<0.000000e+00> : vector<8x32xf32>
    %268 = tpu.matmul %266, %267, %cst_97 {dimension_numbers = #tpu.dot_dimension_numbers<[1], [0], [0], [1], [0, 0, 1, 1], [], []>} : vector<8x16xf32>, vector<16x32xf32>, vector<8x32xf32> -> vector<8x32xf32>
    %269 = arith.addf %249, %268 : vector<8x32xf32>
    %270 = vector.extract_strided_slice %208 {offsets = [0, 48], sizes = [8, 16], strides = [1, 1]} : vector<8x192xf32> to vector<8x16xf32>
    %271 = vector.extract_strided_slice %208 {offsets = [0, 112], sizes = [8, 16], strides = [1, 1]} : vector<8x192xf32> to vector<8x16xf32>
    %272 = vector.extract_strided_slice %208 {offsets = [0, 176], sizes = [8, 16], strides = [1, 1]} : vector<8x192xf32> to vector<8x16xf32>
    %273 = tpu.transpose %271, [1, 0] : vector<8x16xf32> -> vector<16x8xf32>
    %cst_98 = arith.constant dense<0.000000e+00> : vector<8x8xf32>
    %274 = tpu.matmul %270, %273, %cst_98 {dimension_numbers = #tpu.dot_dimension_numbers<[1], [0], [0], [1], [0, 0, 1, 1], [], []>} : vector<8x16xf32>, vector<16x8xf32>, vector<8x8xf32> -> vector<8x8xf32>
    %cst_99 = arith.constant 2.500000e-01 : f32
    %275 = vector.broadcast %cst_99 : f32 to vector<8x8xf32>
    %276 = arith.mulf %274, %275 : vector<8x8xf32>
    %cst_100 = arith.constant dense<0xFF800000> : vector<8xf32>
    %277 = vector.multi_reduction <maximumf>, %276, %cst_100 [1] : vector<8x8xf32> to vector<8xf32>
    %278 = vector.shape_cast %277 : vector<8xf32> to vector<8x1xf32>
    %279 = vector.broadcast %278 : vector<8x1xf32> to vector<8x8xf32>
    %280 = arith.subf %276, %279 : vector<8x8xf32>
    %281 = math.exp %280 : vector<8x8xf32>
    %cst_101 = arith.constant dense<0.000000e+00> : vector<8xf32>
    %282 = vector.multi_reduction <add>, %281, %cst_101 [1] : vector<8x8xf32> to vector<8xf32>
    %283 = vector.shape_cast %282 : vector<8xf32> to vector<8x1xf32>
    %284 = vector.broadcast %283 : vector<8x1xf32> to vector<8x8xf32>
    %285 = arith.divf %281, %284 : vector<8x8xf32>
    %cst_102 = arith.constant dense<0.000000e+00> : vector<8x16xf32>
    %286 = tpu.matmul %285, %272, %cst_102 {dimension_numbers = #tpu.dot_dimension_numbers<[1], [0], [0], [1], [0, 0, 1, 1], [], []>} : vector<8x8xf32>, vector<8x16xf32>, vector<8x16xf32> -> vector<8x16xf32>
    %287 = vector.extract_strided_slice %206 {offsets = [48, 0], sizes = [16, 32], strides = [1, 1]} : vector<64x32xf32> to vector<16x32xf32>
    %cst_103 = arith.constant dense<0.000000e+00> : vector<8x32xf32>
    %288 = tpu.matmul %286, %287, %cst_103 {dimension_numbers = #tpu.dot_dimension_numbers<[1], [0], [0], [1], [0, 0, 1, 1], [], []>} : vector<8x16xf32>, vector<16x32xf32>, vector<8x32xf32> -> vector<8x32xf32>
    %289 = arith.addf %269, %288 : vector<8x32xf32>
    %290 = vector.extract_strided_slice %207 {offsets = [8, 0], sizes = [8, 192], strides = [1, 1]} : vector<16x192xf32> to vector<8x192xf32>
    %cst_104 = arith.constant 0.000000e+00 : f32
    %291 = vector.broadcast %cst_104 : f32 to vector<8x32xf32>
    %292 = vector.extract_strided_slice %290 {offsets = [0, 0], sizes = [8, 16], strides = [1, 1]} : vector<8x192xf32> to vector<8x16xf32>
    %293 = vector.extract_strided_slice %290 {offsets = [0, 64], sizes = [8, 16], strides = [1, 1]} : vector<8x192xf32> to vector<8x16xf32>
    %294 = vector.extract_strided_slice %290 {offsets = [0, 128], sizes = [8, 16], strides = [1, 1]} : vector<8x192xf32> to vector<8x16xf32>
    %295 = tpu.transpose %293, [1, 0] : vector<8x16xf32> -> vector<16x8xf32>
    %cst_105 = arith.constant dense<0.000000e+00> : vector<8x8xf32>
    %296 = tpu.matmul %292, %295, %cst_105 {dimension_numbers = #tpu.dot_dimension_numbers<[1], [0], [0], [1], [0, 0, 1, 1], [], []>} : vector<8x16xf32>, vector<16x8xf32>, vector<8x8xf32> -> vector<8x8xf32>
    %cst_106 = arith.constant 2.500000e-01 : f32
    %297 = vector.broadcast %cst_106 : f32 to vector<8x8xf32>
    %298 = arith.mulf %296, %297 : vector<8x8xf32>
    %cst_107 = arith.constant dense<0xFF800000> : vector<8xf32>
    %299 = vector.multi_reduction <maximumf>, %298, %cst_107 [1] : vector<8x8xf32> to vector<8xf32>
    %300 = vector.shape_cast %299 : vector<8xf32> to vector<8x1xf32>
    %301 = vector.broadcast %300 : vector<8x1xf32> to vector<8x8xf32>
    %302 = arith.subf %298, %301 : vector<8x8xf32>
    %303 = math.exp %302 : vector<8x8xf32>
    %cst_108 = arith.constant dense<0.000000e+00> : vector<8xf32>
    %304 = vector.multi_reduction <add>, %303, %cst_108 [1] : vector<8x8xf32> to vector<8xf32>
    %305 = vector.shape_cast %304 : vector<8xf32> to vector<8x1xf32>
    %306 = vector.broadcast %305 : vector<8x1xf32> to vector<8x8xf32>
    %307 = arith.divf %303, %306 : vector<8x8xf32>
    %cst_109 = arith.constant dense<0.000000e+00> : vector<8x16xf32>
    %308 = tpu.matmul %307, %294, %cst_109 {dimension_numbers = #tpu.dot_dimension_numbers<[1], [0], [0], [1], [0, 0, 1, 1], [], []>} : vector<8x8xf32>, vector<8x16xf32>, vector<8x16xf32> -> vector<8x16xf32>
    %309 = vector.extract_strided_slice %206 {offsets = [0, 0], sizes = [16, 32], strides = [1, 1]} : vector<64x32xf32> to vector<16x32xf32>
    %cst_110 = arith.constant dense<0.000000e+00> : vector<8x32xf32>
    %310 = tpu.matmul %308, %309, %cst_110 {dimension_numbers = #tpu.dot_dimension_numbers<[1], [0], [0], [1], [0, 0, 1, 1], [], []>} : vector<8x16xf32>, vector<16x32xf32>, vector<8x32xf32> -> vector<8x32xf32>
    %311 = arith.addf %291, %310 : vector<8x32xf32>
    %312 = vector.extract_strided_slice %290 {offsets = [0, 16], sizes = [8, 16], strides = [1, 1]} : vector<8x192xf32> to vector<8x16xf32>
    %313 = vector.extract_strided_slice %290 {offsets = [0, 80], sizes = [8, 16], strides = [1, 1]} : vector<8x192xf32> to vector<8x16xf32>
    %314 = vector.extract_strided_slice %290 {offsets = [0, 144], sizes = [8, 16], strides = [1, 1]} : vector<8x192xf32> to vector<8x16xf32>
    %315 = tpu.transpose %313, [1, 0] : vector<8x16xf32> -> vector<16x8xf32>
    %cst_111 = arith.constant dense<0.000000e+00> : vector<8x8xf32>
    %316 = tpu.matmul %312, %315, %cst_111 {dimension_numbers = #tpu.dot_dimension_numbers<[1], [0], [0], [1], [0, 0, 1, 1], [], []>} : vector<8x16xf32>, vector<16x8xf32>, vector<8x8xf32> -> vector<8x8xf32>
    %cst_112 = arith.constant 2.500000e-01 : f32
    %317 = vector.broadcast %cst_112 : f32 to vector<8x8xf32>
    %318 = arith.mulf %316, %317 : vector<8x8xf32>
    %cst_113 = arith.constant dense<0xFF800000> : vector<8xf32>
    %319 = vector.multi_reduction <maximumf>, %318, %cst_113 [1] : vector<8x8xf32> to vector<8xf32>
    %320 = vector.shape_cast %319 : vector<8xf32> to vector<8x1xf32>
    %321 = vector.broadcast %320 : vector<8x1xf32> to vector<8x8xf32>
    %322 = arith.subf %318, %321 : vector<8x8xf32>
    %323 = math.exp %322 : vector<8x8xf32>
    %cst_114 = arith.constant dense<0.000000e+00> : vector<8xf32>
    %324 = vector.multi_reduction <add>, %323, %cst_114 [1] : vector<8x8xf32> to vector<8xf32>
    %325 = vector.shape_cast %324 : vector<8xf32> to vector<8x1xf32>
    %326 = vector.broadcast %325 : vector<8x1xf32> to vector<8x8xf32>
    %327 = arith.divf %323, %326 : vector<8x8xf32>
    %cst_115 = arith.constant dense<0.000000e+00> : vector<8x16xf32>
    %328 = tpu.matmul %327, %314, %cst_115 {dimension_numbers = #tpu.dot_dimension_numbers<[1], [0], [0], [1], [0, 0, 1, 1], [], []>} : vector<8x8xf32>, vector<8x16xf32>, vector<8x16xf32> -> vector<8x16xf32>
    %329 = vector.extract_strided_slice %206 {offsets = [16, 0], sizes = [16, 32], strides = [1, 1]} : vector<64x32xf32> to vector<16x32xf32>
    %cst_116 = arith.constant dense<0.000000e+00> : vector<8x32xf32>
    %330 = tpu.matmul %328, %329, %cst_116 {dimension_numbers = #tpu.dot_dimension_numbers<[1], [0], [0], [1], [0, 0, 1, 1], [], []>} : vector<8x16xf32>, vector<16x32xf32>, vector<8x32xf32> -> vector<8x32xf32>
    %331 = arith.addf %311, %330 : vector<8x32xf32>
    %332 = vector.extract_strided_slice %290 {offsets = [0, 32], sizes = [8, 16], strides = [1, 1]} : vector<8x192xf32> to vector<8x16xf32>
    %333 = vector.extract_strided_slice %290 {offsets = [0, 96], sizes = [8, 16], strides = [1, 1]} : vector<8x192xf32> to vector<8x16xf32>
    %334 = vector.extract_strided_slice %290 {offsets = [0, 160], sizes = [8, 16], strides = [1, 1]} : vector<8x192xf32> to vector<8x16xf32>
    %335 = tpu.transpose %333, [1, 0] : vector<8x16xf32> -> vector<16x8xf32>
    %cst_117 = arith.constant dense<0.000000e+00> : vector<8x8xf32>
    %336 = tpu.matmul %332, %335, %cst_117 {dimension_numbers = #tpu.dot_dimension_numbers<[1], [0], [0], [1], [0, 0, 1, 1], [], []>} : vector<8x16xf32>, vector<16x8xf32>, vector<8x8xf32> -> vector<8x8xf32>
    %cst_118 = arith.constant 2.500000e-01 : f32
    %337 = vector.broadcast %cst_118 : f32 to vector<8x8xf32>
    %338 = arith.mulf %336, %337 : vector<8x8xf32>
    %cst_119 = arith.constant dense<0xFF800000> : vector<8xf32>
    %339 = vector.multi_reduction <maximumf>, %338, %cst_119 [1] : vector<8x8xf32> to vector<8xf32>
    %340 = vector.shape_cast %339 : vector<8xf32> to vector<8x1xf32>
    %341 = vector.broadcast %340 : vector<8x1xf32> to vector<8x8xf32>
    %342 = arith.subf %338, %341 : vector<8x8xf32>
    %343 = math.exp %342 : vector<8x8xf32>
    %cst_120 = arith.constant dense<0.000000e+00> : vector<8xf32>
    %344 = vector.multi_reduction <add>, %343, %cst_120 [1] : vector<8x8xf32> to vector<8xf32>
    %345 = vector.shape_cast %344 : vector<8xf32> to vector<8x1xf32>
    %346 = vector.broadcast %345 : vector<8x1xf32> to vector<8x8xf32>
    %347 = arith.divf %343, %346 : vector<8x8xf32>
    %cst_121 = arith.constant dense<0.000000e+00> : vector<8x16xf32>
    %348 = tpu.matmul %347, %334, %cst_121 {dimension_numbers = #tpu.dot_dimension_numbers<[1], [0], [0], [1], [0, 0, 1, 1], [], []>} : vector<8x8xf32>, vector<8x16xf32>, vector<8x16xf32> -> vector<8x16xf32>
    %349 = vector.extract_strided_slice %206 {offsets = [32, 0], sizes = [16, 32], strides = [1, 1]} : vector<64x32xf32> to vector<16x32xf32>
    %cst_122 = arith.constant dense<0.000000e+00> : vector<8x32xf32>
    %350 = tpu.matmul %348, %349, %cst_122 {dimension_numbers = #tpu.dot_dimension_numbers<[1], [0], [0], [1], [0, 0, 1, 1], [], []>} : vector<8x16xf32>, vector<16x32xf32>, vector<8x32xf32> -> vector<8x32xf32>
    %351 = arith.addf %331, %350 : vector<8x32xf32>
    %352 = vector.extract_strided_slice %290 {offsets = [0, 48], sizes = [8, 16], strides = [1, 1]} : vector<8x192xf32> to vector<8x16xf32>
    %353 = vector.extract_strided_slice %290 {offsets = [0, 112], sizes = [8, 16], strides = [1, 1]} : vector<8x192xf32> to vector<8x16xf32>
    %354 = vector.extract_strided_slice %290 {offsets = [0, 176], sizes = [8, 16], strides = [1, 1]} : vector<8x192xf32> to vector<8x16xf32>
    %355 = tpu.transpose %353, [1, 0] : vector<8x16xf32> -> vector<16x8xf32>
    %cst_123 = arith.constant dense<0.000000e+00> : vector<8x8xf32>
    %356 = tpu.matmul %352, %355, %cst_123 {dimension_numbers = #tpu.dot_dimension_numbers<[1], [0], [0], [1], [0, 0, 1, 1], [], []>} : vector<8x16xf32>, vector<16x8xf32>, vector<8x8xf32> -> vector<8x8xf32>
    %cst_124 = arith.constant 2.500000e-01 : f32
    %357 = vector.broadcast %cst_124 : f32 to vector<8x8xf32>
    %358 = arith.mulf %356, %357 : vector<8x8xf32>
    %cst_125 = arith.constant dense<0xFF800000> : vector<8xf32>
    %359 = vector.multi_reduction <maximumf>, %358, %cst_125 [1] : vector<8x8xf32> to vector<8xf32>
    %360 = vector.shape_cast %359 : vector<8xf32> to vector<8x1xf32>
    %361 = vector.broadcast %360 : vector<8x1xf32> to vector<8x8xf32>
    %362 = arith.subf %358, %361 : vector<8x8xf32>
    %363 = math.exp %362 : vector<8x8xf32>
    %cst_126 = arith.constant dense<0.000000e+00> : vector<8xf32>
    %364 = vector.multi_reduction <add>, %363, %cst_126 [1] : vector<8x8xf32> to vector<8xf32>
    %365 = vector.shape_cast %364 : vector<8xf32> to vector<8x1xf32>
    %366 = vector.broadcast %365 : vector<8x1xf32> to vector<8x8xf32>
    %367 = arith.divf %363, %366 : vector<8x8xf32>
    %cst_127 = arith.constant dense<0.000000e+00> : vector<8x16xf32>
    %368 = tpu.matmul %367, %354, %cst_127 {dimension_numbers = #tpu.dot_dimension_numbers<[1], [0], [0], [1], [0, 0, 1, 1], [], []>} : vector<8x8xf32>, vector<8x16xf32>, vector<8x16xf32> -> vector<8x16xf32>
    %369 = vector.extract_strided_slice %206 {offsets = [48, 0], sizes = [16, 32], strides = [1, 1]} : vector<64x32xf32> to vector<16x32xf32>
    %cst_128 = arith.constant dense<0.000000e+00> : vector<8x32xf32>
    %370 = tpu.matmul %368, %369, %cst_128 {dimension_numbers = #tpu.dot_dimension_numbers<[1], [0], [0], [1], [0, 0, 1, 1], [], []>} : vector<8x16xf32>, vector<16x32xf32>, vector<8x32xf32> -> vector<8x32xf32>
    %371 = arith.addf %351, %370 : vector<8x32xf32>
    %372 = tpu.concatenate %289, %371 in 0 : vector<8x32xf32>, vector<8x32xf32> -> vector<16x32xf32>
    %373 = arith.addf %202, %372 : vector<16x32xf32>
    %cst_129 = arith.constant dense<0.000000e+00> : vector<32xf32>
    %374 = vector.multi_reduction <add>, %373, %cst_129 [0] : vector<16x32xf32> to vector<32xf32>
    %375 = vector.shape_cast %374 : vector<32xf32> to vector<1x32xf32>
    %cst_130 = arith.constant 1.600000e+01 : f32
    %376 = vector.broadcast %cst_130 : f32 to vector<1x32xf32>
    %377 = arith.divf %375, %376 : vector<1x32xf32>
    %378 = vector.broadcast %377 : vector<1x32xf32> to vector<16x32xf32>
    %379 = arith.subf %373, %378 : vector<16x32xf32>
    %380 = arith.mulf %379, %379 : vector<16x32xf32>
    %cst_131 = arith.constant dense<0.000000e+00> : vector<32xf32>
    %381 = vector.multi_reduction <add>, %380, %cst_131 [0] : vector<16x32xf32> to vector<32xf32>
    %382 = vector.shape_cast %381 : vector<32xf32> to vector<1x32xf32>
    %cst_132 = arith.constant 1.600000e+01 : f32
    %383 = vector.broadcast %cst_132 : f32 to vector<1x32xf32>
    %384 = arith.divf %382, %383 : vector<1x32xf32>
    %cst_133 = arith.constant 9.99999974E-6 : f32
    %385 = vector.broadcast %cst_133 : f32 to vector<1x32xf32>
    %386 = arith.addf %384, %385 : vector<1x32xf32>
    %387 = math.rsqrt %386 : vector<1x32xf32>
    %388 = vector.broadcast %377 : vector<1x32xf32> to vector<16x32xf32>
    %389 = arith.subf %373, %388 : vector<16x32xf32>
    %390 = vector.broadcast %387 : vector<1x32xf32> to vector<16x32xf32>
    %391 = arith.mulf %389, %390 : vector<16x32xf32>
    %c1_134 = arith.constant 1 : index
    %c0_135 = arith.constant 0 : index
    %c0_136 = arith.constant 0 : index
    %392 = vector.load %arg5[%c1_134, %c0_135, %c0_136] : memref<2x1x32xf32, #tpu.memory_space<vmem>>, vector<1x1x32xf32>
    %393 = vector.shape_cast %392 : vector<1x1x32xf32> to vector<1x32xf32>
    %394 = vector.broadcast %393 : vector<1x32xf32> to vector<16x32xf32>
    %395 = arith.mulf %391, %394 : vector<16x32xf32>
    %c1_137 = arith.constant 1 : index
    %c0_138 = arith.constant 0 : index
    %c0_139 = arith.constant 0 : index
    %396 = vector.load %arg6[%c1_137, %c0_138, %c0_139] : memref<2x1x32xf32, #tpu.memory_space<vmem>>, vector<1x1x32xf32>
    %397 = vector.shape_cast %396 : vector<1x1x32xf32> to vector<1x32xf32>
    %398 = vector.broadcast %397 : vector<1x32xf32> to vector<16x32xf32>
    %399 = arith.addf %395, %398 : vector<16x32xf32>
    %c0_140 = arith.constant 0 : index
    %c0_141 = arith.constant 0 : index
    %400 = vector.load %arg7[%c0_140, %c0_141] : memref<16x32xf32, #tpu.memory_space<vmem>>, vector<16x32xf32>
    tpu.vector_store %arg7[%c0_140, %c0_141], %399 {strides = array<i32>} : memref<16x32xf32, #tpu.memory_space<vmem>>, vector<16x32xf32>,
    return
  }
}

</mosaic_0001>

<llo_original>
// kernel: tpu_custom_call.1
$region0: #{tpu_custom_call.1}
  #allocation0 [shape = 'u32[]', space=smem, size = 0x4, offset = 0x4, fixed_abs, tag = 'smem constant byte address 0x4 - core index']
  #allocation1 [shape = 'u32[144,128]{1,0:T(1,128)}', space=vmem, size = 0x12000, scoped, tag = 'internal scratch']
  %s0 = inlined_call_operand.vmem [shape: f32[16,2], index: 0, kind: input, shape index: {}]
  %s1 = inlined_call_operand.vmem [shape: f32[2,32], index: 1, kind: input, shape index: {}]
  %s2 = inlined_call_operand.vmem [shape: f32[1,32], index: 2, kind: input, shape index: {}]
  %s3 = inlined_call_operand.vmem [shape: f32[2,32,192], index: 3, kind: input, shape index: {}]
  %s4 = inlined_call_operand.vmem [shape: f32[2,64,32], index: 4, kind: input, shape index: {}]
  %s5 = inlined_call_operand.vmem [shape: f32[2,1,32], index: 5, kind: input, shape index: {}]
  %s6 = inlined_call_operand.vmem [shape: f32[2,1,32], index: 6, kind: input, shape index: {}]
  %s7 = inlined_call_operand.hbm [shape: f32[16,32], index: 7, kind: output, shape index: {}]
  %s8 = sld [smem:[#allocation0]]
  $region38: #{tpu_custom_call.1} parent=0
    _
  %s10 = ssub.s32 1, %s8
  %s11 = scalar_select 0, %s10, %s8
  $region1: #{tpu_custom_call.1} parent=0
    #allocation2 [shape = 'u8[8192]{0}', space=vmem, size = 0x2000, scoped, tag = 'output window, operand 0, single buffered']
    #allocation3 [shape = 's32[1]{0}', space=sflag, size = 0x4, scoped, tag = 'scoped memory for tpu_custom_call.1']
    %12 = vsyncpa [#allocation3], 0
    // Predicated region
    $region2: #{tpu_custom_call.1} parent=1 // pred_check
      _
    $region3: #{tpu_custom_call.1} parent=1 // pred_check_branch
      %14 = sbr.rel (0) target = $region5
    $region4: #{tpu_custom_call.1} parent=1 // pred_region
      _
    $region5: #{tpu_custom_call.1} parent=1 // pred_fallthru
      _
    // Predicated region
    $region6: #{tpu_custom_call.1} parent=1 // pred_check
      _
    $region7: #{tpu_custom_call.1} parent=1 // pred_check_branch
      %16 = sbr.rel (0) target = $region9
    $region8: #{tpu_custom_call.1} parent=1 // pred_region
      _
    $region9: #{tpu_custom_call.1} parent=1 // pred_fallthru
      _
    // Predicated region
    $region10: #{tpu_custom_call.1} parent=1 // pred_check
      _
    $region11: #{tpu_custom_call.1} parent=1 // pred_check_branch
      %18 = sbr.rel (0) target = $region13
    $region12: #{tpu_custom_call.1} parent=1 // pred_region
      _
    $region13: #{tpu_custom_call.1} parent=1 // pred_fallthru
      _
    // Predicated region
    $region14: #{tpu_custom_call.1} parent=1 // pred_check
      _
    $region15: #{tpu_custom_call.1} parent=1 // pred_check_branch
      %20 = sbr.rel (0) target = $region17
    $region16: #{tpu_custom_call.1} parent=1 // pred_region
      _
    $region17: #{tpu_custom_call.1} parent=1 // pred_fallthru
      _
    // Predicated region
    $region18: #{tpu_custom_call.1} parent=1 // pred_check
      _
    $region19: #{tpu_custom_call.1} parent=1 // pred_check_branch
      %22 = sbr.rel (0) target = $region21
    $region20: #{tpu_custom_call.1} parent=1 // pred_region
      _
    $region21: #{tpu_custom_call.1} parent=1 // pred_fallthru
      _
    // Predicated region
    $region22: #{tpu_custom_call.1} parent=1 // pred_check
      _
    $region23: #{tpu_custom_call.1} parent=1 // pred_check_branch
      %24 = sbr.rel (0) target = $region25
    $region24: #{tpu_custom_call.1} parent=1 // pred_region
      _
    $region25: #{tpu_custom_call.1} parent=1 // pred_fallthru
      _
    // Predicated region
    $region26: #{tpu_custom_call.1} parent=1 // pred_check
      _
    $region27: #{tpu_custom_call.1} parent=1 // pred_check_branch
      %26 = sbr.rel (0) target = $region29
    $region28: #{tpu_custom_call.1} parent=1 // pred_region
      _
    $region29: #{tpu_custom_call.1} parent=1 // pred_fallthru
      _
    %v27 = vld [vmem:[%s0] sm:$0xff]
    %v28 = vld [vmem:[%s0 + $0x8] sm:$0xff]
    %v29 = vld [vmem:[%s1] sm:$0x3]
    %v30 = vld [vmem:[%s2] sm:$0x1]
    %v32 = vlaneseq
    %v33 = vshrl.u32 %v32, 7
    %v34 = vsub.s32 0, %v33
    %v35 = vrot.slane %v30, %v34
    %vm37 = vcmask 15360
    %v39 = vsel %vm37, %v27, 0
    %v42 = vsel %vm37, %v28, 0
    %vm44 = vcmask 1041408
    %v46 = vsel %vm44, %v29, 0
    %48 = vmatprep.subr.mxu0 0.0
    %49 = vmatpush1.msra.mxu0 %v46
    %50 = vmatprep.subr.mxu0 0.0
    %51 = vmatpush1.msra.mxu0 0.0
    %52 = vmatprep.subr.mxu0 0.0
    %53 = vmatpush1.msra.mxu0 0.0
    %54 = vmatprep.subr.mxu0 0.0
    %55 = vmatpush1.msra.mxu0 0.0
    %56 = vmatprep.subr.mxu0 0.0
    %57 = vmatpush1.msra.mxu0 0.0
    %58 = vmatprep.subr.mxu0 0.0
    %59 = vmatpush1.msra.mxu0 0.0
    %60 = vmatprep.subr.mxu0 0.0
    %61 = vmatpush1.msra.mxu0 0.0
    %62 = vmatprep.subr.mxu0 0.0
    %63 = vmatpush1.msra.mxu0 0.0
    %64 = vmatprep.subr.mxu0 0.0
    %65 = vmatpush1.msra.mxu0 0.0
    %66 = vmatprep.subr.mxu0 0.0
    %67 = vmatpush1.msra.mxu0 0.0
    %68 = vmatprep.subr.mxu0 0.0
    %69 = vmatpush1.msra.mxu0 0.0
    %70 = vmatprep.subr.mxu0 0.0
    %71 = vmatpush1.msra.mxu0 0.0
    %72 = vmatprep.subr.mxu0 0.0
    %73 = vmatpush1.msra.mxu0 0.0
    %74 = vmatprep.subr.mxu0 0.0
    %75 = vmatpush1.msra.mxu0 0.0
    %76 = vmatprep.subr.mxu0 0.0
    %77 = vmatpush1.msra.mxu0 0.0
    %78 = vmatprep.subr.mxu0 0.0
    %79 = vmatpush1.msra.mxu0 0.0
    %80 = vmatprep.subr.mxu0 0.0
    %81 = vmatpush1.msra.mxu0 0.0
    %82 = vmatprep.subr.mxu0 0.0
    %83 = vmatpush1.msra.mxu0 0.0
    %84 = vmatprep.subr.mxu0 0.0
    %85 = vmatpush1.msra.mxu0 0.0
    %86 = vmatprep.subr.mxu0 0.0
    %87 = vmatpush1.msra.mxu0 0.0
    %88 = vmatprep.subr.mxu0 0.0
    %89 = vmatpush1.msra.mxu0 0.0
    %90 = vmatprep.subr.mxu0 0.0
    %91 = vmatpush1.msra.mxu0 0.0
    %92 = vmatprep.subr.mxu0 0.0
    %93 = vmatpush1.msra.mxu0 0.0
    %94 = vmatprep.subr.mxu0 0.0
    %95 = vmatpush1.msra.mxu0 0.0
    %96 = vmatprep.subr.mxu0 0.0
    %97 = vmatpush1.msra.mxu0 0.0
    %98 = vmatprep.subr.mxu0 0.0
    %99 = vmatpush1.msra.mxu0 0.0
    %100 = vmatprep.subr.mxu0 0.0
    %101 = vmatpush1.msra.mxu0 0.0
    %102 = vmatprep.subr.mxu0 0.0
    %103 = vmatpush1.msra.mxu0 0.0
    %104 = vmatprep.subr.mxu0 0.0
    %105 = vmatpush1.msra.mxu0 0.0
    %106 = vmatprep.subr.mxu0 0.0
    %107 = vmatpush1.msra.mxu0 0.0
    %108 = vmatprep.subr.mxu0 0.0
    %109 = vmatpush1.msra.mxu0 0.0
    %110 = vmatprep.subr.mxu0 0.0
    %111 = vmatpush1.msra.mxu0 0.0
    %112 = vmatprep.mubr.f32.mxu0 0.0
    %113 = vmatmul.mubr.f32.gmra.mrb[0].mxu0 %v39
    %v114 = vpop.f32.mrb[0].mxu0
    %v115 = vadd.f32 %v35, %v114
    %v116 = vpop.f32.mrb[0].mxu0
    %117 = vmatprep.mubr.f32.mxu0 0.0
    %118 = vmatmul.mubr.f32.gmra.mrb[0].mxu0 %v42
    %v119 = vpop.f32.mrb[0].mxu0
    %v120 = vadd.f32 %v35, %v119
    %v121 = vpop.f32.mrb[0].mxu0
    %122 = vdwg.mxu0
    %v123 = vld [vmem:[%s3] sm:$0xff]
    %v124 = vld [vmem:[%s3 + $0x8] sm:$0xff]
    %v125 = vld [vmem:[%s3 + $0x10] sm:$0xff]
    %v126 = vld [vmem:[%s3 + $0x18] sm:$0xff]
    %v127 = vld [vmem:[%s3 + $0x20] sm:$0xff]
    %v128 = vld [vmem:[%s3 + $0x28] sm:$0xff]
    %v129 = vld [vmem:[%s3 + $0x30] sm:$0xff]
    %v130 = vld [vmem:[%s3 + $0x38] sm:$0xff]
    %v131 = vld [vmem:[%s4] sm:$0xff]
    %v132 = vld [vmem:[%s4 + $0x8] sm:$0xff]
    %v133 = vld [vmem:[%s4 + $0x10] sm:$0xff]
    %v134 = vld [vmem:[%s4 + $0x18] sm:$0xff]
    %v135 = vld [vmem:[%s4 + $0x20] sm:$0xff]
    %v136 = vld [vmem:[%s4 + $0x28] sm:$0xff]
    %v137 = vld [vmem:[%s4 + $0x30] sm:$0xff]
    %v138 = vld [vmem:[%s4 + $0x38] sm:$0xff]
    %vm139 = vcmask 261120
    %v141 = vsel %vm139, %v115, 0
    %v144 = vsel %vm139, %v120, 0
    %146 = vmatprep.subr.mxu0 %v124
    %147 = vmatpush1.msra.mxu0 %v123
    %148 = vmatprep.subr.mxu0 %v126
    %149 = vmatpush1.msra.mxu0 %v125
    %150 = vmatprep.subr.mxu0 %v128
    %151 = vmatpush1.msra.mxu0 %v127
    %152 = vmatprep.subr.mxu0 %v130
    %153 = vmatpush1.msra.mxu0 %v129
    %154 = vmatprep.subr.mxu0 0.0
    %155 = vmatpush1.msra.mxu0 0.0
    %156 = vmatprep.subr.mxu0 0.0
    %157 = vmatpush1.msra.mxu0 0.0
    %158 = vmatprep.subr.mxu0 0.0
    %159 = vmatpush1.msra.mxu0 0.0
    %160 = vmatprep.subr.mxu0 0.0
    %161 = vmatpush1.msra.mxu0 0.0
    %162 = vmatprep.subr.mxu0 0.0
    %163 = vmatpush1.msra.mxu0 0.0
    %164 = vmatprep.subr.mxu0 0.0
    %165 = vmatpush1.msra.mxu0 0.0
    %166 = vmatprep.subr.mxu0 0.0
    %167 = vmatpush1.msra.mxu0 0.0
    %168 = vmatprep.subr.mxu0 0.0
    %169 = vmatpush1.msra.mxu0 0.0
    %170 = vmatprep.subr.mxu0 0.0
    %171 = vmatpush1.msra.mxu0 0.0
    %172 = vmatprep.subr.mxu0 0.0
    %173 = vmatpush1.msra.mxu0 0.0
    %174 = vmatprep.subr.mxu0 0.0
    %175 = vmatpush1.msra.mxu0 0.0
    %176 = vmatprep.subr.mxu0 0.0
    %177 = vmatpush1.msra.mxu0 0.0
    %178 = vmatprep.subr.mxu0 0.0
    %179 = vmatpush1.msra.mxu0 0.0
    %180 = vmatprep.subr.mxu0 0.0
    %181 = vmatpush1.msra.mxu0 0.0
    %182 = vmatprep.subr.mxu0 0.0
    %183 = vmatpush1.msra.mxu0 0.0
    %184 = vmatprep.subr.mxu0 0.0
    %185 = vmatpush1.msra.mxu0 0.0
    %186 = vmatprep.subr.mxu0 0.0
    %187 = vmatpush1.msra.mxu0 0.0
    %188 = vmatprep.subr.mxu0 0.0
    %189 = vmatpush1.msra.mxu0 0.0
    %190 = vmatprep.subr.mxu0 0.0
    %191 = vmatpush1.msra.mxu0 0.0
    %192 = vmatprep.subr.mxu0 0.0
    %193 = vmatpush1.msra.mxu0 0.0
    %194 = vmatprep.subr.mxu0 0.0
    %195 = vmatpush1.msra.mxu0 0.0
    %196 = vmatprep.subr.mxu0 0.0
    %197 = vmatpush1.msra.mxu0 0.0
    %198 = vmatprep.subr.mxu0 0.0
    %199 = vmatpush1.msra.mxu0 0.0
    %200 = vmatprep.subr.mxu0 0.0
    %201 = vmatpush1.msra.mxu0 0.0
    %202 = vmatprep.subr.mxu0 0.0
    %203 = vmatpush1.msra.mxu0 0.0
    %204 = vmatprep.subr.mxu0 0.0
    %205 = vmatpush1.msra.mxu0 0.0
    %206 = vmatprep.subr.mxu0 0.0
    %207 = vmatpush1.msra.mxu0 0.0
    %208 = vmatprep.subr.mxu0 0.0
    %209 = vmatpush1.msra.mxu0 0.0
    %210 = vmatprep.mubr.f32.mxu0 0.0
    %211 = vmatmul.mubr.f32.gmra.mrb[0].mxu0 %v141
    %v212 = vpop.f32.mrb[0].mxu0
    %v213 = vadd.f32 0.0, %v212
    %v214 = vpop.f32.mrb[0].mxu0
    %v215 = vadd.f32 0.0, %v214
    %216 = vmatprep.mubr.f32.mxu0 0.0
    %217 = vmatmul.mubr.f32.gmra.mrb[0].mxu0 %v144
    %v218 = vpop.f32.mrb[0].mxu0
    %v219 = vadd.f32 0.0, %v218
    %v220 = vpop.f32.mrb[0].mxu0
    %v221 = vadd.f32 0.0, %v220
    %222 = vdwg.mxu0
    %224 = vrot.lane.b32.xlu0 %v213, 64
    %v225 = vpop.permute.xlu0 %224
    %vm226 = vcmask 130048
    %v227 = vsel %vm226, %v213, 0
    %v229 = vsel %vm226, %v225, 0
    %231 = vmatprep.subr.mxu0 0.0
    %232 = vmatpush1.xpose.msra.mxu0 %v229
    %233 = vmatprep.subr.mxu0 0.0
    %234 = vmatpush1.xpose.msra.mxu0 0.0
    %235 = vmatprep.subr.mxu0 0.0
    %236 = vmatpush1.xpose.msra.mxu0 0.0
    %237 = vmatprep.subr.mxu0 0.0
    %238 = vmatpush1.xpose.msra.mxu0 0.0
    %239 = vmatprep.subr.mxu0 0.0
    %240 = vmatpush1.xpose.msra.mxu0 0.0
    %241 = vmatprep.subr.mxu0 0.0
    %242 = vmatpush1.xpose.msra.mxu0 0.0
    %243 = vmatprep.subr.mxu0 0.0
    %244 = vmatpush1.xpose.msra.mxu0 0.0
    %245 = vmatprep.subr.mxu0 0.0
    %246 = vmatpush1.xpose.msra.mxu0 0.0
    %247 = vmatprep.subr.mxu0 0.0
    %248 = vmatpush1.xpose.msra.mxu0 0.0
    %249 = vmatprep.subr.mxu0 0.0
    %250 = vmatpush1.xpose.msra.mxu0 0.0
    %251 = vmatprep.subr.mxu0 0.0
    %252 = vmatpush1.xpose.msra.mxu0 0.0
    %253 = vmatprep.subr.mxu0 0.0
    %254 = vmatpush1.xpose.msra.mxu0 0.0
    %255 = vmatprep.subr.mxu0 0.0
    %256 = vmatpush1.xpose.msra.mxu0 0.0
    %257 = vmatprep.subr.mxu0 0.0
    %258 = vmatpush1.xpose.msra.mxu0 0.0
    %259 = vmatprep.subr.mxu0 0.0
    %260 = vmatpush1.xpose.msra.mxu0 0.0
    %261 = vmatprep.subr.mxu0 0.0
    %262 = vmatpush1.xpose.msra.mxu0 0.0
    %263 = vmatprep.subr.mxu0 0.0
    %264 = vmatpush1.xpose.msra.mxu0 0.0
    %265 = vmatprep.subr.mxu0 0.0
    %266 = vmatpush1.xpose.msra.mxu0 0.0
    %267 = vmatprep.subr.mxu0 0.0
    %268 = vmatpush1.xpose.msra.mxu0 0.0
    %269 = vmatprep.subr.mxu0 0.0
    %270 = vmatpush1.xpose.msra.mxu0 0.0
    %271 = vmatprep.subr.mxu0 0.0
    %272 = vmatpush1.xpose.msra.mxu0 0.0
    %273 = vmatprep.subr.mxu0 0.0
    %274 = vmatpush1.xpose.msra.mxu0 0.0
    %275 = vmatprep.subr.mxu0 0.0
    %276 = vmatpush1.xpose.msra.mxu0 0.0
    %277 = vmatprep.subr.mxu0 0.0
    %278 = vmatpush1.xpose.msra.mxu0 0.0
    %279 = vmatprep.subr.mxu0 0.0
    %280 = vmatpush1.xpose.msra.mxu0 0.0
    %281 = vmatprep.subr.mxu0 0.0
    %282 = vmatpush1.xpose.msra.mxu0 0.0
    %283 = vmatprep.subr.mxu0 0.0
    %284 = vmatpush1.xpose.msra.mxu0 0.0
    %285 = vmatprep.subr.mxu0 0.0
    %286 = vmatpush1.xpose.msra.mxu0 0.0
    %287 = vmatprep.subr.mxu0 0.0
    %288 = vmatpush1.xpose.msra.mxu0 0.0
    %289 = vmatprep.subr.mxu0 0.0
    %290 = vmatpush1.xpose.msra.mxu0 0.0
    %291 = vmatprep.subr.mxu0 0.0
    %292 = vmatpush1.xpose.msra.mxu0 0.0
    %293 = vmatprep.subr.mxu0 0.0
    %294 = vmatpush1.xpose.msra.mxu0 0.0
    %295 = vmatprep.mubr.f32.mxu0 0.0
    %296 = vmatmul.mubr.f32.gmra.mrb[0].mxu0 %v227
    %v297 = vpop.f32.mrb[0].mxu0
    %v298 = vadd.f32 0.0, %v297
    %v299 = vpop.f32.mrb[0].mxu0
    %300 = vdwg.mxu0
    %v301 = vmul.f32 %v298, 0.25
    %vm302 = vcmask 64512
    %v303 = vsel %vm302, %v301, -inf
    %304 = vmax.xlane.f32.xlu0 %v303
    %v305 = vpop.xlane.xlu0 %304
    %v306 = vsub.f32 %v301, %v305
    %v307 = vmul.f32 %v306, 1.442695
    %v308 = vpow.pop %v307
    %v309 = vsel %vm302, %v308, 0.0
    %310 = vadd.xlane.f32.xlu0 %v309
    %v311 = vpop.xlane.xlu0 %310
    %v312 = vrcp.pop %v311
    %v313 = vmul.f32 %v308, %v312
    %v315 = vsel %vm302, %v313, 0
    %317 = vmatprep.subr.mxu0 0.0
    %318 = vmatpush1.msra.mxu0 %v215
    %319 = vmatprep.subr.mxu0 0.0
    %320 = vmatpush1.msra.mxu0 0.0
    %321 = vmatprep.subr.mxu0 0.0
    %322 = vmatpush1.msra.mxu0 0.0
    %323 = vmatprep.subr.mxu0 0.0
    %324 = vmatpush1.msra.mxu0 0.0
    %325 = vmatprep.subr.mxu0 0.0
    %326 = vmatpush1.msra.mxu0 0.0
    %327 = vmatprep.subr.mxu0 0.0
    %328 = vmatpush1.msra.mxu0 0.0
    %329 = vmatprep.subr.mxu0 0.0
    %330 = vmatpush1.msra.mxu0 0.0
    %331 = vmatprep.subr.mxu0 0.0
    %332 = vmatpush1.msra.mxu0 0.0
    %333 = vmatprep.subr.mxu0 0.0
    %334 = vmatpush1.msra.mxu0 0.0
    %335 = vmatprep.subr.mxu0 0.0
    %336 = vmatpush1.msra.mxu0 0.0
    %337 = vmatprep.subr.mxu0 0.0
    %338 = vmatpush1.msra.mxu0 0.0
    %339 = vmatprep.subr.mxu0 0.0
    %340 = vmatpush1.msra.mxu0 0.0
    %341 = vmatprep.subr.mxu0 0.0
    %342 = vmatpush1.msra.mxu0 0.0
    %343 = vmatprep.subr.mxu0 0.0
    %344 = vmatpush1.msra.mxu0 0.0
    %345 = vmatprep.subr.mxu0 0.0
    %346 = vmatpush1.msra.mxu0 0.0
    %347 = vmatprep.subr.mxu0 0.0
    %348 = vmatpush1.msra.mxu0 0.0
    %349 = vmatprep.subr.mxu0 0.0
    %350 = vmatpush1.msra.mxu0 0.0
    %351 = vmatprep.subr.mxu0 0.0
    %352 = vmatpush1.msra.mxu0 0.0
    %353 = vmatprep.subr.mxu0 0.0
    %354 = vmatpush1.msra.mxu0 0.0
    %355 = vmatprep.subr.mxu0 0.0
    %356 = vmatpush1.msra.mxu0 0.0
    %357 = vmatprep.subr.mxu0 0.0
    %358 = vmatpush1.msra.mxu0 0.0
    %359 = vmatprep.subr.mxu0 0.0
    %360 = vmatpush1.msra.mxu0 0.0
    %361 = vmatprep.subr.mxu0 0.0
    %362 = vmatpush1.msra.mxu0 0.0
    %363 = vmatprep.subr.mxu0 0.0
    %364 = vmatpush1.msra.mxu0 0.0
    %365 = vmatprep.subr.mxu0 0.0
    %366 = vmatpush1.msra.mxu0 0.0
    %367 = vmatprep.subr.mxu0 0.0
    %368 = vmatpush1.msra.mxu0 0.0
    %369 = vmatprep.subr.mxu0 0.0
    %370 = vmatpush1.msra.mxu0 0.0
    %371 = vmatprep.subr.mxu0 0.0
    %372 = vmatpush1.msra.mxu0 0.0
    %373 = vmatprep.subr.mxu0 0.0
    %374 = vmatpush1.msra.mxu0 0.0
    %375 = vmatprep.subr.mxu0 0.0
    %376 = vmatpush1.msra.mxu0 0.0
    %377 = vmatprep.subr.mxu0 0.0
    %378 = vmatpush1.msra.mxu0 0.0
    %379 = vmatprep.subr.mxu0 0.0
    %380 = vmatpush1.msra.mxu0 0.0
    %381 = vmatprep.mubr.f32.mxu0 0.0
    %382 = vmatmul.mubr.f32.gmra.mrb[0].mxu0 %v315
    %v383 = vpop.f32.mrb[0].mxu0
    %v384 = vadd.f32 0.0, %v383
    %v385 = vpop.f32.mrb[0].mxu0
    %386 = vdwg.mxu0
    %387 = vrot.lane.b32.xlu0 %v213, 112
    %v388 = vpop.permute.xlu0 %387
    %389 = vrot.lane.b32.xlu0 %v213, 48
    %v390 = vpop.permute.xlu0 %389
    %v391 = vsel %vm226, %v388, 0
    %v393 = vsel %vm226, %v390, 0
    %395 = vmatprep.subr.mxu0 0.0
    %396 = vmatpush1.xpose.msra.mxu0 %v393
    %397 = vmatprep.subr.mxu0 0.0
    %398 = vmatpush1.xpose.msra.mxu0 0.0
    %399 = vmatprep.subr.mxu0 0.0
    %400 = vmatpush1.xpose.msra.mxu0 0.0
    %401 = vmatprep.subr.mxu0 0.0
    %402 = vmatpush1.xpose.msra.mxu0 0.0
    %403 = vmatprep.subr.mxu0 0.0
    %404 = vmatpush1.xpose.msra.mxu0 0.0
    %405 = vmatprep.subr.mxu0 0.0
    %406 = vmatpush1.xpose.msra.mxu0 0.0
    %407 = vmatprep.subr.mxu0 0.0
    %408 = vmatpush1.xpose.msra.mxu0 0.0
    %409 = vmatprep.subr.mxu0 0.0
    %410 = vmatpush1.xpose.msra.mxu0 0.0
    %411 = vmatprep.subr.mxu0 0.0
    %412 = vmatpush1.xpose.msra.mxu0 0.0
    %413 = vmatprep.subr.mxu0 0.0
    %414 = vmatpush1.xpose.msra.mxu0 0.0
    %415 = vmatprep.subr.mxu0 0.0
    %416 = vmatpush1.xpose.msra.mxu0 0.0
    %417 = vmatprep.subr.mxu0 0.0
    %418 = vmatpush1.xpose.msra.mxu0 0.0
    %419 = vmatprep.subr.mxu0 0.0
    %420 = vmatpush1.xpose.msra.mxu0 0.0
    %421 = vmatprep.subr.mxu0 0.0
    %422 = vmatpush1.xpose.msra.mxu0 0.0
    %423 = vmatprep.subr.mxu0 0.0
    %424 = vmatpush1.xpose.msra.mxu0 0.0
    %425 = vmatprep.subr.mxu0 0.0
    %426 = vmatpush1.xpose.msra.mxu0 0.0
    %427 = vmatprep.subr.mxu0 0.0
    %428 = vmatpush1.xpose.msra.mxu0 0.0
    %429 = vmatprep.subr.mxu0 0.0
    %430 = vmatpush1.xpose.msra.mxu0 0.0
    %431 = vmatprep.subr.mxu0 0.0
    %432 = vmatpush1.xpose.msra.mxu0 0.0
    %433 = vmatprep.subr.mxu0 0.0
    %434 = vmatpush1.xpose.msra.mxu0 0.0
    %435 = vmatprep.subr.mxu0 0.0
    %436 = vmatpush1.xpose.msra.mxu0 0.0
    %437 = vmatprep.subr.mxu0 0.0
    %438 = vmatpush1.xpose.msra.mxu0 0.0
    %439 = vmatprep.subr.mxu0 0.0
    %440 = vmatpush1.xpose.msra.mxu0 0.0
    %441 = vmatprep.subr.mxu0 0.0
    %442 = vmatpush1.xpose.msra.mxu0 0.0
    %443 = vmatprep.subr.mxu0 0.0
    %444 = vmatpush1.xpose.msra.mxu0 0.0
    %445 = vmatprep.subr.mxu0 0.0
    %446 = vmatpush1.xpose.msra.mxu0 0.0
    %447 = vmatprep.subr.mxu0 0.0
    %448 = vmatpush1.xpose.msra.mxu0 0.0
    %449 = vmatprep.subr.mxu0 0.0
    %450 = vmatpush1.xpose.msra.mxu0 0.0
    %451 = vmatprep.subr.mxu0 0.0
    %452 = vmatpush1.xpose.msra.mxu0 0.0
    %453 = vmatprep.subr.mxu0 0.0
    %454 = vmatpush1.xpose.msra.mxu0 0.0
    %455 = vmatprep.subr.mxu0 0.0
    %456 = vmatpush1.xpose.msra.mxu0 0.0
    %457 = vmatprep.subr.mxu0 0.0
    %458 = vmatpush1.xpose.msra.mxu0 0.0
    %459 = vmatprep.mubr.f32.mxu0 0.0
    %460 = vmatmul.mubr.f32.gmra.mrb[0].mxu0 %v391
    %v461 = vpop.f32.mrb[0].mxu0
    %v462 = vadd.f32 0.0, %v461
    %v463 = vpop.f32.mrb[0].mxu0
    %464 = vdwg.mxu0
    %v465 = vmul.f32 %v462, 0.25
    %v466 = vsel %vm302, %v465, -inf
    %467 = vmax.xlane.f32.xlu0 %v466
    %v468 = vpop.xlane.xlu0 %467
    %v469 = vsub.f32 %v465, %v468
    %v470 = vmul.f32 %v469, 1.442695
    %v471 = vpow.pop %v470
    %v472 = vsel %vm302, %v471, 0.0
    %473 = vadd.xlane.f32.xlu0 %v472
    %v474 = vpop.xlane.xlu0 %473
    %v475 = vrcp.pop %v474
    %v476 = vmul.f32 %v471, %v475
    %478 = vrot.lane.b32.xlu0 %v215, 112
    %v479 = vpop.permute.xlu0 %478
    %v482 = vsel %vm302, %v476, 0
    %484 = vmatprep.subr.mxu0 0.0
    %485 = vmatpush1.msra.mxu0 %v479
    %486 = vmatprep.subr.mxu0 0.0
    %487 = vmatpush1.msra.mxu0 0.0
    %488 = vmatprep.subr.mxu0 0.0
    %489 = vmatpush1.msra.mxu0 0.0
    %490 = vmatprep.subr.mxu0 0.0
    %491 = vmatpush1.msra.mxu0 0.0
    %492 = vmatprep.subr.mxu0 0.0
    %493 = vmatpush1.msra.mxu0 0.0
    %494 = vmatprep.subr.mxu0 0.0
    %495 = vmatpush1.msra.mxu0 0.0
    %496 = vmatprep.subr.mxu0 0.0
    %497 = vmatpush1.msra.mxu0 0.0
    %498 = vmatprep.subr.mxu0 0.0
    %499 = vmatpush1.msra.mxu0 0.0
    %500 = vmatprep.subr.mxu0 0.0
    %501 = vmatpush1.msra.mxu0 0.0
    %502 = vmatprep.subr.mxu0 0.0
    %503 = vmatpush1.msra.mxu0 0.0
    %504 = vmatprep.subr.mxu0 0.0
    %505 = vmatpush1.msra.mxu0 0.0
    %506 = vmatprep.subr.mxu0 0.0
    %507 = vmatpush1.msra.mxu0 0.0
    %508 = vmatprep.subr.mxu0 0.0
    %509 = vmatpush1.msra.mxu0 0.0
    %510 = vmatprep.subr.mxu0 0.0
    %511 = vmatpush1.msra.mxu0 0.0
    %512 = vmatprep.subr.mxu0 0.0
    %513 = vmatpush1.msra.mxu0 0.0
    %514 = vmatprep.subr.mxu0 0.0
    %515 = vmatpush1.msra.mxu0 0.0
    %516 = vmatprep.subr.mxu0 0.0
    %517 = vmatpush1.msra.mxu0 0.0
    %518 = vmatprep.subr.mxu0 0.0
    %519 = vmatpush1.msra.mxu0 0.0
    %520 = vmatprep.subr.mxu0 0.0
    %521 = vmatpush1.msra.mxu0 0.0
    %522 = vmatprep.subr.mxu0 0.0
    %523 = vmatpush1.msra.mxu0 0.0
    %524 = vmatprep.subr.mxu0 0.0
    %525 = vmatpush1.msra.mxu0 0.0
    %526 = vmatprep.subr.mxu0 0.0
    %527 = vmatpush1.msra.mxu0 0.0
    %528 = vmatprep.subr.mxu0 0.0
    %529 = vmatpush1.msra.mxu0 0.0
    %530 = vmatprep.subr.mxu0 0.0
    %531 = vmatpush1.msra.mxu0 0.0
    %532 = vmatprep.subr.mxu0 0.0
    %533 = vmatpush1.msra.mxu0 0.0
    %534 = vmatprep.subr.mxu0 0.0
    %535 = vmatpush1.msra.mxu0 0.0
    %536 = vmatprep.subr.mxu0 0.0
    %537 = vmatpush1.msra.mxu0 0.0
    %538 = vmatprep.subr.mxu0 0.0
    %539 = vmatpush1.msra.mxu0 0.0
    %540 = vmatprep.subr.mxu0 0.0
    %541 = vmatpush1.msra.mxu0 0.0
    %542 = vmatprep.subr.mxu0 0.0
    %543 = vmatpush1.msra.mxu0 0.0
    %544 = vmatprep.subr.mxu0 0.0
    %545 = vmatpush1.msra.mxu0 0.0
    %546 = vmatprep.subr.mxu0 0.0
    %547 = vmatpush1.msra.mxu0 0.0
    %548 = vmatprep.mubr.f32.mxu0 0.0
    %549 = vmatmul.mubr.f32.gmra.mrb[0].mxu0 %v482
    %v550 = vpop.f32.mrb[0].mxu0
    %v551 = vadd.f32 0.0, %v550
    %v552 = vpop.f32.mrb[0].mxu0
    %553 = vdwg.mxu0
    %v555 = vsel %vm226, %v551, 0
    %557 = vmatprep.subr.mxu0 0.0
    %558 = vmatpush1.msra.mxu0 %v133
    %559 = vmatprep.subr.mxu0 0.0
    %560 = vmatpush1.msra.mxu0 %v134
    %561 = vmatprep.subr.mxu0 0.0
    %562 = vmatpush1.msra.mxu0 0.0
    %563 = vmatprep.subr.mxu0 0.0
    %564 = vmatpush1.msra.mxu0 0.0
    %565 = vmatprep.subr.mxu0 0.0
    %566 = vmatpush1.msra.mxu0 0.0
    %567 = vmatprep.subr.mxu0 0.0
    %568 = vmatpush1.msra.mxu0 0.0
    %569 = vmatprep.subr.mxu0 0.0
    %570 = vmatpush1.msra.mxu0 0.0
    %571 = vmatprep.subr.mxu0 0.0
    %572 = vmatpush1.msra.mxu0 0.0
    %573 = vmatprep.subr.mxu0 0.0
    %574 = vmatpush1.msra.mxu0 0.0
    %575 = vmatprep.subr.mxu0 0.0
    %576 = vmatpush1.msra.mxu0 0.0
    %577 = vmatprep.subr.mxu0 0.0
    %578 = vmatpush1.msra.mxu0 0.0
    %579 = vmatprep.subr.mxu0 0.0
    %580 = vmatpush1.msra.mxu0 0.0
    %581 = vmatprep.subr.mxu0 0.0
    %582 = vmatpush1.msra.mxu0 0.0
    %583 = vmatprep.subr.mxu0 0.0
    %584 = vmatpush1.msra.mxu0 0.0
    %585 = vmatprep.subr.mxu0 0.0
    %586 = vmatpush1.msra.mxu0 0.0
    %587 = vmatprep.subr.mxu0 0.0
    %588 = vmatpush1.msra.mxu0 0.0
    %589 = vmatprep.subr.mxu0 0.0
    %590 = vmatpush1.msra.mxu0 0.0
    %591 = vmatprep.subr.mxu0 0.0
    %592 = vmatpush1.msra.mxu0 0.0
    %593 = vmatprep.subr.mxu0 0.0
    %594 = vmatpush1.msra.mxu0 0.0
    %595 = vmatprep.subr.mxu0 0.0
    %596 = vmatpush1.msra.mxu0 0.0
    %597 = vmatprep.subr.mxu0 0.0
    %598 = vmatpush1.msra.mxu0 0.0
    %599 = vmatprep.subr.mxu0 0.0
    %600 = vmatpush1.msra.mxu0 0.0
    %601 = vmatprep.subr.mxu0 0.0
    %602 = vmatpush1.msra.mxu0 0.0
    %603 = vmatprep.subr.mxu0 0.0
    %604 = vmatpush1.msra.mxu0 0.0
    %605 = vmatprep.subr.mxu0 0.0
    %606 = vmatpush1.msra.mxu0 0.0
    %607 = vmatprep.subr.mxu0 0.0
    %608 = vmatpush1.msra.mxu0 0.0
    %609 = vmatprep.subr.mxu0 0.0
    %610 = vmatpush1.msra.mxu0 0.0
    %611 = vmatprep.subr.mxu0 0.0
    %612 = vmatpush1.msra.mxu0 0.0
    %613 = vmatprep.subr.mxu0 0.0
    %614 = vmatpush1.msra.mxu0 0.0
    %615 = vmatprep.subr.mxu0 0.0
    %616 = vmatpush1.msra.mxu0 0.0
    %617 = vmatprep.subr.mxu0 0.0
    %618 = vmatpush1.msra.mxu0 0.0
    %619 = vmatprep.subr.mxu0 0.0
    %620 = vmatpush1.msra.mxu0 0.0
    %621 = vmatprep.mubr.f32.mxu0 0.0
    %622 = vmatmul.mubr.f32.gmra.mrb[0].mxu0 %v555
    %v623 = vpop.f32.mrb[0].mxu0
    %v624 = vadd.f32 0.0, %v623
    %v625 = vpop.f32.mrb[0].mxu0
    %626 = vdwg.mxu0
    %v628 = vsel %vm226, %v384, 0
    %630 = vmatprep.subr.mxu0 0.0
    %631 = vmatpush1.msra.mxu0 %v131
    %632 = vmatprep.subr.mxu0 0.0
    %633 = vmatpush1.msra.mxu0 %v132
    %634 = vmatprep.subr.mxu0 0.0
    %635 = vmatpush1.msra.mxu0 0.0
    %636 = vmatprep.subr.mxu0 0.0
    %637 = vmatpush1.msra.mxu0 0.0
    %638 = vmatprep.subr.mxu0 0.0
    %639 = vmatpush1.msra.mxu0 0.0
    %640 = vmatprep.subr.mxu0 0.0
    %641 = vmatpush1.msra.mxu0 0.0
    %642 = vmatprep.subr.mxu0 0.0
    %643 = vmatpush1.msra.mxu0 0.0
    %644 = vmatprep.subr.mxu0 0.0
    %645 = vmatpush1.msra.mxu0 0.0
    %646 = vmatprep.subr.mxu0 0.0
    %647 = vmatpush1.msra.mxu0 0.0
    %648 = vmatprep.subr.mxu0 0.0
    %649 = vmatpush1.msra.mxu0 0.0
    %650 = vmatprep.subr.mxu0 0.0
    %651 = vmatpush1.msra.mxu0 0.0
    %652 = vmatprep.subr.mxu0 0.0
    %653 = vmatpush1.msra.mxu0 0.0
    %654 = vmatprep.subr.mxu0 0.0
    %655 = vmatpush1.msra.mxu0 0.0
    %656 = vmatprep.subr.mxu0 0.0
    %657 = vmatpush1.msra.mxu0 0.0
    %658 = vmatprep.subr.mxu0 0.0
    %659 = vmatpush1.msra.mxu0 0.0
    %660 = vmatprep.subr.mxu0 0.0
    %661 = vmatpush1.msra.mxu0 0.0
    %662 = vmatprep.subr.mxu0 0.0
    %663 = vmatpush1.msra.mxu0 0.0
    %664 = vmatprep.subr.mxu0 0.0
    %665 = vmatpush1.msra.mxu0 0.0
    %666 = vmatprep.subr.mxu0 0.0
    %667 = vmatpush1.msra.mxu0 0.0
    %668 = vmatprep.subr.mxu0 0.0
    %669 = vmatpush1.msra.mxu0 0.0
    %670 = vmatprep.subr.mxu0 0.0
    %671 = vmatpush1.msra.mxu0 0.0
    %672 = vmatprep.subr.mxu0 0.0
    %673 = vmatpush1.msra.mxu0 0.0
    %674 = vmatprep.subr.mxu0 0.0
    %675 = vmatpush1.msra.mxu0 0.0
    %676 = vmatprep.subr.mxu0 0.0
    %677 = vmatpush1.msra.mxu0 0.0
    %678 = vmatprep.subr.mxu0 0.0
    %679 = vmatpush1.msra.mxu0 0.0
    %680 = vmatprep.subr.mxu0 0.0
    %681 = vmatpush1.msra.mxu0 0.0
    %682 = vmatprep.subr.mxu0 0.0
    %683 = vmatpush1.msra.mxu0 0.0
    %684 = vmatprep.subr.mxu0 0.0
    %685 = vmatpush1.msra.mxu0 0.0
    %686 = vmatprep.subr.mxu0 0.0
    %687 = vmatpush1.msra.mxu0 0.0
    %688 = vmatprep.subr.mxu0 0.0
    %689 = vmatpush1.msra.mxu0 0.0
    %690 = vmatprep.subr.mxu0 0.0
    %691 = vmatpush1.msra.mxu0 0.0
    %692 = vmatprep.subr.mxu0 0.0
    %693 = vmatpush1.msra.mxu0 0.0
    %694 = vmatprep.mubr.f32.mxu0 0.0
    %695 = vmatmul.mubr.f32.gmra.mrb[0].mxu0 %v628
    %v696 = vpop.f32.mrb[0].mxu0
    %v697 = vadd.f32 %v624, %v696
    %v698 = vpop.f32.mrb[0].mxu0
    %699 = vdwg.mxu0
    %700 = vrot.lane.b32.xlu0 %v213, 96
    %v701 = vpop.permute.xlu0 %700
    %702 = vrot.lane.b32.xlu0 %v213, 32
    %v703 = vpop.permute.xlu0 %702
    %v704 = vsel %vm226, %v701, 0
    %v706 = vsel %vm226, %v703, 0
    %708 = vmatprep.subr.mxu0 0.0
    %709 = vmatpush1.xpose.msra.mxu0 %v706
    %710 = vmatprep.subr.mxu0 0.0
    %711 = vmatpush1.xpose.msra.mxu0 0.0
    %712 = vmatprep.subr.mxu0 0.0
    %713 = vmatpush1.xpose.msra.mxu0 0.0
    %714 = vmatprep.subr.mxu0 0.0
    %715 = vmatpush1.xpose.msra.mxu0 0.0
    %716 = vmatprep.subr.mxu0 0.0
    %717 = vmatpush1.xpose.msra.mxu0 0.0
    %718 = vmatprep.subr.mxu0 0.0
    %719 = vmatpush1.xpose.msra.mxu0 0.0
    %720 = vmatprep.subr.mxu0 0.0
    %721 = vmatpush1.xpose.msra.mxu0 0.0
    %722 = vmatprep.subr.mxu0 0.0
    %723 = vmatpush1.xpose.msra.mxu0 0.0
    %724 = vmatprep.subr.mxu0 0.0
    %725 = vmatpush1.xpose.msra.mxu0 0.0
    %726 = vmatprep.subr.mxu0 0.0
    %727 = vmatpush1.xpose.msra.mxu0 0.0
    %728 = vmatprep.subr.mxu0 0.0
    %729 = vmatpush1.xpose.msra.mxu0 0.0
    %730 = vmatprep.subr.mxu0 0.0
    %731 = vmatpush1.xpose.msra.mxu0 0.0
    %732 = vmatprep.subr.mxu0 0.0
    %733 = vmatpush1.xpose.msra.mxu0 0.0
    %734 = vmatprep.subr.mxu0 0.0
    %735 = vmatpush1.xpose.msra.mxu0 0.0
    %736 = vmatprep.subr.mxu0 0.0
    %737 = vmatpush1.xpose.msra.mxu0 0.0
    %738 = vmatprep.subr.mxu0 0.0
    %739 = vmatpush1.xpose.msra.mxu0 0.0
    %740 = vmatprep.subr.mxu0 0.0
    %741 = vmatpush1.xpose.msra.mxu0 0.0
    %742 = vmatprep.subr.mxu0 0.0
    %743 = vmatpush1.xpose.msra.mxu0 0.0
    %744 = vmatprep.subr.mxu0 0.0
    %745 = vmatpush1.xpose.msra.mxu0 0.0
    %746 = vmatprep.subr.mxu0 0.0
    %747 = vmatpush1.xpose.msra.mxu0 0.0
    %748 = vmatprep.subr.mxu0 0.0
    %749 = vmatpush1.xpose.msra.mxu0 0.0
    %750 = vmatprep.subr.mxu0 0.0
    %751 = vmatpush1.xpose.msra.mxu0 0.0
    %752 = vmatprep.subr.mxu0 0.0
    %753 = vmatpush1.xpose.msra.mxu0 0.0
    %754 = vmatprep.subr.mxu0 0.0
    %755 = vmatpush1.xpose.msra.mxu0 0.0
    %756 = vmatprep.subr.mxu0 0.0
    %757 = vmatpush1.xpose.msra.mxu0 0.0
    %758 = vmatprep.subr.mxu0 0.0
    %759 = vmatpush1.xpose.msra.mxu0 0.0
    %760 = vmatprep.subr.mxu0 0.0
    %761 = vmatpush1.xpose.msra.mxu0 0.0
    %762 = vmatprep.subr.mxu0 0.0
    %763 = vmatpush1.xpose.msra.mxu0 0.0
    %764 = vmatprep.subr.mxu0 0.0
    %765 = vmatpush1.xpose.msra.mxu0 0.0
    %766 = vmatprep.subr.mxu0 0.0
    %767 = vmatpush1.xpose.msra.mxu0 0.0
    %768 = vmatprep.subr.mxu0 0.0
    %769 = vmatpush1.xpose.msra.mxu0 0.0
    %770 = vmatprep.subr.mxu0 0.0
    %771 = vmatpush1.xpose.msra.mxu0 0.0
    %772 = vmatprep.mubr.f32.mxu0 0.0
    %773 = vmatmul.mubr.f32.gmra.mrb[0].mxu0 %v704
    %v774 = vpop.f32.mrb[0].mxu0
    %v775 = vadd.f32 0.0, %v774
    %v776 = vpop.f32.mrb[0].mxu0
    %777 = vdwg.mxu0
    %v778 = vmul.f32 %v775, 0.25
    %v779 = vsel %vm302, %v778, -inf
    %780 = vmax.xlane.f32.xlu0 %v779
    %v781 = vpop.xlane.xlu0 %780
    %v782 = vsub.f32 %v778, %v781
    %v783 = vmul.f32 %v782, 1.442695
    %v784 = vpow.pop %v783
    %v785 = vsel %vm302, %v784, 0.0
    %786 = vadd.xlane.f32.xlu0 %v785
    %v787 = vpop.xlane.xlu0 %786
    %v788 = vrcp.pop %v787
    %v789 = vmul.f32 %v784, %v788
    %790 = vrot.lane.b32.xlu0 %v215, 96
    %v791 = vpop.permute.xlu0 %790
    %v794 = vsel %vm302, %v789, 0
    %796 = vmatprep.subr.mxu0 0.0
    %797 = vmatpush1.msra.mxu0 %v791
    %798 = vmatprep.subr.mxu0 0.0
    %799 = vmatpush1.msra.mxu0 0.0
    %800 = vmatprep.subr.mxu0 0.0
    %801 = vmatpush1.msra.mxu0 0.0
    %802 = vmatprep.subr.mxu0 0.0
    %803 = vmatpush1.msra.mxu0 0.0
    %804 = vmatprep.subr.mxu0 0.0
    %805 = vmatpush1.msra.mxu0 0.0
    %806 = vmatprep.subr.mxu0 0.0
    %807 = vmatpush1.msra.mxu0 0.0
    %808 = vmatprep.subr.mxu0 0.0
    %809 = vmatpush1.msra.mxu0 0.0
    %810 = vmatprep.subr.mxu0 0.0
    %811 = vmatpush1.msra.mxu0 0.0
    %812 = vmatprep.subr.mxu0 0.0
    %813 = vmatpush1.msra.mxu0 0.0
    %814 = vmatprep.subr.mxu0 0.0
    %815 = vmatpush1.msra.mxu0 0.0
    %816 = vmatprep.subr.mxu0 0.0
    %817 = vmatpush1.msra.mxu0 0.0
    %818 = vmatprep.subr.mxu0 0.0
    %819 = vmatpush1.msra.mxu0 0.0
    %820 = vmatprep.subr.mxu0 0.0
    %821 = vmatpush1.msra.mxu0 0.0
    %822 = vmatprep.subr.mxu0 0.0
    %823 = vmatpush1.msra.mxu0 0.0
    %824 = vmatprep.subr.mxu0 0.0
    %825 = vmatpush1.msra.mxu0 0.0
    %826 = vmatprep.subr.mxu0 0.0
    %827 = vmatpush1.msra.mxu0 0.0
    %828 = vmatprep.subr.mxu0 0.0
    %829 = vmatpush1.msra.mxu0 0.0
    %830 = vmatprep.subr.mxu0 0.0
    %831 = vmatpush1.msra.mxu0 0.0
    %832 = vmatprep.subr.mxu0 0.0
    %833 = vmatpush1.msra.mxu0 0.0
    %834 = vmatprep.subr.mxu0 0.0
    %835 = vmatpush1.msra.mxu0 0.0
    %836 = vmatprep.subr.mxu0 0.0
    %837 = vmatpush1.msra.mxu0 0.0
    %838 = vmatprep.subr.mxu0 0.0
    %839 = vmatpush1.msra.mxu0 0.0
    %840 = vmatprep.subr.mxu0 0.0
    %841 = vmatpush1.msra.mxu0 0.0
    %842 = vmatprep.subr.mxu0 0.0
    %843 = vmatpush1.msra.mxu0 0.0
    %844 = vmatprep.subr.mxu0 0.0
    %845 = vmatpush1.msra.mxu0 0.0
    %846 = vmatprep.subr.mxu0 0.0
    %847 = vmatpush1.msra.mxu0 0.0
    %848 = vmatprep.subr.mxu0 0.0
    %849 = vmatpush1.msra.mxu0 0.0
    %850 = vmatprep.subr.mxu0 0.0
    %851 = vmatpush1.msra.mxu0 0.0
    %852 = vmatprep.subr.mxu0 0.0
    %853 = vmatpush1.msra.mxu0 0.0
    %854 = vmatprep.subr.mxu0 0.0
    %855 = vmatpush1.msra.mxu0 0.0
    %856 = vmatprep.subr.mxu0 0.0
    %857 = vmatpush1.msra.mxu0 0.0
    %858 = vmatprep.subr.mxu0 0.0
    %859 = vmatpush1.msra.mxu0 0.0
    %860 = vmatprep.mubr.f32.mxu0 0.0
    %861 = vmatmul.mubr.f32.gmra.mrb[0].mxu0 %v794
    %v862 = vpop.f32.mrb[0].mxu0
    %v863 = vadd.f32 0.0, %v862
    %v864 = vpop.f32.mrb[0].mxu0
    %865 = vdwg.mxu0
    %v867 = vsel %vm226, %v863, 0
    %869 = vmatprep.subr.mxu0 0.0
    %870 = vmatpush1.msra.mxu0 %v135
    %871 = vmatprep.subr.mxu0 0.0
    %872 = vmatpush1.msra.mxu0 %v136
    %873 = vmatprep.subr.mxu0 0.0
    %874 = vmatpush1.msra.mxu0 0.0
    %875 = vmatprep.subr.mxu0 0.0
    %876 = vmatpush1.msra.mxu0 0.0
    %877 = vmatprep.subr.mxu0 0.0
    %878 = vmatpush1.msra.mxu0 0.0
    %879 = vmatprep.subr.mxu0 0.0
    %880 = vmatpush1.msra.mxu0 0.0
    %881 = vmatprep.subr.mxu0 0.0
    %882 = vmatpush1.msra.mxu0 0.0
    %883 = vmatprep.subr.mxu0 0.0
    %884 = vmatpush1.msra.mxu0 0.0
    %885 = vmatprep.subr.mxu0 0.0
    %886 = vmatpush1.msra.mxu0 0.0
    %887 = vmatprep.subr.mxu0 0.0
    %888 = vmatpush1.msra.mxu0 0.0
    %889 = vmatprep.subr.mxu0 0.0
    %890 = vmatpush1.msra.mxu0 0.0
    %891 = vmatprep.subr.mxu0 0.0
    %892 = vmatpush1.msra.mxu0 0.0
    %893 = vmatprep.subr.mxu0 0.0
    %894 = vmatpush1.msra.mxu0 0.0
    %895 = vmatprep.subr.mxu0 0.0
    %896 = vmatpush1.msra.mxu0 0.0
    %897 = vmatprep.subr.mxu0 0.0
    %898 = vmatpush1.msra.mxu0 0.0
    %899 = vmatprep.subr.mxu0 0.0
    %900 = vmatpush1.msra.mxu0 0.0
    %901 = vmatprep.subr.mxu0 0.0
    %902 = vmatpush1.msra.mxu0 0.0
    %903 = vmatprep.subr.mxu0 0.0
    %904 = vmatpush1.msra.mxu0 0.0
    %905 = vmatprep.subr.mxu0 0.0
    %906 = vmatpush1.msra.mxu0 0.0
    %907 = vmatprep.subr.mxu0 0.0
    %908 = vmatpush1.msra.mxu0 0.0
    %909 = vmatprep.subr.mxu0 0.0
    %910 = vmatpush1.msra.mxu0 0.0
    %911 = vmatprep.subr.mxu0 0.0
    %912 = vmatpush1.msra.mxu0 0.0
    %913 = vmatprep.subr.mxu0 0.0
    %914 = vmatpush1.msra.mxu0 0.0
    %915 = vmatprep.subr.mxu0 0.0
    %916 = vmatpush1.msra.mxu0 0.0
    %917 = vmatprep.subr.mxu0 0.0
    %918 = vmatpush1.msra.mxu0 0.0
    %919 = vmatprep.subr.mxu0 0.0
    %920 = vmatpush1.msra.mxu0 0.0
    %921 = vmatprep.subr.mxu0 0.0
    %922 = vmatpush1.msra.mxu0 0.0
    %923 = vmatprep.subr.mxu0 0.0
    %924 = vmatpush1.msra.mxu0 0.0
    %925 = vmatprep.subr.mxu0 0.0
    %926 = vmatpush1.msra.mxu0 0.0
    %927 = vmatprep.subr.mxu0 0.0
    %928 = vmatpush1.msra.mxu0 0.0
    %929 = vmatprep.subr.mxu0 0.0
    %930 = vmatpush1.msra.mxu0 0.0
    %931 = vmatprep.subr.mxu0 0.0
    %932 = vmatpush1.msra.mxu0 0.0
    %933 = vmatprep.mubr.f32.mxu0 0.0
    %934 = vmatmul.mubr.f32.gmra.mrb[0].mxu0 %v867
    %v935 = vpop.f32.mrb[0].mxu0
    %v936 = vadd.f32 0.0, %v935
    %v937 = vpop.f32.mrb[0].mxu0
    %938 = vdwg.mxu0
    %v939 = vadd.f32 %v697, %v936
    %940 = vrot.lane.b32.xlu0 %v213, 80
    %v941 = vpop.permute.xlu0 %940
    %942 = vrot.lane.b32.xlu0 %v213, 16
    %v943 = vpop.permute.xlu0 %942
    %v944 = vsel %vm226, %v941, 0
    %v946 = vsel %vm226, %v943, 0
    %948 = vmatprep.subr.mxu0 0.0
    %949 = vmatpush1.xpose.msra.mxu0 %v946
    %950 = vmatprep.subr.mxu0 0.0
    %951 = vmatpush1.xpose.msra.mxu0 0.0
    %952 = vmatprep.subr.mxu0 0.0
    %953 = vmatpush1.xpose.msra.mxu0 0.0
    %954 = vmatprep.subr.mxu0 0.0
    %955 = vmatpush1.xpose.msra.mxu0 0.0
    %956 = vmatprep.subr.mxu0 0.0
    %957 = vmatpush1.xpose.msra.mxu0 0.0
    %958 = vmatprep.subr.mxu0 0.0
    %959 = vmatpush1.xpose.msra.mxu0 0.0
    %960 = vmatprep.subr.mxu0 0.0
    %961 = vmatpush1.xpose.msra.mxu0 0.0
    %962 = vmatprep.subr.mxu0 0.0
    %963 = vmatpush1.xpose.msra.mxu0 0.0
    %964 = vmatprep.subr.mxu0 0.0
    %965 = vmatpush1.xpose.msra.mxu0 0.0
    %966 = vmatprep.subr.mxu0 0.0
    %967 = vmatpush1.xpose.msra.mxu0 0.0
    %968 = vmatprep.subr.mxu0 0.0
    %969 = vmatpush1.xpose.msra.mxu0 0.0
    %970 = vmatprep.subr.mxu0 0.0
    %971 = vmatpush1.xpose.msra.mxu0 0.0
    %972 = vmatprep.subr.mxu0 0.0
    %973 = vmatpush1.xpose.msra.mxu0 0.0
    %974 = vmatprep.subr.mxu0 0.0
    %975 = vmatpush1.xpose.msra.mxu0 0.0
    %976 = vmatprep.subr.mxu0 0.0
    %977 = vmatpush1.xpose.msra.mxu0 0.0
    %978 = vmatprep.subr.mxu0 0.0
    %979 = vmatpush1.xpose.msra.mxu0 0.0
    %980 = vmatprep.subr.mxu0 0.0
    %981 = vmatpush1.xpose.msra.mxu0 0.0
    %982 = vmatprep.subr.mxu0 0.0
    %983 = vmatpush1.xpose.msra.mxu0 0.0
    %984 = vmatprep.subr.mxu0 0.0
    %985 = vmatpush1.xpose.msra.mxu0 0.0
    %986 = vmatprep.subr.mxu0 0.0
    %987 = vmatpush1.xpose.msra.mxu0 0.0
    %988 = vmatprep.subr.mxu0 0.0
    %989 = vmatpush1.xpose.msra.mxu0 0.0
    %990 = vmatprep.subr.mxu0 0.0
    %991 = vmatpush1.xpose.msra.mxu0 0.0
    %992 = vmatprep.subr.mxu0 0.0
    %993 = vmatpush1.xpose.msra.mxu0 0.0
    %994 = vmatprep.subr.mxu0 0.0
    %995 = vmatpush1.xpose.msra.mxu0 0.0
    %996 = vmatprep.subr.mxu0 0.0
    %997 = vmatpush1.xpose.msra.mxu0 0.0
    %998 = vmatprep.subr.mxu0 0.0
    %999 = vmatpush1.xpose.msra.mxu0 0.0
    %1000 = vmatprep.subr.mxu0 0.0
    %1001 = vmatpush1.xpose.msra.mxu0 0.0
    %1002 = vmatprep.subr.mxu0 0.0
    %1003 = vmatpush1.xpose.msra.mxu0 0.0
    %1004 = vmatprep.subr.mxu0 0.0
    %1005 = vmatpush1.xpose.msra.mxu0 0.0
    %1006 = vmatprep.subr.mxu0 0.0
    %1007 = vmatpush1.xpose.msra.mxu0 0.0
    %1008 = vmatprep.subr.mxu0 0.0
    %1009 = vmatpush1.xpose.msra.mxu0 0.0
    %1010 = vmatprep.subr.mxu0 0.0
    %1011 = vmatpush1.xpose.msra.mxu0 0.0
    %1012 = vmatprep.mubr.f32.mxu0 0.0
    %1013 = vmatmul.mubr.f32.gmra.mrb[0].mxu0 %v944
    %v1014 = vpop.f32.mrb[0].mxu0
    %v1015 = vadd.f32 0.0, %v1014
    %v1016 = vpop.f32.mrb[0].mxu0
    %1017 = vdwg.mxu0
    %v1018 = vmul.f32 %v1015, 0.25
    %v1019 = vsel %vm302, %v1018, -inf
    %1020 = vmax.xlane.f32.xlu0 %v1019
    %v1021 = vpop.xlane.xlu0 %1020
    %v1022 = vsub.f32 %v1018, %v1021
    %v1023 = vmul.f32 %v1022, 1.442695
    %v1024 = vpow.pop %v1023
    %v1025 = vsel %vm302, %v1024, 0.0
    %1026 = vadd.xlane.f32.xlu0 %v1025
    %v1027 = vpop.xlane.xlu0 %1026
    %v1028 = vrcp.pop %v1027
    %v1029 = vmul.f32 %v1024, %v1028
    %1030 = vrot.lane.b32.xlu0 %v215, 80
    %v1031 = vpop.permute.xlu0 %1030
    %v1034 = vsel %vm302, %v1029, 0
    %1036 = vmatprep.subr.mxu0 0.0
    %1037 = vmatpush1.msra.mxu0 %v1031
    %1038 = vmatprep.subr.mxu0 0.0
    %1039 = vmatpush1.msra.mxu0 0.0
    %1040 = vmatprep.subr.mxu0 0.0
    %1041 = vmatpush1.msra.mxu0 0.0
    %1042 = vmatprep.subr.mxu0 0.0
    %1043 = vmatpush1.msra.mxu0 0.0
    %1044 = vmatprep.subr.mxu0 0.0
    %1045 = vmatpush1.msra.mxu0 0.0
    %1046 = vmatprep.subr.mxu0 0.0
    %1047 = vmatpush1.msra.mxu0 0.0
    %1048 = vmatprep.subr.mxu0 0.0
    %1049 = vmatpush1.msra.mxu0 0.0
    %1050 = vmatprep.subr.mxu0 0.0
    %1051 = vmatpush1.msra.mxu0 0.0
    %1052 = vmatprep.subr.mxu0 0.0
    %1053 = vmatpush1.msra.mxu0 0.0
    %1054 = vmatprep.subr.mxu0 0.0
    %1055 = vmatpush1.msra.mxu0 0.0
    %1056 = vmatprep.subr.mxu0 0.0
    %1057 = vmatpush1.msra.mxu0 0.0
    %1058 = vmatprep.subr.mxu0 0.0
    %1059 = vmatpush1.msra.mxu0 0.0
    %1060 = vmatprep.subr.mxu0 0.0
    %1061 = vmatpush1.msra.mxu0 0.0
    %1062 = vmatprep.subr.mxu0 0.0
    %1063 = vmatpush1.msra.mxu0 0.0
    %1064 = vmatprep.subr.mxu0 0.0
    %1065 = vmatpush1.msra.mxu0 0.0
    %1066 = vmatprep.subr.mxu0 0.0
    %1067 = vmatpush1.msra.mxu0 0.0
    %1068 = vmatprep.subr.mxu0 0.0
    %1069 = vmatpush1.msra.mxu0 0.0
    %1070 = vmatprep.subr.mxu0 0.0
    %1071 = vmatpush1.msra.mxu0 0.0
    %1072 = vmatprep.subr.mxu0 0.0
    %1073 = vmatpush1.msra.mxu0 0.0
    %1074 = vmatprep.subr.mxu0 0.0
    %1075 = vmatpush1.msra.mxu0 0.0
    %1076 = vmatprep.subr.mxu0 0.0
    %1077 = vmatpush1.msra.mxu0 0.0
    %1078 = vmatprep.subr.mxu0 0.0
    %1079 = vmatpush1.msra.mxu0 0.0
    %1080 = vmatprep.subr.mxu0 0.0
    %1081 = vmatpush1.msra.mxu0 0.0
    %1082 = vmatprep.subr.mxu0 0.0
    %1083 = vmatpush1.msra.mxu0 0.0
    %1084 = vmatprep.subr.mxu0 0.0
    %1085 = vmatpush1.msra.mxu0 0.0
    %1086 = vmatprep.subr.mxu0 0.0
    %1087 = vmatpush1.msra.mxu0 0.0
    %1088 = vmatprep.subr.mxu0 0.0
    %1089 = vmatpush1.msra.mxu0 0.0
    %1090 = vmatprep.subr.mxu0 0.0
    %1091 = vmatpush1.msra.mxu0 0.0
    %1092 = vmatprep.subr.mxu0 0.0
    %1093 = vmatpush1.msra.mxu0 0.0
    %1094 = vmatprep.subr.mxu0 0.0
    %1095 = vmatpush1.msra.mxu0 0.0
    %1096 = vmatprep.subr.mxu0 0.0
    %1097 = vmatpush1.msra.mxu0 0.0
    %1098 = vmatprep.subr.mxu0 0.0
    %1099 = vmatpush1.msra.mxu0 0.0
    %1100 = vmatprep.mubr.f32.mxu0 0.0
    %1101 = vmatmul.mubr.f32.gmra.mrb[0].mxu0 %v1034
    %v1102 = vpop.f32.mrb[0].mxu0
    %v1103 = vadd.f32 0.0, %v1102
    %v1104 = vpop.f32.mrb[0].mxu0
    %1105 = vdwg.mxu0
    %v1107 = vsel %vm226, %v1103, 0
    %1109 = vmatprep.subr.mxu0 0.0
    %1110 = vmatpush1.msra.mxu0 %v137
    %1111 = vmatprep.subr.mxu0 0.0
    %1112 = vmatpush1.msra.mxu0 %v138
    %1113 = vmatprep.subr.mxu0 0.0
    %1114 = vmatpush1.msra.mxu0 0.0
    %1115 = vmatprep.subr.mxu0 0.0
    %1116 = vmatpush1.msra.mxu0 0.0
    %1117 = vmatprep.subr.mxu0 0.0
    %1118 = vmatpush1.msra.mxu0 0.0
    %1119 = vmatprep.subr.mxu0 0.0
    %1120 = vmatpush1.msra.mxu0 0.0
    %1121 = vmatprep.subr.mxu0 0.0
    %1122 = vmatpush1.msra.mxu0 0.0
    %1123 = vmatprep.subr.mxu0 0.0
    %1124 = vmatpush1.msra.mxu0 0.0
    %1125 = vmatprep.subr.mxu0 0.0
    %1126 = vmatpush1.msra.mxu0 0.0
    %1127 = vmatprep.subr.mxu0 0.0
    %1128 = vmatpush1.msra.mxu0 0.0
    %1129 = vmatprep.subr.mxu0 0.0
    %1130 = vmatpush1.msra.mxu0 0.0
    %1131 = vmatprep.subr.mxu0 0.0
    %1132 = vmatpush1.msra.mxu0 0.0
    %1133 = vmatprep.subr.mxu0 0.0
    %1134 = vmatpush1.msra.mxu0 0.0
    %1135 = vmatprep.subr.mxu0 0.0
    %1136 = vmatpush1.msra.mxu0 0.0
    %1137 = vmatprep.subr.mxu0 0.0
    %1138 = vmatpush1.msra.mxu0 0.0
    %1139 = vmatprep.subr.mxu0 0.0
    %1140 = vmatpush1.msra.mxu0 0.0
    %1141 = vmatprep.subr.mxu0 0.0
    %1142 = vmatpush1.msra.mxu0 0.0
    %1143 = vmatprep.subr.mxu0 0.0
    %1144 = vmatpush1.msra.mxu0 0.0
    %1145 = vmatprep.subr.mxu0 0.0
    %1146 = vmatpush1.msra.mxu0 0.0
    %1147 = vmatprep.subr.mxu0 0.0
    %1148 = vmatpush1.msra.mxu0 0.0
    %1149 = vmatprep.subr.mxu0 0.0
    %1150 = vmatpush1.msra.mxu0 0.0
    %1151 = vmatprep.subr.mxu0 0.0
    %1152 = vmatpush1.msra.mxu0 0.0
    %1153 = vmatprep.subr.mxu0 0.0
    %1154 = vmatpush1.msra.mxu0 0.0
    %1155 = vmatprep.subr.mxu0 0.0
    %1156 = vmatpush1.msra.mxu0 0.0
    %1157 = vmatprep.subr.mxu0 0.0
    %1158 = vmatpush1.msra.mxu0 0.0
    %1159 = vmatprep.subr.mxu0 0.0
    %1160 = vmatpush1.msra.mxu0 0.0
    %1161 = vmatprep.subr.mxu0 0.0
    %1162 = vmatpush1.msra.mxu0 0.0
    %1163 = vmatprep.subr.mxu0 0.0
    %1164 = vmatpush1.msra.mxu0 0.0
    %1165 = vmatprep.subr.mxu0 0.0
    %1166 = vmatpush1.msra.mxu0 0.0
    %1167 = vmatprep.subr.mxu0 0.0
    %1168 = vmatpush1.msra.mxu0 0.0
    %1169 = vmatprep.subr.mxu0 0.0
    %1170 = vmatpush1.msra.mxu0 0.0
    %1171 = vmatprep.subr.mxu0 0.0
    %1172 = vmatpush1.msra.mxu0 0.0
    %1173 = vmatprep.mubr.f32.mxu0 0.0
    %1174 = vmatmul.mubr.f32.gmra.mrb[0].mxu0 %v1107
    %v1175 = vpop.f32.mrb[0].mxu0
    %v1176 = vadd.f32 0.0, %v1175
    %v1177 = vpop.f32.mrb[0].mxu0
    %1178 = vdwg.mxu0
    %v1179 = vadd.f32 %v939, %v1176
    %1181 = vrot.lane.b32.xlu0 %v219, 64
    %v1182 = vpop.permute.xlu0 %1181
    %v1183 = vsel %vm226, %v219, 0
    %v1185 = vsel %vm226, %v1182, 0
    %1187 = vmatprep.subr.mxu0 0.0
    %1188 = vmatpush1.xpose.msra.mxu0 %v1185
    %1189 = vmatprep.subr.mxu0 0.0
    %1190 = vmatpush1.xpose.msra.mxu0 0.0
    %1191 = vmatprep.subr.mxu0 0.0
    %1192 = vmatpush1.xpose.msra.mxu0 0.0
    %1193 = vmatprep.subr.mxu0 0.0
    %1194 = vmatpush1.xpose.msra.mxu0 0.0
    %1195 = vmatprep.subr.mxu0 0.0
    %1196 = vmatpush1.xpose.msra.mxu0 0.0
    %1197 = vmatprep.subr.mxu0 0.0
    %1198 = vmatpush1.xpose.msra.mxu0 0.0
    %1199 = vmatprep.subr.mxu0 0.0
    %1200 = vmatpush1.xpose.msra.mxu0 0.0
    %1201 = vmatprep.subr.mxu0 0.0
    %1202 = vmatpush1.xpose.msra.mxu0 0.0
    %1203 = vmatprep.subr.mxu0 0.0
    %1204 = vmatpush1.xpose.msra.mxu0 0.0
    %1205 = vmatprep.subr.mxu0 0.0
    %1206 = vmatpush1.xpose.msra.mxu0 0.0
    %1207 = vmatprep.subr.mxu0 0.0
    %1208 = vmatpush1.xpose.msra.mxu0 0.0
    %1209 = vmatprep.subr.mxu0 0.0
    %1210 = vmatpush1.xpose.msra.mxu0 0.0
    %1211 = vmatprep.subr.mxu0 0.0
    %1212 = vmatpush1.xpose.msra.mxu0 0.0
    %1213 = vmatprep.subr.mxu0 0.0
    %1214 = vmatpush1.xpose.msra.mxu0 0.0
    %1215 = vmatprep.subr.mxu0 0.0
    %1216 = vmatpush1.xpose.msra.mxu0 0.0
    %1217 = vmatprep.subr.mxu0 0.0
    %1218 = vmatpush1.xpose.msra.mxu0 0.0
    %1219 = vmatprep.subr.mxu0 0.0
    %1220 = vmatpush1.xpose.msra.mxu0 0.0
    %1221 = vmatprep.subr.mxu0 0.0
    %1222 = vmatpush1.xpose.msra.mxu0 0.0
    %1223 = vmatprep.subr.mxu0 0.0
    %1224 = vmatpush1.xpose.msra.mxu0 0.0
    %1225 = vmatprep.subr.mxu0 0.0
    %1226 = vmatpush1.xpose.msra.mxu0 0.0
    %1227 = vmatprep.subr.mxu0 0.0
    %1228 = vmatpush1.xpose.msra.mxu0 0.0
    %1229 = vmatprep.subr.mxu0 0.0
    %1230 = vmatpush1.xpose.msra.mxu0 0.0
    %1231 = vmatprep.subr.mxu0 0.0
    %1232 = vmatpush1.xpose.msra.mxu0 0.0
    %1233 = vmatprep.subr.mxu0 0.0
    %1234 = vmatpush1.xpose.msra.mxu0 0.0
    %1235 = vmatprep.subr.mxu0 0.0
    %1236 = vmatpush1.xpose.msra.mxu0 0.0
    %1237 = vmatprep.subr.mxu0 0.0
    %1238 = vmatpush1.xpose.msra.mxu0 0.0
    %1239 = vmatprep.subr.mxu0 0.0
    %1240 = vmatpush1.xpose.msra.mxu0 0.0
    %1241 = vmatprep.subr.mxu0 0.0
    %1242 = vmatpush1.xpose.msra.mxu0 0.0
    %1243 = vmatprep.subr.mxu0 0.0
    %1244 = vmatpush1.xpose.msra.mxu0 0.0
    %1245 = vmatprep.subr.mxu0 0.0
    %1246 = vmatpush1.xpose.msra.mxu0 0.0
    %1247 = vmatprep.subr.mxu0 0.0
    %1248 = vmatpush1.xpose.msra.mxu0 0.0
    %1249 = vmatprep.subr.mxu0 0.0
    %1250 = vmatpush1.xpose.msra.mxu0 0.0
    %1251 = vmatprep.mubr.f32.mxu0 0.0
    %1252 = vmatmul.mubr.f32.gmra.mrb[0].mxu0 %v1183
    %v1253 = vpop.f32.mrb[0].mxu0
    %v1254 = vadd.f32 0.0, %v1253
    %v1255 = vpop.f32.mrb[0].mxu0
    %1256 = vdwg.mxu0
    %v1257 = vmul.f32 %v1254, 0.25
    %v1258 = vsel %vm302, %v1257, -inf
    %1259 = vmax.xlane.f32.xlu0 %v1258
    %v1260 = vpop.xlane.xlu0 %1259
    %v1261 = vsub.f32 %v1257, %v1260
    %v1262 = vmul.f32 %v1261, 1.442695
    %v1263 = vpow.pop %v1262
    %v1264 = vsel %vm302, %v1263, 0.0
    %1265 = vadd.xlane.f32.xlu0 %v1264
    %v1266 = vpop.xlane.xlu0 %1265
    %v1267 = vrcp.pop %v1266
    %v1268 = vmul.f32 %v1263, %v1267
    %v1270 = vsel %vm302, %v1268, 0
    %1272 = vmatprep.subr.mxu0 0.0
    %1273 = vmatpush1.msra.mxu0 %v221
    %1274 = vmatprep.subr.mxu0 0.0
    %1275 = vmatpush1.msra.mxu0 0.0
    %1276 = vmatprep.subr.mxu0 0.0
    %1277 = vmatpush1.msra.mxu0 0.0
    %1278 = vmatprep.subr.mxu0 0.0
    %1279 = vmatpush1.msra.mxu0 0.0
    %1280 = vmatprep.subr.mxu0 0.0
    %1281 = vmatpush1.msra.mxu0 0.0
    %1282 = vmatprep.subr.mxu0 0.0
    %1283 = vmatpush1.msra.mxu0 0.0
    %1284 = vmatprep.subr.mxu0 0.0
    %1285 = vmatpush1.msra.mxu0 0.0
    %1286 = vmatprep.subr.mxu0 0.0
    %1287 = vmatpush1.msra.mxu0 0.0
    %1288 = vmatprep.subr.mxu0 0.0
    %1289 = vmatpush1.msra.mxu0 0.0
    %1290 = vmatprep.subr.mxu0 0.0
    %1291 = vmatpush1.msra.mxu0 0.0
    %1292 = vmatprep.subr.mxu0 0.0
    %1293 = vmatpush1.msra.mxu0 0.0
    %1294 = vmatprep.subr.mxu0 0.0
    %1295 = vmatpush1.msra.mxu0 0.0
    %1296 = vmatprep.subr.mxu0 0.0
    %1297 = vmatpush1.msra.mxu0 0.0
    %1298 = vmatprep.subr.mxu0 0.0
    %1299 = vmatpush1.msra.mxu0 0.0
    %1300 = vmatprep.subr.mxu0 0.0
    %1301 = vmatpush1.msra.mxu0 0.0
    %1302 = vmatprep.subr.mxu0 0.0
    %1303 = vmatpush1.msra.mxu0 0.0
    %1304 = vmatprep.subr.mxu0 0.0
    %1305 = vmatpush1.msra.mxu0 0.0
    %1306 = vmatprep.subr.mxu0 0.0
    %1307 = vmatpush1.msra.mxu0 0.0
    %1308 = vmatprep.subr.mxu0 0.0
    %1309 = vmatpush1.msra.mxu0 0.0
    %1310 = vmatprep.subr.mxu0 0.0
    %1311 = vmatpush1.msra.mxu0 0.0
    %1312 = vmatprep.subr.mxu0 0.0
    %1313 = vmatpush1.msra.mxu0 0.0
    %1314 = vmatprep.subr.mxu0 0.0
    %1315 = vmatpush1.msra.mxu0 0.0
    %1316 = vmatprep.subr.mxu0 0.0
    %1317 = vmatpush1.msra.mxu0 0.0
    %1318 = vmatprep.subr.mxu0 0.0
    %1319 = vmatpush1.msra.mxu0 0.0
    %1320 = vmatprep.subr.mxu0 0.0
    %1321 = vmatpush1.msra.mxu0 0.0
    %1322 = vmatprep.subr.mxu0 0.0
    %1323 = vmatpush1.msra.mxu0 0.0
    %1324 = vmatprep.subr.mxu0 0.0
    %1325 = vmatpush1.msra.mxu0 0.0
    %1326 = vmatprep.subr.mxu0 0.0
    %1327 = vmatpush1.msra.mxu0 0.0
    %1328 = vmatprep.subr.mxu0 0.0
    %1329 = vmatpush1.msra.mxu0 0.0
    %1330 = vmatprep.subr.mxu0 0.0
    %1331 = vmatpush1.msra.mxu0 0.0
    %1332 = vmatprep.subr.mxu0 0.0
    %1333 = vmatpush1.msra.mxu0 0.0
    %1334 = vmatprep.subr.mxu0 0.0
    %1335 = vmatpush1.msra.mxu0 0.0
    %1336 = vmatprep.mubr.f32.mxu0 0.0
    %1337 = vmatmul.mubr.f32.gmra.mrb[0].mxu0 %v1270
    %v1338 = vpop.f32.mrb[0].mxu0
    %v1339 = vadd.f32 0.0, %v1338
    %v1340 = vpop.f32.mrb[0].mxu0
    %1341 = vdwg.mxu0
    %1342 = vrot.lane.b32.xlu0 %v219, 112
    %v1343 = vpop.permute.xlu0 %1342
    %1344 = vrot.lane.b32.xlu0 %v219, 48
    %v1345 = vpop.permute.xlu0 %1344
    %v1346 = vsel %vm226, %v1343, 0
    %v1348 = vsel %vm226, %v1345, 0
    %1350 = vmatprep.subr.mxu0 0.0
    %1351 = vmatpush1.xpose.msra.mxu0 %v1348
    %1352 = vmatprep.subr.mxu0 0.0
    %1353 = vmatpush1.xpose.msra.mxu0 0.0
    %1354 = vmatprep.subr.mxu0 0.0
    %1355 = vmatpush1.xpose.msra.mxu0 0.0
    %1356 = vmatprep.subr.mxu0 0.0
    %1357 = vmatpush1.xpose.msra.mxu0 0.0
    %1358 = vmatprep.subr.mxu0 0.0
    %1359 = vmatpush1.xpose.msra.mxu0 0.0
    %1360 = vmatprep.subr.mxu0 0.0
    %1361 = vmatpush1.xpose.msra.mxu0 0.0
    %1362 = vmatprep.subr.mxu0 0.0
    %1363 = vmatpush1.xpose.msra.mxu0 0.0
    %1364 = vmatprep.subr.mxu0 0.0
    %1365 = vmatpush1.xpose.msra.mxu0 0.0
    %1366 = vmatprep.subr.mxu0 0.0
    %1367 = vmatpush1.xpose.msra.mxu0 0.0
    %1368 = vmatprep.subr.mxu0 0.0
    %1369 = vmatpush1.xpose.msra.mxu0 0.0
    %1370 = vmatprep.subr.mxu0 0.0
    %1371 = vmatpush1.xpose.msra.mxu0 0.0
    %1372 = vmatprep.subr.mxu0 0.0
    %1373 = vmatpush1.xpose.msra.mxu0 0.0
    %1374 = vmatprep.subr.mxu0 0.0
    %1375 = vmatpush1.xpose.msra.mxu0 0.0
    %1376 = vmatprep.subr.mxu0 0.0
    %1377 = vmatpush1.xpose.msra.mxu0 0.0
    %1378 = vmatprep.subr.mxu0 0.0
    %1379 = vmatpush1.xpose.msra.mxu0 0.0
    %1380 = vmatprep.subr.mxu0 0.0
    %1381 = vmatpush1.xpose.msra.mxu0 0.0
    %1382 = vmatprep.subr.mxu0 0.0
    %1383 = vmatpush1.xpose.msra.mxu0 0.0
    %1384 = vmatprep.subr.mxu0 0.0
    %1385 = vmatpush1.xpose.msra.mxu0 0.0
    %1386 = vmatprep.subr.mxu0 0.0
    %1387 = vmatpush1.xpose.msra.mxu0 0.0
    %1388 = vmatprep.subr.mxu0 0.0
    %1389 = vmatpush1.xpose.msra.mxu0 0.0
    %1390 = vmatprep.subr.mxu0 0.0
    %1391 = vmatpush1.xpose.msra.mxu0 0.0
    %1392 = vmatprep.subr.mxu0 0.0
    %1393 = vmatpush1.xpose.msra.mxu0 0.0
    %1394 = vmatprep.subr.mxu0 0.0
    %1395 = vmatpush1.xpose.msra.mxu0 0.0
    %1396 = vmatprep.subr.mxu0 0.0
    %1397 = vmatpush1.xpose.msra.mxu0 0.0
    %1398 = vmatprep.subr.mxu0 0.0
    %1399 = vmatpush1.xpose.msra.mxu0 0.0
    %1400 = vmatprep.subr.mxu0 0.0
    %1401 = vmatpush1.xpose.msra.mxu0 0.0
    %1402 = vmatprep.subr.mxu0 0.0
    %1403 = vmatpush1.xpose.msra.mxu0 0.0
    %1404 = vmatprep.subr.mxu0 0.0
    %1405 = vmatpush1.xpose.msra.mxu0 0.0
    %1406 = vmatprep.subr.mxu0 0.0
    %1407 = vmatpush1.xpose.msra.mxu0 0.0
    %1408 = vmatprep.subr.mxu0 0.0
    %1409 = vmatpush1.xpose.msra.mxu0 0.0
    %1410 = vmatprep.subr.mxu0 0.0
    %1411 = vmatpush1.xpose.msra.mxu0 0.0
    %1412 = vmatprep.subr.mxu0 0.0
    %1413 = vmatpush1.xpose.msra.mxu0 0.0
    %1414 = vmatprep.mubr.f32.mxu0 0.0
    %1415 = vmatmul.mubr.f32.gmra.mrb[0].mxu0 %v1346
    %v1416 = vpop.f32.mrb[0].mxu0
    %v1417 = vadd.f32 0.0, %v1416
    %v1418 = vpop.f32.mrb[0].mxu0
    %1419 = vdwg.mxu0
    %v1420 = vmul.f32 %v1417, 0.25
    %v1421 = vsel %vm302, %v1420, -inf
    %1422 = vmax.xlane.f32.xlu0 %v1421
    %v1423 = vpop.xlane.xlu0 %1422
    %v1424 = vsub.f32 %v1420, %v1423
    %v1425 = vmul.f32 %v1424, 1.442695
    %v1426 = vpow.pop %v1425
    %v1427 = vsel %vm302, %v1426, 0.0
    %1428 = vadd.xlane.f32.xlu0 %v1427
    %v1429 = vpop.xlane.xlu0 %1428
    %v1430 = vrcp.pop %v1429
    %v1431 = vmul.f32 %v1426, %v1430
    %1433 = vrot.lane.b32.xlu0 %v221, 112
    %v1434 = vpop.permute.xlu0 %1433
    %v1437 = vsel %vm302, %v1431, 0
    %1439 = vmatprep.subr.mxu0 0.0
    %1440 = vmatpush1.msra.mxu0 %v1434
    %1441 = vmatprep.subr.mxu0 0.0
    %1442 = vmatpush1.msra.mxu0 0.0
    %1443 = vmatprep.subr.mxu0 0.0
    %1444 = vmatpush1.msra.mxu0 0.0
    %1445 = vmatprep.subr.mxu0 0.0
    %1446 = vmatpush1.msra.mxu0 0.0
    %1447 = vmatprep.subr.mxu0 0.0
    %1448 = vmatpush1.msra.mxu0 0.0
    %1449 = vmatprep.subr.mxu0 0.0
    %1450 = vmatpush1.msra.mxu0 0.0
    %1451 = vmatprep.subr.mxu0 0.0
    %1452 = vmatpush1.msra.mxu0 0.0
    %1453 = vmatprep.subr.mxu0 0.0
    %1454 = vmatpush1.msra.mxu0 0.0
    %1455 = vmatprep.subr.mxu0 0.0
    %1456 = vmatpush1.msra.mxu0 0.0
    %1457 = vmatprep.subr.mxu0 0.0
    %1458 = vmatpush1.msra.mxu0 0.0
    %1459 = vmatprep.subr.mxu0 0.0
    %1460 = vmatpush1.msra.mxu0 0.0
    %1461 = vmatprep.subr.mxu0 0.0
    %1462 = vmatpush1.msra.mxu0 0.0
    %1463 = vmatprep.subr.mxu0 0.0
    %1464 = vmatpush1.msra.mxu0 0.0
    %1465 = vmatprep.subr.mxu0 0.0
    %1466 = vmatpush1.msra.mxu0 0.0
    %1467 = vmatprep.subr.mxu0 0.0
    %1468 = vmatpush1.msra.mxu0 0.0
    %1469 = vmatprep.subr.mxu0 0.0
    %1470 = vmatpush1.msra.mxu0 0.0
    %1471 = vmatprep.subr.mxu0 0.0
    %1472 = vmatpush1.msra.mxu0 0.0
    %1473 = vmatprep.subr.mxu0 0.0
    %1474 = vmatpush1.msra.mxu0 0.0
    %1475 = vmatprep.subr.mxu0 0.0
    %1476 = vmatpush1.msra.mxu0 0.0
    %1477 = vmatprep.subr.mxu0 0.0
    %1478 = vmatpush1.msra.mxu0 0.0
    %1479 = vmatprep.subr.mxu0 0.0
    %1480 = vmatpush1.msra.mxu0 0.0
    %1481 = vmatprep.subr.mxu0 0.0
    %1482 = vmatpush1.msra.mxu0 0.0
    %1483 = vmatprep.subr.mxu0 0.0
    %1484 = vmatpush1.msra.mxu0 0.0
    %1485 = vmatprep.subr.mxu0 0.0
    %1486 = vmatpush1.msra.mxu0 0.0
    %1487 = vmatprep.subr.mxu0 0.0
    %1488 = vmatpush1.msra.mxu0 0.0
    %1489 = vmatprep.subr.mxu0 0.0
    %1490 = vmatpush1.msra.mxu0 0.0
    %1491 = vmatprep.subr.mxu0 0.0
    %1492 = vmatpush1.msra.mxu0 0.0
    %1493 = vmatprep.subr.mxu0 0.0
    %1494 = vmatpush1.msra.mxu0 0.0
    %1495 = vmatprep.subr.mxu0 0.0
    %1496 = vmatpush1.msra.mxu0 0.0
    %1497 = vmatprep.subr.mxu0 0.0
    %1498 = vmatpush1.msra.mxu0 0.0
    %1499 = vmatprep.subr.mxu0 0.0
    %1500 = vmatpush1.msra.mxu0 0.0
    %1501 = vmatprep.subr.mxu0 0.0
    %1502 = vmatpush1.msra.mxu0 0.0
    %1503 = vmatprep.mubr.f32.mxu0 0.0
    %1504 = vmatmul.mubr.f32.gmra.mrb[0].mxu0 %v1437
    %v1505 = vpop.f32.mrb[0].mxu0
    %v1506 = vadd.f32 0.0, %v1505
    %v1507 = vpop.f32.mrb[0].mxu0
    %1508 = vdwg.mxu0
    %v1510 = vsel %vm226, %v1506, 0
    %1512 = vmatprep.subr.mxu0 0.0
    %1513 = vmatpush1.msra.mxu0 %v133
    %1514 = vmatprep.subr.mxu0 0.0
    %1515 = vmatpush1.msra.mxu0 %v134
    %1516 = vmatprep.subr.mxu0 0.0
    %1517 = vmatpush1.msra.mxu0 0.0
    %1518 = vmatprep.subr.mxu0 0.0
    %1519 = vmatpush1.msra.mxu0 0.0
    %1520 = vmatprep.subr.mxu0 0.0
    %1521 = vmatpush1.msra.mxu0 0.0
    %1522 = vmatprep.subr.mxu0 0.0
    %1523 = vmatpush1.msra.mxu0 0.0
    %1524 = vmatprep.subr.mxu0 0.0
    %1525 = vmatpush1.msra.mxu0 0.0
    %1526 = vmatprep.subr.mxu0 0.0
    %1527 = vmatpush1.msra.mxu0 0.0
    %1528 = vmatprep.subr.mxu0 0.0
    %1529 = vmatpush1.msra.mxu0 0.0
    %1530 = vmatprep.subr.mxu0 0.0
    %1531 = vmatpush1.msra.mxu0 0.0
    %1532 = vmatprep.subr.mxu0 0.0
    %1533 = vmatpush1.msra.mxu0 0.0
    %1534 = vmatprep.subr.mxu0 0.0
    %1535 = vmatpush1.msra.mxu0 0.0
    %1536 = vmatprep.subr.mxu0 0.0
    %1537 = vmatpush1.msra.mxu0 0.0
    %1538 = vmatprep.subr.mxu0 0.0
    %1539 = vmatpush1.msra.mxu0 0.0
    %1540 = vmatprep.subr.mxu0 0.0
    %1541 = vmatpush1.msra.mxu0 0.0
    %1542 = vmatprep.subr.mxu0 0.0
    %1543 = vmatpush1.msra.mxu0 0.0
    %1544 = vmatprep.subr.mxu0 0.0
    %1545 = vmatpush1.msra.mxu0 0.0
    %1546 = vmatprep.subr.mxu0 0.0
    %1547 = vmatpush1.msra.mxu0 0.0
    %1548 = vmatprep.subr.mxu0 0.0
    %1549 = vmatpush1.msra.mxu0 0.0
    %1550 = vmatprep.subr.mxu0 0.0
    %1551 = vmatpush1.msra.mxu0 0.0
    %1552 = vmatprep.subr.mxu0 0.0
    %1553 = vmatpush1.msra.mxu0 0.0
    %1554 = vmatprep.subr.mxu0 0.0
    %1555 = vmatpush1.msra.mxu0 0.0
    %1556 = vmatprep.subr.mxu0 0.0
    %1557 = vmatpush1.msra.mxu0 0.0
    %1558 = vmatprep.subr.mxu0 0.0
    %1559 = vmatpush1.msra.mxu0 0.0
    %1560 = vmatprep.subr.mxu0 0.0
    %1561 = vmatpush1.msra.mxu0 0.0
    %1562 = vmatprep.subr.mxu0 0.0
    %1563 = vmatpush1.msra.mxu0 0.0
    %1564 = vmatprep.subr.mxu0 0.0
    %1565 = vmatpush1.msra.mxu0 0.0
    %1566 = vmatprep.subr.mxu0 0.0
    %1567 = vmatpush1.msra.mxu0 0.0
    %1568 = vmatprep.subr.mxu0 0.0
    %1569 = vmatpush1.msra.mxu0 0.0
    %1570 = vmatprep.subr.mxu0 0.0
    %1571 = vmatpush1.msra.mxu0 0.0
    %1572 = vmatprep.subr.mxu0 0.0
    %1573 = vmatpush1.msra.mxu0 0.0
    %1574 = vmatprep.subr.mxu0 0.0
    %1575 = vmatpush1.msra.mxu0 0.0
    %1576 = vmatprep.mubr.f32.mxu0 0.0
    %1577 = vmatmul.mubr.f32.gmra.mrb[0].mxu0 %v1510
    %v1578 = vpop.f32.mrb[0].mxu0
    %v1579 = vadd.f32 0.0, %v1578
    %v1580 = vpop.f32.mrb[0].mxu0
    %1581 = vdwg.mxu0
    %v1583 = vsel %vm226, %v1339, 0
    %1585 = vmatprep.subr.mxu0 0.0
    %1586 = vmatpush1.msra.mxu0 %v131
    %1587 = vmatprep.subr.mxu0 0.0
    %1588 = vmatpush1.msra.mxu0 %v132
    %1589 = vmatprep.subr.mxu0 0.0
    %1590 = vmatpush1.msra.mxu0 0.0
    %1591 = vmatprep.subr.mxu0 0.0
    %1592 = vmatpush1.msra.mxu0 0.0
    %1593 = vmatprep.subr.mxu0 0.0
    %1594 = vmatpush1.msra.mxu0 0.0
    %1595 = vmatprep.subr.mxu0 0.0
    %1596 = vmatpush1.msra.mxu0 0.0
    %1597 = vmatprep.subr.mxu0 0.0
    %1598 = vmatpush1.msra.mxu0 0.0
    %1599 = vmatprep.subr.mxu0 0.0
    %1600 = vmatpush1.msra.mxu0 0.0
    %1601 = vmatprep.subr.mxu0 0.0
    %1602 = vmatpush1.msra.mxu0 0.0
    %1603 = vmatprep.subr.mxu0 0.0
    %1604 = vmatpush1.msra.mxu0 0.0
    %1605 = vmatprep.subr.mxu0 0.0
    %1606 = vmatpush1.msra.mxu0 0.0
    %1607 = vmatprep.subr.mxu0 0.0
    %1608 = vmatpush1.msra.mxu0 0.0
    %1609 = vmatprep.subr.mxu0 0.0
    %1610 = vmatpush1.msra.mxu0 0.0
    %1611 = vmatprep.subr.mxu0 0.0
    %1612 = vmatpush1.msra.mxu0 0.0
    %1613 = vmatprep.subr.mxu0 0.0
    %1614 = vmatpush1.msra.mxu0 0.0
    %1615 = vmatprep.subr.mxu0 0.0
    %1616 = vmatpush1.msra.mxu0 0.0
    %1617 = vmatprep.subr.mxu0 0.0
    %1618 = vmatpush1.msra.mxu0 0.0
    %1619 = vmatprep.subr.mxu0 0.0
    %1620 = vmatpush1.msra.mxu0 0.0
    %1621 = vmatprep.subr.mxu0 0.0
    %1622 = vmatpush1.msra.mxu0 0.0
    %1623 = vmatprep.subr.mxu0 0.0
    %1624 = vmatpush1.msra.mxu0 0.0
    %1625 = vmatprep.subr.mxu0 0.0
    %1626 = vmatpush1.msra.mxu0 0.0
    %1627 = vmatprep.subr.mxu0 0.0
    %1628 = vmatpush1.msra.mxu0 0.0
    %1629 = vmatprep.subr.mxu0 0.0
    %1630 = vmatpush1.msra.mxu0 0.0
    %1631 = vmatprep.subr.mxu0 0.0
    %1632 = vmatpush1.msra.mxu0 0.0
    %1633 = vmatprep.subr.mxu0 0.0
    %1634 = vmatpush1.msra.mxu0 0.0
    %1635 = vmatprep.subr.mxu0 0.0
    %1636 = vmatpush1.msra.mxu0 0.0
    %1637 = vmatprep.subr.mxu0 0.0
    %1638 = vmatpush1.msra.mxu0 0.0
    %1639 = vmatprep.subr.mxu0 0.0
    %1640 = vmatpush1.msra.mxu0 0.0
    %1641 = vmatprep.subr.mxu0 0.0
    %1642 = vmatpush1.msra.mxu0 0.0
    %1643 = vmatprep.subr.mxu0 0.0
    %1644 = vmatpush1.msra.mxu0 0.0
    %1645 = vmatprep.subr.mxu0 0.0
    %1646 = vmatpush1.msra.mxu0 0.0
    %1647 = vmatprep.subr.mxu0 0.0
    %1648 = vmatpush1.msra.mxu0 0.0
    %1649 = vmatprep.mubr.f32.mxu0 0.0
    %1650 = vmatmul.mubr.f32.gmra.mrb[0].mxu0 %v1583
    %v1651 = vpop.f32.mrb[0].mxu0
    %v1652 = vadd.f32 %v1579, %v1651
    %v1653 = vpop.f32.mrb[0].mxu0
    %1654 = vdwg.mxu0
    %1655 = vrot.lane.b32.xlu0 %v219, 96
    %v1656 = vpop.permute.xlu0 %1655
    %1657 = vrot.lane.b32.xlu0 %v219, 32
    %v1658 = vpop.permute.xlu0 %1657
    %v1659 = vsel %vm226, %v1656, 0
    %v1661 = vsel %vm226, %v1658, 0
    %1663 = vmatprep.subr.mxu0 0.0
    %1664 = vmatpush1.xpose.msra.mxu0 %v1661
    %1665 = vmatprep.subr.mxu0 0.0
    %1666 = vmatpush1.xpose.msra.mxu0 0.0
    %1667 = vmatprep.subr.mxu0 0.0
    %1668 = vmatpush1.xpose.msra.mxu0 0.0
    %1669 = vmatprep.subr.mxu0 0.0
    %1670 = vmatpush1.xpose.msra.mxu0 0.0
    %1671 = vmatprep.subr.mxu0 0.0
    %1672 = vmatpush1.xpose.msra.mxu0 0.0
    %1673 = vmatprep.subr.mxu0 0.0
    %1674 = vmatpush1.xpose.msra.mxu0 0.0
    %1675 = vmatprep.subr.mxu0 0.0
    %1676 = vmatpush1.xpose.msra.mxu0 0.0
    %1677 = vmatprep.subr.mxu0 0.0
    %1678 = vmatpush1.xpose.msra.mxu0 0.0
    %1679 = vmatprep.subr.mxu0 0.0
    %1680 = vmatpush1.xpose.msra.mxu0 0.0
    %1681 = vmatprep.subr.mxu0 0.0
    %1682 = vmatpush1.xpose.msra.mxu0 0.0
    %1683 = vmatprep.subr.mxu0 0.0
    %1684 = vmatpush1.xpose.msra.mxu0 0.0
    %1685 = vmatprep.subr.mxu0 0.0
    %1686 = vmatpush1.xpose.msra.mxu0 0.0
    %1687 = vmatprep.subr.mxu0 0.0
    %1688 = vmatpush1.xpose.msra.mxu0 0.0
    %1689 = vmatprep.subr.mxu0 0.0
    %1690 = vmatpush1.xpose.msra.mxu0 0.0
    %1691 = vmatprep.subr.mxu0 0.0
    %1692 = vmatpush1.xpose.msra.mxu0 0.0
    %1693 = vmatprep.subr.mxu0 0.0
    %1694 = vmatpush1.xpose.msra.mxu0 0.0
    %1695 = vmatprep.subr.mxu0 0.0
    %1696 = vmatpush1.xpose.msra.mxu0 0.0
    %1697 = vmatprep.subr.mxu0 0.0
    %1698 = vmatpush1.xpose.msra.mxu0 0.0
    %1699 = vmatprep.subr.mxu0 0.0
    %1700 = vmatpush1.xpose.msra.mxu0 0.0
    %1701 = vmatprep.subr.mxu0 0.0
    %1702 = vmatpush1.xpose.msra.mxu0 0.0
    %1703 = vmatprep.subr.mxu0 0.0
    %1704 = vmatpush1.xpose.msra.mxu0 0.0
    %1705 = vmatprep.subr.mxu0 0.0
    %1706 = vmatpush1.xpose.msra.mxu0 0.0
    %1707 = vmatprep.subr.mxu0 0.0
    %1708 = vmatpush1.xpose.msra.mxu0 0.0
    %1709 = vmatprep.subr.mxu0 0.0
    %1710 = vmatpush1.xpose.msra.mxu0 0.0
    %1711 = vmatprep.subr.mxu0 0.0
    %1712 = vmatpush1.xpose.msra.mxu0 0.0
    %1713 = vmatprep.subr.mxu0 0.0
    %1714 = vmatpush1.xpose.msra.mxu0 0.0
    %1715 = vmatprep.subr.mxu0 0.0
    %1716 = vmatpush1.xpose.msra.mxu0 0.0
    %1717 = vmatprep.subr.mxu0 0.0
    %1718 = vmatpush1.xpose.msra.mxu0 0.0
    %1719 = vmatprep.subr.mxu0 0.0
    %1720 = vmatpush1.xpose.msra.mxu0 0.0
    %1721 = vmatprep.subr.mxu0 0.0
    %1722 = vmatpush1.xpose.msra.mxu0 0.0
    %1723 = vmatprep.subr.mxu0 0.0
    %1724 = vmatpush1.xpose.msra.mxu0 0.0
    %1725 = vmatprep.subr.mxu0 0.0
    %1726 = vmatpush1.xpose.msra.mxu0 0.0
    %1727 = vmatprep.mubr.f32.mxu0 0.0
    %1728 = vmatmul.mubr.f32.gmra.mrb[0].mxu0 %v1659
    %v1729 = vpop.f32.mrb[0].mxu0
    %v1730 = vadd.f32 0.0, %v1729
    %v1731 = vpop.f32.mrb[0].mxu0
    %1732 = vdwg.mxu0
    %v1733 = vmul.f32 %v1730, 0.25
    %v1734 = vsel %vm302, %v1733, -inf
    %1735 = vmax.xlane.f32.xlu0 %v1734
    %v1736 = vpop.xlane.xlu0 %1735
    %v1737 = vsub.f32 %v1733, %v1736
    %v1738 = vmul.f32 %v1737, 1.442695
    %v1739 = vpow.pop %v1738
    %v1740 = vsel %vm302, %v1739, 0.0
    %1741 = vadd.xlane.f32.xlu0 %v1740
    %v1742 = vpop.xlane.xlu0 %1741
    %v1743 = vrcp.pop %v1742
    %v1744 = vmul.f32 %v1739, %v1743
    %1745 = vrot.lane.b32.xlu0 %v221, 96
    %v1746 = vpop.permute.xlu0 %1745
    %v1749 = vsel %vm302, %v1744, 0
    %1751 = vmatprep.subr.mxu0 0.0
    %1752 = vmatpush1.msra.mxu0 %v1746
    %1753 = vmatprep.subr.mxu0 0.0
    %1754 = vmatpush1.msra.mxu0 0.0
    %1755 = vmatprep.subr.mxu0 0.0
    %1756 = vmatpush1.msra.mxu0 0.0
    %1757 = vmatprep.subr.mxu0 0.0
    %1758 = vmatpush1.msra.mxu0 0.0
    %1759 = vmatprep.subr.mxu0 0.0
    %1760 = vmatpush1.msra.mxu0 0.0
    %1761 = vmatprep.subr.mxu0 0.0
    %1762 = vmatpush1.msra.mxu0 0.0
    %1763 = vmatprep.subr.mxu0 0.0
    %1764 = vmatpush1.msra.mxu0 0.0
    %1765 = vmatprep.subr.mxu0 0.0
    %1766 = vmatpush1.msra.mxu0 0.0
    %1767 = vmatprep.subr.mxu0 0.0
    %1768 = vmatpush1.msra.mxu0 0.0
    %1769 = vmatprep.subr.mxu0 0.0
    %1770 = vmatpush1.msra.mxu0 0.0
    %1771 = vmatprep.subr.mxu0 0.0
    %1772 = vmatpush1.msra.mxu0 0.0
    %1773 = vmatprep.subr.mxu0 0.0
    %1774 = vmatpush1.msra.mxu0 0.0
    %1775 = vmatprep.subr.mxu0 0.0
    %1776 = vmatpush1.msra.mxu0 0.0
    %1777 = vmatprep.subr.mxu0 0.0
    %1778 = vmatpush1.msra.mxu0 0.0
    %1779 = vmatprep.subr.mxu0 0.0
    %1780 = vmatpush1.msra.mxu0 0.0
    %1781 = vmatprep.subr.mxu0 0.0
    %1782 = vmatpush1.msra.mxu0 0.0
    %1783 = vmatprep.subr.mxu0 0.0
    %1784 = vmatpush1.msra.mxu0 0.0
    %1785 = vmatprep.subr.mxu0 0.0
    %1786 = vmatpush1.msra.mxu0 0.0
    %1787 = vmatprep.subr.mxu0 0.0
    %1788 = vmatpush1.msra.mxu0 0.0
    %1789 = vmatprep.subr.mxu0 0.0
    %1790 = vmatpush1.msra.mxu0 0.0
    %1791 = vmatprep.subr.mxu0 0.0
    %1792 = vmatpush1.msra.mxu0 0.0
    %1793 = vmatprep.subr.mxu0 0.0
    %1794 = vmatpush1.msra.mxu0 0.0
    %1795 = vmatprep.subr.mxu0 0.0
    %1796 = vmatpush1.msra.mxu0 0.0
    %1797 = vmatprep.subr.mxu0 0.0
    %1798 = vmatpush1.msra.mxu0 0.0
    %1799 = vmatprep.subr.mxu0 0.0
    %1800 = vmatpush1.msra.mxu0 0.0
    %1801 = vmatprep.subr.mxu0 0.0
    %1802 = vmatpush1.msra.mxu0 0.0
    %1803 = vmatprep.subr.mxu0 0.0
    %1804 = vmatpush1.msra.mxu0 0.0
    %1805 = vmatprep.subr.mxu0 0.0
    %1806 = vmatpush1.msra.mxu0 0.0
    %1807 = vmatprep.subr.mxu0 0.0
    %1808 = vmatpush1.msra.mxu0 0.0
    %1809 = vmatprep.subr.mxu0 0.0
    %1810 = vmatpush1.msra.mxu0 0.0
    %1811 = vmatprep.subr.mxu0 0.0
    %1812 = vmatpush1.msra.mxu0 0.0
    %1813 = vmatprep.subr.mxu0 0.0
    %1814 = vmatpush1.msra.mxu0 0.0
    %1815 = vmatprep.mubr.f32.mxu0 0.0
    %1816 = vmatmul.mubr.f32.gmra.mrb[0].mxu0 %v1749
    %v1817 = vpop.f32.mrb[0].mxu0
    %v1818 = vadd.f32 0.0, %v1817
    %v1819 = vpop.f32.mrb[0].mxu0
    %1820 = vdwg.mxu0
    %v1822 = vsel %vm226, %v1818, 0
    %1824 = vmatprep.subr.mxu0 0.0
    %1825 = vmatpush1.msra.mxu0 %v135
    %1826 = vmatprep.subr.mxu0 0.0
    %1827 = vmatpush1.msra.mxu0 %v136
    %1828 = vmatprep.subr.mxu0 0.0
    %1829 = vmatpush1.msra.mxu0 0.0
    %1830 = vmatprep.subr.mxu0 0.0
    %1831 = vmatpush1.msra.mxu0 0.0
    %1832 = vmatprep.subr.mxu0 0.0
    %1833 = vmatpush1.msra.mxu0 0.0
    %1834 = vmatprep.subr.mxu0 0.0
    %1835 = vmatpush1.msra.mxu0 0.0
    %1836 = vmatprep.subr.mxu0 0.0
    %1837 = vmatpush1.msra.mxu0 0.0
    %1838 = vmatprep.subr.mxu0 0.0
    %1839 = vmatpush1.msra.mxu0 0.0
    %1840 = vmatprep.subr.mxu0 0.0
    %1841 = vmatpush1.msra.mxu0 0.0
    %1842 = vmatprep.subr.mxu0 0.0
    %1843 = vmatpush1.msra.mxu0 0.0
    %1844 = vmatprep.subr.mxu0 0.0
    %1845 = vmatpush1.msra.mxu0 0.0
    %1846 = vmatprep.subr.mxu0 0.0
    %1847 = vmatpush1.msra.mxu0 0.0
    %1848 = vmatprep.subr.mxu0 0.0
    %1849 = vmatpush1.msra.mxu0 0.0
    %1850 = vmatprep.subr.mxu0 0.0
    %1851 = vmatpush1.msra.mxu0 0.0
    %1852 = vmatprep.subr.mxu0 0.0
    %1853 = vmatpush1.msra.mxu0 0.0
    %1854 = vmatprep.subr.mxu0 0.0
    %1855 = vmatpush1.msra.mxu0 0.0
    %1856 = vmatprep.subr.mxu0 0.0
    %1857 = vmatpush1.msra.mxu0 0.0
    %1858 = vmatprep.subr.mxu0 0.0
    %1859 = vmatpush1.msra.mxu0 0.0
    %1860 = vmatprep.subr.mxu0 0.0
    %1861 = vmatpush1.msra.mxu0 0.0
    %1862 = vmatprep.subr.mxu0 0.0
    %1863 = vmatpush1.msra.mxu0 0.0
    %1864 = vmatprep.subr.mxu0 0.0
    %1865 = vmatpush1.msra.mxu0 0.0
    %1866 = vmatprep.subr.mxu0 0.0
    %1867 = vmatpush1.msra.mxu0 0.0
    %1868 = vmatprep.subr.mxu0 0.0
    %1869 = vmatpush1.msra.mxu0 0.0
    %1870 = vmatprep.subr.mxu0 0.0
    %1871 = vmatpush1.msra.mxu0 0.0
    %1872 = vmatprep.subr.mxu0 0.0
    %1873 = vmatpush1.msra.mxu0 0.0
    %1874 = vmatprep.subr.mxu0 0.0
    %1875 = vmatpush1.msra.mxu0 0.0
    %1876 = vmatprep.subr.mxu0 0.0
    %1877 = vmatpush1.msra.mxu0 0.0
    %1878 = vmatprep.subr.mxu0 0.0
    %1879 = vmatpush1.msra.mxu0 0.0
    %1880 = vmatprep.subr.mxu0 0.0
    %1881 = vmatpush1.msra.mxu0 0.0
    %1882 = vmatprep.subr.mxu0 0.0
    %1883 = vmatpush1.msra.mxu0 0.0
    %1884 = vmatprep.subr.mxu0 0.0
    %1885 = vmatpush1.msra.mxu0 0.0
    %1886 = vmatprep.subr.mxu0 0.0
    %1887 = vmatpush1.msra.mxu0 0.0
    %1888 = vmatprep.mubr.f32.mxu0 0.0
    %1889 = vmatmul.mubr.f32.gmra.mrb[0].mxu0 %v1822
    %v1890 = vpop.f32.mrb[0].mxu0
    %v1891 = vadd.f32 0.0, %v1890
    %v1892 = vpop.f32.mrb[0].mxu0
    %1893 = vdwg.mxu0
    %v1894 = vadd.f32 %v1652, %v1891
    %1895 = vrot.lane.b32.xlu0 %v219, 80
    %v1896 = vpop.permute.xlu0 %1895
    %1897 = vrot.lane.b32.xlu0 %v219, 16
    %v1898 = vpop.permute.xlu0 %1897
    %v1899 = vsel %vm226, %v1896, 0
    %v1901 = vsel %vm226, %v1898, 0
    %1903 = vmatprep.subr.mxu0 0.0
    %1904 = vmatpush1.xpose.msra.mxu0 %v1901
    %1905 = vmatprep.subr.mxu0 0.0
    %1906 = vmatpush1.xpose.msra.mxu0 0.0
    %1907 = vmatprep.subr.mxu0 0.0
    %1908 = vmatpush1.xpose.msra.mxu0 0.0
    %1909 = vmatprep.subr.mxu0 0.0
    %1910 = vmatpush1.xpose.msra.mxu0 0.0
    %1911 = vmatprep.subr.mxu0 0.0
    %1912 = vmatpush1.xpose.msra.mxu0 0.0
    %1913 = vmatprep.subr.mxu0 0.0
    %1914 = vmatpush1.xpose.msra.mxu0 0.0
    %1915 = vmatprep.subr.mxu0 0.0
    %1916 = vmatpush1.xpose.msra.mxu0 0.0
    %1917 = vmatprep.subr.mxu0 0.0
    %1918 = vmatpush1.xpose.msra.mxu0 0.0
    %1919 = vmatprep.subr.mxu0 0.0
    %1920 = vmatpush1.xpose.msra.mxu0 0.0
    %1921 = vmatprep.subr.mxu0 0.0
    %1922 = vmatpush1.xpose.msra.mxu0 0.0
    %1923 = vmatprep.subr.mxu0 0.0
    %1924 = vmatpush1.xpose.msra.mxu0 0.0
    %1925 = vmatprep.subr.mxu0 0.0
    %1926 = vmatpush1.xpose.msra.mxu0 0.0
    %1927 = vmatprep.subr.mxu0 0.0
    %1928 = vmatpush1.xpose.msra.mxu0 0.0
    %1929 = vmatprep.subr.mxu0 0.0
    %1930 = vmatpush1.xpose.msra.mxu0 0.0
    %1931 = vmatprep.subr.mxu0 0.0
    %1932 = vmatpush1.xpose.msra.mxu0 0.0
    %1933 = vmatprep.subr.mxu0 0.0
    %1934 = vmatpush1.xpose.msra.mxu0 0.0
    %1935 = vmatprep.subr.mxu0 0.0
    %1936 = vmatpush1.xpose.msra.mxu0 0.0
    %1937 = vmatprep.subr.mxu0 0.0
    %1938 = vmatpush1.xpose.msra.mxu0 0.0
    %1939 = vmatprep.subr.mxu0 0.0
    %1940 = vmatpush1.xpose.msra.mxu0 0.0
    %1941 = vmatprep.subr.mxu0 0.0
    %1942 = vmatpush1.xpose.msra.mxu0 0.0
    %1943 = vmatprep.subr.mxu0 0.0
    %1944 = vmatpush1.xpose.msra.mxu0 0.0
    %1945 = vmatprep.subr.mxu0 0.0
    %1946 = vmatpush1.xpose.msra.mxu0 0.0
    %1947 = vmatprep.subr.mxu0 0.0
    %1948 = vmatpush1.xpose.msra.mxu0 0.0
    %1949 = vmatprep.subr.mxu0 0.0
    %1950 = vmatpush1.xpose.msra.mxu0 0.0
    %1951 = vmatprep.subr.mxu0 0.0
    %1952 = vmatpush1.xpose.msra.mxu0 0.0
    %1953 = vmatprep.subr.mxu0 0.0
    %1954 = vmatpush1.xpose.msra.mxu0 0.0
    %1955 = vmatprep.subr.mxu0 0.0
    %1956 = vmatpush1.xpose.msra.mxu0 0.0
    %1957 = vmatprep.subr.mxu0 0.0
    %1958 = vmatpush1.xpose.msra.mxu0 0.0
    %1959 = vmatprep.subr.mxu0 0.0
    %1960 = vmatpush1.xpose.msra.mxu0 0.0
    %1961 = vmatprep.subr.mxu0 0.0
    %1962 = vmatpush1.xpose.msra.mxu0 0.0
    %1963 = vmatprep.subr.mxu0 0.0
    %1964 = vmatpush1.xpose.msra.mxu0 0.0
    %1965 = vmatprep.subr.mxu0 0.0
    %1966 = vmatpush1.xpose.msra.mxu0 0.0
    %1967 = vmatprep.mubr.f32.mxu0 0.0
    %1968 = vmatmul.mubr.f32.gmra.mrb[0].mxu0 %v1899
    %v1969 = vpop.f32.mrb[0].mxu0
    %v1970 = vadd.f32 0.0, %v1969
    %v1971 = vpop.f32.mrb[0].mxu0
    %1972 = vdwg.mxu0
    %v1973 = vmul.f32 %v1970, 0.25
    %v1974 = vsel %vm302, %v1973, -inf
    %1975 = vmax.xlane.f32.xlu0 %v1974
    %v1976 = vpop.xlane.xlu0 %1975
    %v1977 = vsub.f32 %v1973, %v1976
    %v1978 = vmul.f32 %v1977, 1.442695
    %v1979 = vpow.pop %v1978
    %v1980 = vsel %vm302, %v1979, 0.0
    %1981 = vadd.xlane.f32.xlu0 %v1980
    %v1982 = vpop.xlane.xlu0 %1981
    %v1983 = vrcp.pop %v1982
    %v1984 = vmul.f32 %v1979, %v1983
    %1985 = vrot.lane.b32.xlu0 %v221, 80
    %v1986 = vpop.permute.xlu0 %1985
    %v1989 = vsel %vm302, %v1984, 0
    %1991 = vmatprep.subr.mxu0 0.0
    %1992 = vmatpush1.msra.mxu0 %v1986
    %1993 = vmatprep.subr.mxu0 0.0
    %1994 = vmatpush1.msra.mxu0 0.0
    %1995 = vmatprep.subr.mxu0 0.0
    %1996 = vmatpush1.msra.mxu0 0.0
    %1997 = vmatprep.subr.mxu0 0.0
    %1998 = vmatpush1.msra.mxu0 0.0
    %1999 = vmatprep.subr.mxu0 0.0
    %2000 = vmatpush1.msra.mxu0 0.0
    %2001 = vmatprep.subr.mxu0 0.0
    %2002 = vmatpush1.msra.mxu0 0.0
    %2003 = vmatprep.subr.mxu0 0.0
    %2004 = vmatpush1.msra.mxu0 0.0
    %2005 = vmatprep.subr.mxu0 0.0
    %2006 = vmatpush1.msra.mxu0 0.0
    %2007 = vmatprep.subr.mxu0 0.0
    %2008 = vmatpush1.msra.mxu0 0.0
    %2009 = vmatprep.subr.mxu0 0.0
    %2010 = vmatpush1.msra.mxu0 0.0
    %2011 = vmatprep.subr.mxu0 0.0
    %2012 = vmatpush1.msra.mxu0 0.0
    %2013 = vmatprep.subr.mxu0 0.0
    %2014 = vmatpush1.msra.mxu0 0.0
    %2015 = vmatprep.subr.mxu0 0.0
    %2016 = vmatpush1.msra.mxu0 0.0
    %2017 = vmatprep.subr.mxu0 0.0
    %2018 = vmatpush1.msra.mxu0 0.0
    %2019 = vmatprep.subr.mxu0 0.0
    %2020 = vmatpush1.msra.mxu0 0.0
    %2021 = vmatprep.subr.mxu0 0.0
    %2022 = vmatpush1.msra.mxu0 0.0
    %2023 = vmatprep.subr.mxu0 0.0
    %2024 = vmatpush1.msra.mxu0 0.0
    %2025 = vmatprep.subr.mxu0 0.0
    %2026 = vmatpush1.msra.mxu0 0.0
    %2027 = vmatprep.subr.mxu0 0.0
    %2028 = vmatpush1.msra.mxu0 0.0
    %2029 = vmatprep.subr.mxu0 0.0
    %2030 = vmatpush1.msra.mxu0 0.0
    %2031 = vmatprep.subr.mxu0 0.0
    %2032 = vmatpush1.msra.mxu0 0.0
    %2033 = vmatprep.subr.mxu0 0.0
    %2034 = vmatpush1.msra.mxu0 0.0
    %2035 = vmatprep.subr.mxu0 0.0
    %2036 = vmatpush1.msra.mxu0 0.0
    %2037 = vmatprep.subr.mxu0 0.0
    %2038 = vmatpush1.msra.mxu0 0.0
    %2039 = vmatprep.subr.mxu0 0.0
    %2040 = vmatpush1.msra.mxu0 0.0
    %2041 = vmatprep.subr.mxu0 0.0
    %2042 = vmatpush1.msra.mxu0 0.0
    %2043 = vmatprep.subr.mxu0 0.0
    %2044 = vmatpush1.msra.mxu0 0.0
    %2045 = vmatprep.subr.mxu0 0.0
    %2046 = vmatpush1.msra.mxu0 0.0
    %2047 = vmatprep.subr.mxu0 0.0
    %2048 = vmatpush1.msra.mxu0 0.0
    %2049 = vmatprep.subr.mxu0 0.0
    %2050 = vmatpush1.msra.mxu0 0.0
    %2051 = vmatprep.subr.mxu0 0.0
    %2052 = vmatpush1.msra.mxu0 0.0
    %2053 = vmatprep.subr.mxu0 0.0
    %2054 = vmatpush1.msra.mxu0 0.0
    %2055 = vmatprep.mubr.f32.mxu0 0.0
    %2056 = vmatmul.mubr.f32.gmra.mrb[0].mxu0 %v1989
    %v2057 = vpop.f32.mrb[0].mxu0
    %v2058 = vadd.f32 0.0, %v2057
    %v2059 = vpop.f32.mrb[0].mxu0
    %2060 = vdwg.mxu0
    %v2062 = vsel %vm226, %v2058, 0
    %2064 = vmatprep.subr.mxu0 0.0
    %2065 = vmatpush1.msra.mxu0 %v137
    %2066 = vmatprep.subr.mxu0 0.0
    %2067 = vmatpush1.msra.mxu0 %v138
    %2068 = vmatprep.subr.mxu0 0.0
    %2069 = vmatpush1.msra.mxu0 0.0
    %2070 = vmatprep.subr.mxu0 0.0
    %2071 = vmatpush1.msra.mxu0 0.0
    %2072 = vmatprep.subr.mxu0 0.0
    %2073 = vmatpush1.msra.mxu0 0.0
    %2074 = vmatprep.subr.mxu0 0.0
    %2075 = vmatpush1.msra.mxu0 0.0
    %2076 = vmatprep.subr.mxu0 0.0
    %2077 = vmatpush1.msra.mxu0 0.0
    %2078 = vmatprep.subr.mxu0 0.0
    %2079 = vmatpush1.msra.mxu0 0.0
    %2080 = vmatprep.subr.mxu0 0.0
    %2081 = vmatpush1.msra.mxu0 0.0
    %2082 = vmatprep.subr.mxu0 0.0
    %2083 = vmatpush1.msra.mxu0 0.0
    %2084 = vmatprep.subr.mxu0 0.0
    %2085 = vmatpush1.msra.mxu0 0.0
    %2086 = vmatprep.subr.mxu0 0.0
    %2087 = vmatpush1.msra.mxu0 0.0
    %2088 = vmatprep.subr.mxu0 0.0
    %2089 = vmatpush1.msra.mxu0 0.0
    %2090 = vmatprep.subr.mxu0 0.0
    %2091 = vmatpush1.msra.mxu0 0.0
    %2092 = vmatprep.subr.mxu0 0.0
    %2093 = vmatpush1.msra.mxu0 0.0
    %2094 = vmatprep.subr.mxu0 0.0
    %2095 = vmatpush1.msra.mxu0 0.0
    %2096 = vmatprep.subr.mxu0 0.0
    %2097 = vmatpush1.msra.mxu0 0.0
    %2098 = vmatprep.subr.mxu0 0.0
    %2099 = vmatpush1.msra.mxu0 0.0
    %2100 = vmatprep.subr.mxu0 0.0
    %2101 = vmatpush1.msra.mxu0 0.0
    %2102 = vmatprep.subr.mxu0 0.0
    %2103 = vmatpush1.msra.mxu0 0.0
    %2104 = vmatprep.subr.mxu0 0.0
    %2105 = vmatpush1.msra.mxu0 0.0
    %2106 = vmatprep.subr.mxu0 0.0
    %2107 = vmatpush1.msra.mxu0 0.0
    %2108 = vmatprep.subr.mxu0 0.0
    %2109 = vmatpush1.msra.mxu0 0.0
    %2110 = vmatprep.subr.mxu0 0.0
    %2111 = vmatpush1.msra.mxu0 0.0
    %2112 = vmatprep.subr.mxu0 0.0
    %2113 = vmatpush1.msra.mxu0 0.0
    %2114 = vmatprep.subr.mxu0 0.0
    %2115 = vmatpush1.msra.mxu0 0.0
    %2116 = vmatprep.subr.mxu0 0.0
    %2117 = vmatpush1.msra.mxu0 0.0
    %2118 = vmatprep.subr.mxu0 0.0
    %2119 = vmatpush1.msra.mxu0 0.0
    %2120 = vmatprep.subr.mxu0 0.0
    %2121 = vmatpush1.msra.mxu0 0.0
    %2122 = vmatprep.subr.mxu0 0.0
    %2123 = vmatpush1.msra.mxu0 0.0
    %2124 = vmatprep.subr.mxu0 0.0
    %2125 = vmatpush1.msra.mxu0 0.0
    %2126 = vmatprep.subr.mxu0 0.0
    %2127 = vmatpush1.msra.mxu0 0.0
    %2128 = vmatprep.mubr.f32.mxu0 0.0
    %2129 = vmatmul.mubr.f32.gmra.mrb[0].mxu0 %v2062
    %v2130 = vpop.f32.mrb[0].mxu0
    %v2131 = vadd.f32 0.0, %v2130
    %v2132 = vpop.f32.mrb[0].mxu0
    %2133 = vdwg.mxu0
    %v2134 = vadd.f32 %v1894, %v2131
    %v2135 = vadd.f32 %v115, %v1179
    %v2136 = vadd.f32 %v120, %v2134
    %v2137 = vsel %vm139, %v2135, 0.0
    %v2138 = vsel %vm139, %v2136, 0.0
    %v2139 = vadd.f32 %v2137, %v2138
    %v2140 = vrot.slane %v2139, 4
    %v2141 = vadd.f32 %v2139, %v2140
    %v2142 = vrot.slane %v2141, 2
    %v2143 = vadd.f32 %v2141, %v2142
    %v2144 = vrot.slane %v2143, 1
    %v2145 = vadd.f32 %v2143, %v2144
    %v2146 = vrcp.pop 16.0
    %v2147 = vmul.f32 %v2145, %v2146
    %v2148 = vsub.f32 %v2135, %v2147
    %v2149 = vsub.f32 %v2136, %v2147
    %v2150 = vmul.f32 %v2148, %v2148
    %v2151 = vmul.f32 %v2149, %v2149
    %v2152 = vsel %vm139, %v2150, 0.0
    %v2153 = vsel %vm139, %v2151, 0.0
    %v2154 = vadd.f32 %v2152, %v2153
    %v2155 = vrot.slane %v2154, 4
    %v2156 = vadd.f32 %v2154, %v2155
    %v2157 = vrot.slane %v2156, 2
    %v2158 = vadd.f32 %v2156, %v2157
    %v2159 = vrot.slane %v2158, 1
    %v2160 = vadd.f32 %v2158, %v2159
    %v2161 = vmul.f32 %v2160, %v2146
    %v2162 = vadd.f32 %v2161, 1e-05
    %v2163 = vrsqrt.pop %v2162
    %v2164 = vmul.f32 %v2148, %v2163
    %v2165 = vmul.f32 %v2149, %v2163
    %v2166 = vld [vmem:[%s5] sm:$0x1]
    %v2168 = vlaneseq
    %v2169 = vshrl.u32 %v2168, 7
    %v2170 = vsub.s32 0, %v2169
    %v2171 = vrot.slane %v2166, %v2170
    %v2173 = vmul.f32 %v2164, %v2171
    %v2174 = vmul.f32 %v2165, %v2171
    %v2175 = vld [vmem:[%s6] sm:$0x1]
    %v2177 = vlaneseq
    %v2178 = vshrl.u32 %v2177, 7
    %v2179 = vsub.s32 0, %v2178
    %v2180 = vrot.slane %v2175, %v2179
    %v2182 = vadd.f32 %v2173, %v2180
    %v2183 = vadd.f32 %v2174, %v2180
    %s2184 = scalar_lea.vmem %s3, 64
    %v2185 = vld [vmem:[%s2184] sm:$0xff]
    %v2186 = vld [vmem:[%s2184 + $0x8] sm:$0xff]
    %v2187 = vld [vmem:[%s2184 + $0x10] sm:$0xff]
    %v2188 = vld [vmem:[%s2184 + $0x18] sm:$0xff]
    %v2189 = vld [vmem:[%s2184 + $0x20] sm:$0xff]
    %v2190 = vld [vmem:[%s2184 + $0x28] sm:$0xff]
    %v2191 = vld [vmem:[%s2184 + $0x30] sm:$0xff]
    %v2192 = vld [vmem:[%s2184 + $0x38] sm:$0xff]
    %s2193 = scalar_lea.vmem %s4, 64
    %v2194 = vld [vmem:[%s2193] sm:$0xff]
    %v2195 = vld [vmem:[%s2193 + $0x8] sm:$0xff]
    %v2196 = vld [vmem:[%s2193 + $0x10] sm:$0xff]
    %v2197 = vld [vmem:[%s2193 + $0x18] sm:$0xff]
    %v2198 = vld [vmem:[%s2193 + $0x20] sm:$0xff]
    %v2199 = vld [vmem:[%s2193 + $0x28] sm:$0xff]
    %v2200 = vld [vmem:[%s2193 + $0x30] sm:$0xff]
    %v2201 = vld [vmem:[%s2193 + $0x38] sm:$0xff]
    %v2203 = vsel %vm139, %v2182, 0
    %v2206 = vsel %vm139, %v2183, 0
    %2208 = vmatprep.subr.mxu0 %v2186
    %2209 = vmatpush1.msra.mxu0 %v2185
    %2210 = vmatprep.subr.mxu0 %v2188
    %2211 = vmatpush1.msra.mxu0 %v2187
    %2212 = vmatprep.subr.mxu0 %v2190
    %2213 = vmatpush1.msra.mxu0 %v2189
    %2214 = vmatprep.subr.mxu0 %v2192
    %2215 = vmatpush1.msra.mxu0 %v2191
    %2216 = vmatprep.subr.mxu0 0.0
    %2217 = vmatpush1.msra.mxu0 0.0
    %2218 = vmatprep.subr.mxu0 0.0
    %2219 = vmatpush1.msra.mxu0 0.0
    %2220 = vmatprep.subr.mxu0 0.0
    %2221 = vmatpush1.msra.mxu0 0.0
    %2222 = vmatprep.subr.mxu0 0.0
    %2223 = vmatpush1.msra.mxu0 0.0
    %2224 = vmatprep.subr.mxu0 0.0
    %2225 = vmatpush1.msra.mxu0 0.0
    %2226 = vmatprep.subr.mxu0 0.0
    %2227 = vmatpush1.msra.mxu0 0.0
    %2228 = vmatprep.subr.mxu0 0.0
    %2229 = vmatpush1.msra.mxu0 0.0
    %2230 = vmatprep.subr.mxu0 0.0
    %2231 = vmatpush1.msra.mxu0 0.0
    %2232 = vmatprep.subr.mxu0 0.0
    %2233 = vmatpush1.msra.mxu0 0.0
    %2234 = vmatprep.subr.mxu0 0.0
    %2235 = vmatpush1.msra.mxu0 0.0
    %2236 = vmatprep.subr.mxu0 0.0
    %2237 = vmatpush1.msra.mxu0 0.0
    %2238 = vmatprep.subr.mxu0 0.0
    %2239 = vmatpush1.msra.mxu0 0.0
    %2240 = vmatprep.subr.mxu0 0.0
    %2241 = vmatpush1.msra.mxu0 0.0
    %2242 = vmatprep.subr.mxu0 0.0
    %2243 = vmatpush1.msra.mxu0 0.0
    %2244 = vmatprep.subr.mxu0 0.0
    %2245 = vmatpush1.msra.mxu0 0.0
    %2246 = vmatprep.subr.mxu0 0.0
    %2247 = vmatpush1.msra.mxu0 0.0
    %2248 = vmatprep.subr.mxu0 0.0
    %2249 = vmatpush1.msra.mxu0 0.0
    %2250 = vmatprep.subr.mxu0 0.0
    %2251 = vmatpush1.msra.mxu0 0.0
    %2252 = vmatprep.subr.mxu0 0.0
    %2253 = vmatpush1.msra.mxu0 0.0
    %2254 = vmatprep.subr.mxu0 0.0
    %2255 = vmatpush1.msra.mxu0 0.0
    %2256 = vmatprep.subr.mxu0 0.0
    %2257 = vmatpush1.msra.mxu0 0.0
    %2258 = vmatprep.subr.mxu0 0.0
    %2259 = vmatpush1.msra.mxu0 0.0
    %2260 = vmatprep.subr.mxu0 0.0
    %2261 = vmatpush1.msra.mxu0 0.0
    %2262 = vmatprep.subr.mxu0 0.0
    %2263 = vmatpush1.msra.mxu0 0.0
    %2264 = vmatprep.subr.mxu0 0.0
    %2265 = vmatpush1.msra.mxu0 0.0
    %2266 = vmatprep.subr.mxu0 0.0
    %2267 = vmatpush1.msra.mxu0 0.0
    %2268 = vmatprep.subr.mxu0 0.0
    %2269 = vmatpush1.msra.mxu0 0.0
    %2270 = vmatprep.subr.mxu0 0.0
    %2271 = vmatpush1.msra.mxu0 0.0
    %2272 = vmatprep.mubr.f32.mxu0 0.0
    %2273 = vmatmul.mubr.f32.gmra.mrb[0].mxu0 %v2203
    %v2274 = vpop.f32.mrb[0].mxu0
    %v2275 = vadd.f32 0.0, %v2274
    %v2276 = vpop.f32.mrb[0].mxu0
    %v2277 = vadd.f32 0.0, %v2276
    %2278 = vmatprep.mubr.f32.mxu0 0.0
    %2279 = vmatmul.mubr.f32.gmra.mrb[0].mxu0 %v2206
    %v2280 = vpop.f32.mrb[0].mxu0
    %v2281 = vadd.f32 0.0, %v2280
    %v2282 = vpop.f32.mrb[0].mxu0
    %v2283 = vadd.f32 0.0, %v2282
    %2284 = vdwg.mxu0
    %2286 = vrot.lane.b32.xlu0 %v2275, 64
    %v2287 = vpop.permute.xlu0 %2286
    %v2288 = vsel %vm226, %v2275, 0
    %v2290 = vsel %vm226, %v2287, 0
    %2292 = vmatprep.subr.mxu0 0.0
    %2293 = vmatpush1.xpose.msra.mxu0 %v2290
    %2294 = vmatprep.subr.mxu0 0.0
    %2295 = vmatpush1.xpose.msra.mxu0 0.0
    %2296 = vmatprep.subr.mxu0 0.0
    %2297 = vmatpush1.xpose.msra.mxu0 0.0
    %2298 = vmatprep.subr.mxu0 0.0
    %2299 = vmatpush1.xpose.msra.mxu0 0.0
    %2300 = vmatprep.subr.mxu0 0.0
    %2301 = vmatpush1.xpose.msra.mxu0 0.0
    %2302 = vmatprep.subr.mxu0 0.0
    %2303 = vmatpush1.xpose.msra.mxu0 0.0
    %2304 = vmatprep.subr.mxu0 0.0
    %2305 = vmatpush1.xpose.msra.mxu0 0.0
    %2306 = vmatprep.subr.mxu0 0.0
    %2307 = vmatpush1.xpose.msra.mxu0 0.0
    %2308 = vmatprep.subr.mxu0 0.0
    %2309 = vmatpush1.xpose.msra.mxu0 0.0
    %2310 = vmatprep.subr.mxu0 0.0
    %2311 = vmatpush1.xpose.msra.mxu0 0.0
    %2312 = vmatprep.subr.mxu0 0.0
    %2313 = vmatpush1.xpose.msra.mxu0 0.0
    %2314 = vmatprep.subr.mxu0 0.0
    %2315 = vmatpush1.xpose.msra.mxu0 0.0
    %2316 = vmatprep.subr.mxu0 0.0
    %2317 = vmatpush1.xpose.msra.mxu0 0.0
    %2318 = vmatprep.subr.mxu0 0.0
    %2319 = vmatpush1.xpose.msra.mxu0 0.0
    %2320 = vmatprep.subr.mxu0 0.0
    %2321 = vmatpush1.xpose.msra.mxu0 0.0
    %2322 = vmatprep.subr.mxu0 0.0
    %2323 = vmatpush1.xpose.msra.mxu0 0.0
    %2324 = vmatprep.subr.mxu0 0.0
    %2325 = vmatpush1.xpose.msra.mxu0 0.0
    %2326 = vmatprep.subr.mxu0 0.0
    %2327 = vmatpush1.xpose.msra.mxu0 0.0
    %2328 = vmatprep.subr.mxu0 0.0
    %2329 = vmatpush1.xpose.msra.mxu0 0.0
    %2330 = vmatprep.subr.mxu0 0.0
    %2331 = vmatpush1.xpose.msra.mxu0 0.0
    %2332 = vmatprep.subr.mxu0 0.0
    %2333 = vmatpush1.xpose.msra.mxu0 0.0
    %2334 = vmatprep.subr.mxu0 0.0
    %2335 = vmatpush1.xpose.msra.mxu0 0.0
    %2336 = vmatprep.subr.mxu0 0.0
    %2337 = vmatpush1.xpose.msra.mxu0 0.0
    %2338 = vmatprep.subr.mxu0 0.0
    %2339 = vmatpush1.xpose.msra.mxu0 0.0
    %2340 = vmatprep.subr.mxu0 0.0
    %2341 = vmatpush1.xpose.msra.mxu0 0.0
    %2342 = vmatprep.subr.mxu0 0.0
    %2343 = vmatpush1.xpose.msra.mxu0 0.0
    %2344 = vmatprep.subr.mxu0 0.0
    %2345 = vmatpush1.xpose.msra.mxu0 0.0
    %2346 = vmatprep.subr.mxu0 0.0
    %2347 = vmatpush1.xpose.msra.mxu0 0.0
    %2348 = vmatprep.subr.mxu0 0.0
    %2349 = vmatpush1.xpose.msra.mxu0 0.0
    %2350 = vmatprep.subr.mxu0 0.0
    %2351 = vmatpush1.xpose.msra.mxu0 0.0
    %2352 = vmatprep.subr.mxu0 0.0
    %2353 = vmatpush1.xpose.msra.mxu0 0.0
    %2354 = vmatprep.subr.mxu0 0.0
    %2355 = vmatpush1.xpose.msra.mxu0 0.0
    %2356 = vmatprep.mubr.f32.mxu0 0.0
    %2357 = vmatmul.mubr.f32.gmra.mrb[0].mxu0 %v2288
    %v2358 = vpop.f32.mrb[0].mxu0
    %v2359 = vadd.f32 0.0, %v2358
    %v2360 = vpop.f32.mrb[0].mxu0
    %2361 = vdwg.mxu0
    %v2362 = vmul.f32 %v2359, 0.25
    %v2363 = vsel %vm302, %v2362, -inf
    %2364 = vmax.xlane.f32.xlu0 %v2363
    %v2365 = vpop.xlane.xlu0 %2364
    %v2366 = vsub.f32 %v2362, %v2365
    %v2367 = vmul.f32 %v2366, 1.442695
    %v2368 = vpow.pop %v2367
    %v2369 = vsel %vm302, %v2368, 0.0
    %2370 = vadd.xlane.f32.xlu0 %v2369
    %v2371 = vpop.xlane.xlu0 %2370
    %v2372 = vrcp.pop %v2371
    %v2373 = vmul.f32 %v2368, %v2372
    %v2375 = vsel %vm302, %v2373, 0
    %2377 = vmatprep.subr.mxu0 0.0
    %2378 = vmatpush1.msra.mxu0 %v2277
    %2379 = vmatprep.subr.mxu0 0.0
    %2380 = vmatpush1.msra.mxu0 0.0
    %2381 = vmatprep.subr.mxu0 0.0
    %2382 = vmatpush1.msra.mxu0 0.0
    %2383 = vmatprep.subr.mxu0 0.0
    %2384 = vmatpush1.msra.mxu0 0.0
    %2385 = vmatprep.subr.mxu0 0.0
    %2386 = vmatpush1.msra.mxu0 0.0
    %2387 = vmatprep.subr.mxu0 0.0
    %2388 = vmatpush1.msra.mxu0 0.0
    %2389 = vmatprep.subr.mxu0 0.0
    %2390 = vmatpush1.msra.mxu0 0.0
    %2391 = vmatprep.subr.mxu0 0.0
    %2392 = vmatpush1.msra.mxu0 0.0
    %2393 = vmatprep.subr.mxu0 0.0
    %2394 = vmatpush1.msra.mxu0 0.0
    %2395 = vmatprep.subr.mxu0 0.0
    %2396 = vmatpush1.msra.mxu0 0.0
    %2397 = vmatprep.subr.mxu0 0.0
    %2398 = vmatpush1.msra.mxu0 0.0
    %2399 = vmatprep.subr.mxu0 0.0
    %2400 = vmatpush1.msra.mxu0 0.0
    %2401 = vmatprep.subr.mxu0 0.0
    %2402 = vmatpush1.msra.mxu0 0.0
    %2403 = vmatprep.subr.mxu0 0.0
    %2404 = vmatpush1.msra.mxu0 0.0
    %2405 = vmatprep.subr.mxu0 0.0
    %2406 = vmatpush1.msra.mxu0 0.0
    %2407 = vmatprep.subr.mxu0 0.0
    %2408 = vmatpush1.msra.mxu0 0.0
    %2409 = vmatprep.subr.mxu0 0.0
    %2410 = vmatpush1.msra.mxu0 0.0
    %2411 = vmatprep.subr.mxu0 0.0
    %2412 = vmatpush1.msra.mxu0 0.0
    %2413 = vmatprep.subr.mxu0 0.0
    %2414 = vmatpush1.msra.mxu0 0.0
    %2415 = vmatprep.subr.mxu0 0.0
    %2416 = vmatpush1.msra.mxu0 0.0
    %2417 = vmatprep.subr.mxu0 0.0
    %2418 = vmatpush1.msra.mxu0 0.0
    %2419 = vmatprep.subr.mxu0 0.0
    %2420 = vmatpush1.msra.mxu0 0.0
    %2421 = vmatprep.subr.mxu0 0.0
    %2422 = vmatpush1.msra.mxu0 0.0
    %2423 = vmatprep.subr.mxu0 0.0
    %2424 = vmatpush1.msra.mxu0 0.0
    %2425 = vmatprep.subr.mxu0 0.0
    %2426 = vmatpush1.msra.mxu0 0.0
    %2427 = vmatprep.subr.mxu0 0.0
    %2428 = vmatpush1.msra.mxu0 0.0
    %2429 = vmatprep.subr.mxu0 0.0
    %2430 = vmatpush1.msra.mxu0 0.0
    %2431 = vmatprep.subr.mxu0 0.0
    %2432 = vmatpush1.msra.mxu0 0.0
    %2433 = vmatprep.subr.mxu0 0.0
    %2434 = vmatpush1.msra.mxu0 0.0
    %2435 = vmatprep.subr.mxu0 0.0
    %2436 = vmatpush1.msra.mxu0 0.0
    %2437 = vmatprep.subr.mxu0 0.0
    %2438 = vmatpush1.msra.mxu0 0.0
    %2439 = vmatprep.subr.mxu0 0.0
    %2440 = vmatpush1.msra.mxu0 0.0
    %2441 = vmatprep.mubr.f32.mxu0 0.0
    %2442 = vmatmul.mubr.f32.gmra.mrb[0].mxu0 %v2375
    %v2443 = vpop.f32.mrb[0].mxu0
    %v2444 = vadd.f32 0.0, %v2443
    %v2445 = vpop.f32.mrb[0].mxu0
    %2446 = vdwg.mxu0
    %2447 = vrot.lane.b32.xlu0 %v2275, 112
    %v2448 = vpop.permute.xlu0 %2447
    %2449 = vrot.lane.b32.xlu0 %v2275, 48
    %v2450 = vpop.permute.xlu0 %2449
    %v2451 = vsel %vm226, %v2448, 0
    %v2453 = vsel %vm226, %v2450, 0
    %2455 = vmatprep.subr.mxu0 0.0
    %2456 = vmatpush1.xpose.msra.mxu0 %v2453
    %2457 = vmatprep.subr.mxu0 0.0
    %2458 = vmatpush1.xpose.msra.mxu0 0.0
    %2459 = vmatprep.subr.mxu0 0.0
    %2460 = vmatpush1.xpose.msra.mxu0 0.0
    %2461 = vmatprep.subr.mxu0 0.0
    %2462 = vmatpush1.xpose.msra.mxu0 0.0
    %2463 = vmatprep.subr.mxu0 0.0
    %2464 = vmatpush1.xpose.msra.mxu0 0.0
    %2465 = vmatprep.subr.mxu0 0.0
    %2466 = vmatpush1.xpose.msra.mxu0 0.0
    %2467 = vmatprep.subr.mxu0 0.0
    %2468 = vmatpush1.xpose.msra.mxu0 0.0
    %2469 = vmatprep.subr.mxu0 0.0
    %2470 = vmatpush1.xpose.msra.mxu0 0.0
    %2471 = vmatprep.subr.mxu0 0.0
    %2472 = vmatpush1.xpose.msra.mxu0 0.0
    %2473 = vmatprep.subr.mxu0 0.0
    %2474 = vmatpush1.xpose.msra.mxu0 0.0
    %2475 = vmatprep.subr.mxu0 0.0
    %2476 = vmatpush1.xpose.msra.mxu0 0.0
    %2477 = vmatprep.subr.mxu0 0.0
    %2478 = vmatpush1.xpose.msra.mxu0 0.0
    %2479 = vmatprep.subr.mxu0 0.0
    %2480 = vmatpush1.xpose.msra.mxu0 0.0
    %2481 = vmatprep.subr.mxu0 0.0
    %2482 = vmatpush1.xpose.msra.mxu0 0.0
    %2483 = vmatprep.subr.mxu0 0.0
    %2484 = vmatpush1.xpose.msra.mxu0 0.0
    %2485 = vmatprep.subr.mxu0 0.0
    %2486 = vmatpush1.xpose.msra.mxu0 0.0
    %2487 = vmatprep.subr.mxu0 0.0
    %2488 = vmatpush1.xpose.msra.mxu0 0.0
    %2489 = vmatprep.subr.mxu0 0.0
    %2490 = vmatpush1.xpose.msra.mxu0 0.0
    %2491 = vmatprep.subr.mxu0 0.0
    %2492 = vmatpush1.xpose.msra.mxu0 0.0
    %2493 = vmatprep.subr.mxu0 0.0
    %2494 = vmatpush1.xpose.msra.mxu0 0.0
    %2495 = vmatprep.subr.mxu0 0.0
    %2496 = vmatpush1.xpose.msra.mxu0 0.0
    %2497 = vmatprep.subr.mxu0 0.0
    %2498 = vmatpush1.xpose.msra.mxu0 0.0
    %2499 = vmatprep.subr.mxu0 0.0
    %2500 = vmatpush1.xpose.msra.mxu0 0.0
    %2501 = vmatprep.subr.mxu0 0.0
    %2502 = vmatpush1.xpose.msra.mxu0 0.0
    %2503 = vmatprep.subr.mxu0 0.0
    %2504 = vmatpush1.xpose.msra.mxu0 0.0
    %2505 = vmatprep.subr.mxu0 0.0
    %2506 = vmatpush1.xpose.msra.mxu0 0.0
    %2507 = vmatprep.subr.mxu0 0.0
    %2508 = vmatpush1.xpose.msra.mxu0 0.0
    %2509 = vmatprep.subr.mxu0 0.0
    %2510 = vmatpush1.xpose.msra.mxu0 0.0
    %2511 = vmatprep.subr.mxu0 0.0
    %2512 = vmatpush1.xpose.msra.mxu0 0.0
    %2513 = vmatprep.subr.mxu0 0.0
    %2514 = vmatpush1.xpose.msra.mxu0 0.0
    %2515 = vmatprep.subr.mxu0 0.0
    %2516 = vmatpush1.xpose.msra.mxu0 0.0
    %2517 = vmatprep.subr.mxu0 0.0
    %2518 = vmatpush1.xpose.msra.mxu0 0.0
    %2519 = vmatprep.mubr.f32.mxu0 0.0
    %2520 = vmatmul.mubr.f32.gmra.mrb[0].mxu0 %v2451
    %v2521 = vpop.f32.mrb[0].mxu0
    %v2522 = vadd.f32 0.0, %v2521
    %v2523 = vpop.f32.mrb[0].mxu0
    %2524 = vdwg.mxu0
    %v2525 = vmul.f32 %v2522, 0.25
    %v2526 = vsel %vm302, %v2525, -inf
    %2527 = vmax.xlane.f32.xlu0 %v2526
    %v2528 = vpop.xlane.xlu0 %2527
    %v2529 = vsub.f32 %v2525, %v2528
    %v2530 = vmul.f32 %v2529, 1.442695
    %v2531 = vpow.pop %v2530
    %v2532 = vsel %vm302, %v2531, 0.0
    %2533 = vadd.xlane.f32.xlu0 %v2532
    %v2534 = vpop.xlane.xlu0 %2533
    %v2535 = vrcp.pop %v2534
    %v2536 = vmul.f32 %v2531, %v2535
    %2538 = vrot.lane.b32.xlu0 %v2277, 112
    %v2539 = vpop.permute.xlu0 %2538
    %v2542 = vsel %vm302, %v2536, 0
    %2544 = vmatprep.subr.mxu0 0.0
    %2545 = vmatpush1.msra.mxu0 %v2539
    %2546 = vmatprep.subr.mxu0 0.0
    %2547 = vmatpush1.msra.mxu0 0.0
    %2548 = vmatprep.subr.mxu0 0.0
    %2549 = vmatpush1.msra.mxu0 0.0
    %2550 = vmatprep.subr.mxu0 0.0
    %2551 = vmatpush1.msra.mxu0 0.0
    %2552 = vmatprep.subr.mxu0 0.0
    %2553 = vmatpush1.msra.mxu0 0.0
    %2554 = vmatprep.subr.mxu0 0.0
    %2555 = vmatpush1.msra.mxu0 0.0
    %2556 = vmatprep.subr.mxu0 0.0
    %2557 = vmatpush1.msra.mxu0 0.0
    %2558 = vmatprep.subr.mxu0 0.0
    %2559 = vmatpush1.msra.mxu0 0.0
    %2560 = vmatprep.subr.mxu0 0.0
    %2561 = vmatpush1.msra.mxu0 0.0
    %2562 = vmatprep.subr.mxu0 0.0
    %2563 = vmatpush1.msra.mxu0 0.0
    %2564 = vmatprep.subr.mxu0 0.0
    %2565 = vmatpush1.msra.mxu0 0.0
    %2566 = vmatprep.subr.mxu0 0.0
    %2567 = vmatpush1.msra.mxu0 0.0
    %2568 = vmatprep.subr.mxu0 0.0
    %2569 = vmatpush1.msra.mxu0 0.0
    %2570 = vmatprep.subr.mxu0 0.0
    %2571 = vmatpush1.msra.mxu0 0.0
    %2572 = vmatprep.subr.mxu0 0.0
    %2573 = vmatpush1.msra.mxu0 0.0
    %2574 = vmatprep.subr.mxu0 0.0
    %2575 = vmatpush1.msra.mxu0 0.0
    %2576 = vmatprep.subr.mxu0 0.0
    %2577 = vmatpush1.msra.mxu0 0.0
    %2578 = vmatprep.subr.mxu0 0.0
    %2579 = vmatpush1.msra.mxu0 0.0
    %2580 = vmatprep.subr.mxu0 0.0
    %2581 = vmatpush1.msra.mxu0 0.0
    %2582 = vmatprep.subr.mxu0 0.0
    %2583 = vmatpush1.msra.mxu0 0.0
    %2584 = vmatprep.subr.mxu0 0.0
    %2585 = vmatpush1.msra.mxu0 0.0
    %2586 = vmatprep.subr.mxu0 0.0
    %2587 = vmatpush1.msra.mxu0 0.0
    %2588 = vmatprep.subr.mxu0 0.0
    %2589 = vmatpush1.msra.mxu0 0.0
    %2590 = vmatprep.subr.mxu0 0.0
    %2591 = vmatpush1.msra.mxu0 0.0
    %2592 = vmatprep.subr.mxu0 0.0
    %2593 = vmatpush1.msra.mxu0 0.0
    %2594 = vmatprep.subr.mxu0 0.0
    %2595 = vmatpush1.msra.mxu0 0.0
    %2596 = vmatprep.subr.mxu0 0.0
    %2597 = vmatpush1.msra.mxu0 0.0
    %2598 = vmatprep.subr.mxu0 0.0
    %2599 = vmatpush1.msra.mxu0 0.0
    %2600 = vmatprep.subr.mxu0 0.0
    %2601 = vmatpush1.msra.mxu0 0.0
    %2602 = vmatprep.subr.mxu0 0.0
    %2603 = vmatpush1.msra.mxu0 0.0
    %2604 = vmatprep.subr.mxu0 0.0
    %2605 = vmatpush1.msra.mxu0 0.0
    %2606 = vmatprep.subr.mxu0 0.0
    %2607 = vmatpush1.msra.mxu0 0.0
    %2608 = vmatprep.mubr.f32.mxu0 0.0
    %2609 = vmatmul.mubr.f32.gmra.mrb[0].mxu0 %v2542
    %v2610 = vpop.f32.mrb[0].mxu0
    %v2611 = vadd.f32 0.0, %v2610
    %v2612 = vpop.f32.mrb[0].mxu0
    %2613 = vdwg.mxu0
    %v2615 = vsel %vm226, %v2611, 0
    %2617 = vmatprep.subr.mxu0 0.0
    %2618 = vmatpush1.msra.mxu0 %v2196
    %2619 = vmatprep.subr.mxu0 0.0
    %2620 = vmatpush1.msra.mxu0 %v2197
    %2621 = vmatprep.subr.mxu0 0.0
    %2622 = vmatpush1.msra.mxu0 0.0
    %2623 = vmatprep.subr.mxu0 0.0
    %2624 = vmatpush1.msra.mxu0 0.0
    %2625 = vmatprep.subr.mxu0 0.0
    %2626 = vmatpush1.msra.mxu0 0.0
    %2627 = vmatprep.subr.mxu0 0.0
    %2628 = vmatpush1.msra.mxu0 0.0
    %2629 = vmatprep.subr.mxu0 0.0
    %2630 = vmatpush1.msra.mxu0 0.0
    %2631 = vmatprep.subr.mxu0 0.0
    %2632 = vmatpush1.msra.mxu0 0.0
    %2633 = vmatprep.subr.mxu0 0.0
    %2634 = vmatpush1.msra.mxu0 0.0
    %2635 = vmatprep.subr.mxu0 0.0
    %2636 = vmatpush1.msra.mxu0 0.0
    %2637 = vmatprep.subr.mxu0 0.0
    %2638 = vmatpush1.msra.mxu0 0.0
    %2639 = vmatprep.subr.mxu0 0.0
    %2640 = vmatpush1.msra.mxu0 0.0
    %2641 = vmatprep.subr.mxu0 0.0
    %2642 = vmatpush1.msra.mxu0 0.0
    %2643 = vmatprep.subr.mxu0 0.0
    %2644 = vmatpush1.msra.mxu0 0.0
    %2645 = vmatprep.subr.mxu0 0.0
    %2646 = vmatpush1.msra.mxu0 0.0
    %2647 = vmatprep.subr.mxu0 0.0
    %2648 = vmatpush1.msra.mxu0 0.0
    %2649 = vmatprep.subr.mxu0 0.0
    %2650 = vmatpush1.msra.mxu0 0.0
    %2651 = vmatprep.subr.mxu0 0.0
    %2652 = vmatpush1.msra.mxu0 0.0
    %2653 = vmatprep.subr.mxu0 0.0
    %2654 = vmatpush1.msra.mxu0 0.0
    %2655 = vmatprep.subr.mxu0 0.0
    %2656 = vmatpush1.msra.mxu0 0.0
    %2657 = vmatprep.subr.mxu0 0.0
    %2658 = vmatpush1.msra.mxu0 0.0
    %2659 = vmatprep.subr.mxu0 0.0
    %2660 = vmatpush1.msra.mxu0 0.0
    %2661 = vmatprep.subr.mxu0 0.0
    %2662 = vmatpush1.msra.mxu0 0.0
    %2663 = vmatprep.subr.mxu0 0.0
    %2664 = vmatpush1.msra.mxu0 0.0
    %2665 = vmatprep.subr.mxu0 0.0
    %2666 = vmatpush1.msra.mxu0 0.0
    %2667 = vmatprep.subr.mxu0 0.0
    %2668 = vmatpush1.msra.mxu0 0.0
    %2669 = vmatprep.subr.mxu0 0.0
    %2670 = vmatpush1.msra.mxu0 0.0
    %2671 = vmatprep.subr.mxu0 0.0
    %2672 = vmatpush1.msra.mxu0 0.0
    %2673 = vmatprep.subr.mxu0 0.0
    %2674 = vmatpush1.msra.mxu0 0.0
    %2675 = vmatprep.subr.mxu0 0.0
    %2676 = vmatpush1.msra.mxu0 0.0
    %2677 = vmatprep.subr.mxu0 0.0
    %2678 = vmatpush1.msra.mxu0 0.0
    %2679 = vmatprep.subr.mxu0 0.0
    %2680 = vmatpush1.msra.mxu0 0.0
    %2681 = vmatprep.mubr.f32.mxu0 0.0
    %2682 = vmatmul.mubr.f32.gmra.mrb[0].mxu0 %v2615
    %v2683 = vpop.f32.mrb[0].mxu0
    %v2684 = vadd.f32 0.0, %v2683
    %v2685 = vpop.f32.mrb[0].mxu0
    %2686 = vdwg.mxu0
    %v2688 = vsel %vm226, %v2444, 0
    %2690 = vmatprep.subr.mxu0 0.0
    %2691 = vmatpush1.msra.mxu0 %v2194
    %2692 = vmatprep.subr.mxu0 0.0
    %2693 = vmatpush1.msra.mxu0 %v2195
    %2694 = vmatprep.subr.mxu0 0.0
    %2695 = vmatpush1.msra.mxu0 0.0
    %2696 = vmatprep.subr.mxu0 0.0
    %2697 = vmatpush1.msra.mxu0 0.0
    %2698 = vmatprep.subr.mxu0 0.0
    %2699 = vmatpush1.msra.mxu0 0.0
    %2700 = vmatprep.subr.mxu0 0.0
    %2701 = vmatpush1.msra.mxu0 0.0
    %2702 = vmatprep.subr.mxu0 0.0
    %2703 = vmatpush1.msra.mxu0 0.0
    %2704 = vmatprep.subr.mxu0 0.0
    %2705 = vmatpush1.msra.mxu0 0.0
    %2706 = vmatprep.subr.mxu0 0.0
    %2707 = vmatpush1.msra.mxu0 0.0
    %2708 = vmatprep.subr.mxu0 0.0
    %2709 = vmatpush1.msra.mxu0 0.0
    %2710 = vmatprep.subr.mxu0 0.0
    %2711 = vmatpush1.msra.mxu0 0.0
    %2712 = vmatprep.subr.mxu0 0.0
    %2713 = vmatpush1.msra.mxu0 0.0
    %2714 = vmatprep.subr.mxu0 0.0
    %2715 = vmatpush1.msra.mxu0 0.0
    %2716 = vmatprep.subr.mxu0 0.0
    %2717 = vmatpush1.msra.mxu0 0.0
    %2718 = vmatprep.subr.mxu0 0.0
    %2719 = vmatpush1.msra.mxu0 0.0
    %2720 = vmatprep.subr.mxu0 0.0
    %2721 = vmatpush1.msra.mxu0 0.0
    %2722 = vmatprep.subr.mxu0 0.0
    %2723 = vmatpush1.msra.mxu0 0.0
    %2724 = vmatprep.subr.mxu0 0.0
    %2725 = vmatpush1.msra.mxu0 0.0
    %2726 = vmatprep.subr.mxu0 0.0
    %2727 = vmatpush1.msra.mxu0 0.0
    %2728 = vmatprep.subr.mxu0 0.0
    %2729 = vmatpush1.msra.mxu0 0.0
    %2730 = vmatprep.subr.mxu0 0.0
    %2731 = vmatpush1.msra.mxu0 0.0
    %2732 = vmatprep.subr.mxu0 0.0
    %2733 = vmatpush1.msra.mxu0 0.0
    %2734 = vmatprep.subr.mxu0 0.0
    %2735 = vmatpush1.msra.mxu0 0.0
    %2736 = vmatprep.subr.mxu0 0.0
    %2737 = vmatpush1.msra.mxu0 0.0
    %2738 = vmatprep.subr.mxu0 0.0
    %2739 = vmatpush1.msra.mxu0 0.0
    %2740 = vmatprep.subr.mxu0 0.0
    %2741 = vmatpush1.msra.mxu0 0.0
    %2742 = vmatprep.subr.mxu0 0.0
    %2743 = vmatpush1.msra.mxu0 0.0
    %2744 = vmatprep.subr.mxu0 0.0
    %2745 = vmatpush1.msra.mxu0 0.0
    %2746 = vmatprep.subr.mxu0 0.0
    %2747 = vmatpush1.msra.mxu0 0.0
    %2748 = vmatprep.subr.mxu0 0.0
    %2749 = vmatpush1.msra.mxu0 0.0
    %2750 = vmatprep.subr.mxu0 0.0
    %2751 = vmatpush1.msra.mxu0 0.0
    %2752 = vmatprep.subr.mxu0 0.0
    %2753 = vmatpush1.msra.mxu0 0.0
    %2754 = vmatprep.mubr.f32.mxu0 0.0
    %2755 = vmatmul.mubr.f32.gmra.mrb[0].mxu0 %v2688
    %v2756 = vpop.f32.mrb[0].mxu0
    %v2757 = vadd.f32 %v2684, %v2756
    %v2758 = vpop.f32.mrb[0].mxu0
    %2759 = vdwg.mxu0
    %2760 = vrot.lane.b32.xlu0 %v2275, 96
    %v2761 = vpop.permute.xlu0 %2760
    %2762 = vrot.lane.b32.xlu0 %v2275, 32
    %v2763 = vpop.permute.xlu0 %2762
    %v2764 = vsel %vm226, %v2761, 0
    %v2766 = vsel %vm226, %v2763, 0
    %2768 = vmatprep.subr.mxu0 0.0
    %2769 = vmatpush1.xpose.msra.mxu0 %v2766
    %2770 = vmatprep.subr.mxu0 0.0
    %2771 = vmatpush1.xpose.msra.mxu0 0.0
    %2772 = vmatprep.subr.mxu0 0.0
    %2773 = vmatpush1.xpose.msra.mxu0 0.0
    %2774 = vmatprep.subr.mxu0 0.0
    %2775 = vmatpush1.xpose.msra.mxu0 0.0
    %2776 = vmatprep.subr.mxu0 0.0
    %2777 = vmatpush1.xpose.msra.mxu0 0.0
    %2778 = vmatprep.subr.mxu0 0.0
    %2779 = vmatpush1.xpose.msra.mxu0 0.0
    %2780 = vmatprep.subr.mxu0 0.0
    %2781 = vmatpush1.xpose.msra.mxu0 0.0
    %2782 = vmatprep.subr.mxu0 0.0
    %2783 = vmatpush1.xpose.msra.mxu0 0.0
    %2784 = vmatprep.subr.mxu0 0.0
    %2785 = vmatpush1.xpose.msra.mxu0 0.0
    %2786 = vmatprep.subr.mxu0 0.0
    %2787 = vmatpush1.xpose.msra.mxu0 0.0
    %2788 = vmatprep.subr.mxu0 0.0
    %2789 = vmatpush1.xpose.msra.mxu0 0.0
    %2790 = vmatprep.subr.mxu0 0.0
    %2791 = vmatpush1.xpose.msra.mxu0 0.0
    %2792 = vmatprep.subr.mxu0 0.0
    %2793 = vmatpush1.xpose.msra.mxu0 0.0
    %2794 = vmatprep.subr.mxu0 0.0
    %2795 = vmatpush1.xpose.msra.mxu0 0.0
    %2796 = vmatprep.subr.mxu0 0.0
    %2797 = vmatpush1.xpose.msra.mxu0 0.0
    %2798 = vmatprep.subr.mxu0 0.0
    %2799 = vmatpush1.xpose.msra.mxu0 0.0
    %2800 = vmatprep.subr.mxu0 0.0
    %2801 = vmatpush1.xpose.msra.mxu0 0.0
    %2802 = vmatprep.subr.mxu0 0.0
    %2803 = vmatpush1.xpose.msra.mxu0 0.0
    %2804 = vmatprep.subr.mxu0 0.0
    %2805 = vmatpush1.xpose.msra.mxu0 0.0
    %2806 = vmatprep.subr.mxu0 0.0
    %2807 = vmatpush1.xpose.msra.mxu0 0.0
    %2808 = vmatprep.subr.mxu0 0.0
    %2809 = vmatpush1.xpose.msra.mxu0 0.0
    %2810 = vmatprep.subr.mxu0 0.0
    %2811 = vmatpush1.xpose.msra.mxu0 0.0
    %2812 = vmatprep.subr.mxu0 0.0
    %2813 = vmatpush1.xpose.msra.mxu0 0.0
    %2814 = vmatprep.subr.mxu0 0.0
    %2815 = vmatpush1.xpose.msra.mxu0 0.0
    %2816 = vmatprep.subr.mxu0 0.0
    %2817 = vmatpush1.xpose.msra.mxu0 0.0
    %2818 = vmatprep.subr.mxu0 0.0
    %2819 = vmatpush1.xpose.msra.mxu0 0.0
    %2820 = vmatprep.subr.mxu0 0.0
    %2821 = vmatpush1.xpose.msra.mxu0 0.0
    %2822 = vmatprep.subr.mxu0 0.0
    %2823 = vmatpush1.xpose.msra.mxu0 0.0
    %2824 = vmatprep.subr.mxu0 0.0
    %2825 = vmatpush1.xpose.msra.mxu0 0.0
    %2826 = vmatprep.subr.mxu0 0.0
    %2827 = vmatpush1.xpose.msra.mxu0 0.0
    %2828 = vmatprep.subr.mxu0 0.0
    %2829 = vmatpush1.xpose.msra.mxu0 0.0
    %2830 = vmatprep.subr.mxu0 0.0
    %2831 = vmatpush1.xpose.msra.mxu0 0.0
    %2832 = vmatprep.mubr.f32.mxu0 0.0
    %2833 = vmatmul.mubr.f32.gmra.mrb[0].mxu0 %v2764
    %v2834 = vpop.f32.mrb[0].mxu0
    %v2835 = vadd.f32 0.0, %v2834
    %v2836 = vpop.f32.mrb[0].mxu0
    %2837 = vdwg.mxu0
    %v2838 = vmul.f32 %v2835, 0.25
    %v2839 = vsel %vm302, %v2838, -inf
    %2840 = vmax.xlane.f32.xlu0 %v2839
    %v2841 = vpop.xlane.xlu0 %2840
    %v2842 = vsub.f32 %v2838, %v2841
    %v2843 = vmul.f32 %v2842, 1.442695
    %v2844 = vpow.pop %v2843
    %v2845 = vsel %vm302, %v2844, 0.0
    %2846 = vadd.xlane.f32.xlu0 %v2845
    %v2847 = vpop.xlane.xlu0 %2846
    %v2848 = vrcp.pop %v2847
    %v2849 = vmul.f32 %v2844, %v2848
    %2850 = vrot.lane.b32.xlu0 %v2277, 96
    %v2851 = vpop.permute.xlu0 %2850
    %v2854 = vsel %vm302, %v2849, 0
    %2856 = vmatprep.subr.mxu0 0.0
    %2857 = vmatpush1.msra.mxu0 %v2851
    %2858 = vmatprep.subr.mxu0 0.0
    %2859 = vmatpush1.msra.mxu0 0.0
    %2860 = vmatprep.subr.mxu0 0.0
    %2861 = vmatpush1.msra.mxu0 0.0
    %2862 = vmatprep.subr.mxu0 0.0
    %2863 = vmatpush1.msra.mxu0 0.0
    %2864 = vmatprep.subr.mxu0 0.0
    %2865 = vmatpush1.msra.mxu0 0.0
    %2866 = vmatprep.subr.mxu0 0.0
    %2867 = vmatpush1.msra.mxu0 0.0
    %2868 = vmatprep.subr.mxu0 0.0
    %2869 = vmatpush1.msra.mxu0 0.0
    %2870 = vmatprep.subr.mxu0 0.0
    %2871 = vmatpush1.msra.mxu0 0.0
    %2872 = vmatprep.subr.mxu0 0.0
    %2873 = vmatpush1.msra.mxu0 0.0
    %2874 = vmatprep.subr.mxu0 0.0
    %2875 = vmatpush1.msra.mxu0 0.0
    %2876 = vmatprep.subr.mxu0 0.0
    %2877 = vmatpush1.msra.mxu0 0.0
    %2878 = vmatprep.subr.mxu0 0.0
    %2879 = vmatpush1.msra.mxu0 0.0
    %2880 = vmatprep.subr.mxu0 0.0
    %2881 = vmatpush1.msra.mxu0 0.0
    %2882 = vmatprep.subr.mxu0 0.0
    %2883 = vmatpush1.msra.mxu0 0.0
    %2884 = vmatprep.subr.mxu0 0.0
    %2885 = vmatpush1.msra.mxu0 0.0
    %2886 = vmatprep.subr.mxu0 0.0
    %2887 = vmatpush1.msra.mxu0 0.0
    %2888 = vmatprep.subr.mxu0 0.0
    %2889 = vmatpush1.msra.mxu0 0.0
    %2890 = vmatprep.subr.mxu0 0.0
    %2891 = vmatpush1.msra.mxu0 0.0
    %2892 = vmatprep.subr.mxu0 0.0
    %2893 = vmatpush1.msra.mxu0 0.0
    %2894 = vmatprep.subr.mxu0 0.0
    %2895 = vmatpush1.msra.mxu0 0.0
    %2896 = vmatprep.subr.mxu0 0.0
    %2897 = vmatpush1.msra.mxu0 0.0
    %2898 = vmatprep.subr.mxu0 0.0
    %2899 = vmatpush1.msra.mxu0 0.0
    %2900 = vmatprep.subr.mxu0 0.0
    %2901 = vmatpush1.msra.mxu0 0.0
    %2902 = vmatprep.subr.mxu0 0.0
    %2903 = vmatpush1.msra.mxu0 0.0
    %2904 = vmatprep.subr.mxu0 0.0
    %2905 = vmatpush1.msra.mxu0 0.0
    %2906 = vmatprep.subr.mxu0 0.0
    %2907 = vmatpush1.msra.mxu0 0.0
    %2908 = vmatprep.subr.mxu0 0.0
    %2909 = vmatpush1.msra.mxu0 0.0
    %2910 = vmatprep.subr.mxu0 0.0
    %2911 = vmatpush1.msra.mxu0 0.0
    %2912 = vmatprep.subr.mxu0 0.0
    %2913 = vmatpush1.msra.mxu0 0.0
    %2914 = vmatprep.subr.mxu0 0.0
    %2915 = vmatpush1.msra.mxu0 0.0
    %2916 = vmatprep.subr.mxu0 0.0
    %2917 = vmatpush1.msra.mxu0 0.0
    %2918 = vmatprep.subr.mxu0 0.0
    %2919 = vmatpush1.msra.mxu0 0.0
    %2920 = vmatprep.mubr.f32.mxu0 0.0
    %2921 = vmatmul.mubr.f32.gmra.mrb[0].mxu0 %v2854
    %v2922 = vpop.f32.mrb[0].mxu0
    %v2923 = vadd.f32 0.0, %v2922
    %v2924 = vpop.f32.mrb[0].mxu0
    %2925 = vdwg.mxu0
    %v2927 = vsel %vm226, %v2923, 0
    %2929 = vmatprep.subr.mxu0 0.0
    %2930 = vmatpush1.msra.mxu0 %v2198
    %2931 = vmatprep.subr.mxu0 0.0
    %2932 = vmatpush1.msra.mxu0 %v2199
    %2933 = vmatprep.subr.mxu0 0.0
    %2934 = vmatpush1.msra.mxu0 0.0
    %2935 = vmatprep.subr.mxu0 0.0
    %2936 = vmatpush1.msra.mxu0 0.0
    %2937 = vmatprep.subr.mxu0 0.0
    %2938 = vmatpush1.msra.mxu0 0.0
    %2939 = vmatprep.subr.mxu0 0.0
    %2940 = vmatpush1.msra.mxu0 0.0
    %2941 = vmatprep.subr.mxu0 0.0
    %2942 = vmatpush1.msra.mxu0 0.0
    %2943 = vmatprep.subr.mxu0 0.0
    %2944 = vmatpush1.msra.mxu0 0.0
    %2945 = vmatprep.subr.mxu0 0.0
    %2946 = vmatpush1.msra.mxu0 0.0
    %2947 = vmatprep.subr.mxu0 0.0
    %2948 = vmatpush1.msra.mxu0 0.0
    %2949 = vmatprep.subr.mxu0 0.0
    %2950 = vmatpush1.msra.mxu0 0.0
    %2951 = vmatprep.subr.mxu0 0.0
    %2952 = vmatpush1.msra.mxu0 0.0
    %2953 = vmatprep.subr.mxu0 0.0
    %2954 = vmatpush1.msra.mxu0 0.0
    %2955 = vmatprep.subr.mxu0 0.0
    %2956 = vmatpush1.msra.mxu0 0.0
    %2957 = vmatprep.subr.mxu0 0.0
    %2958 = vmatpush1.msra.mxu0 0.0
    %2959 = vmatprep.subr.mxu0 0.0
    %2960 = vmatpush1.msra.mxu0 0.0
    %2961 = vmatprep.subr.mxu0 0.0
    %2962 = vmatpush1.msra.mxu0 0.0
    %2963 = vmatprep.subr.mxu0 0.0
    %2964 = vmatpush1.msra.mxu0 0.0
    %2965 = vmatprep.subr.mxu0 0.0
    %2966 = vmatpush1.msra.mxu0 0.0
    %2967 = vmatprep.subr.mxu0 0.0
    %2968 = vmatpush1.msra.mxu0 0.0
    %2969 = vmatprep.subr.mxu0 0.0
    %2970 = vmatpush1.msra.mxu0 0.0
    %2971 = vmatprep.subr.mxu0 0.0
    %2972 = vmatpush1.msra.mxu0 0.0
    %2973 = vmatprep.subr.mxu0 0.0
    %2974 = vmatpush1.msra.mxu0 0.0
    %2975 = vmatprep.subr.mxu0 0.0
    %2976 = vmatpush1.msra.mxu0 0.0
    %2977 = vmatprep.subr.mxu0 0.0
    %2978 = vmatpush1.msra.mxu0 0.0
    %2979 = vmatprep.subr.mxu0 0.0
    %2980 = vmatpush1.msra.mxu0 0.0
    %2981 = vmatprep.subr.mxu0 0.0
    %2982 = vmatpush1.msra.mxu0 0.0
    %2983 = vmatprep.subr.mxu0 0.0
    %2984 = vmatpush1.msra.mxu0 0.0
    %2985 = vmatprep.subr.mxu0 0.0
    %2986 = vmatpush1.msra.mxu0 0.0
    %2987 = vmatprep.subr.mxu0 0.0
    %2988 = vmatpush1.msra.mxu0 0.0
    %2989 = vmatprep.subr.mxu0 0.0
    %2990 = vmatpush1.msra.mxu0 0.0
    %2991 = vmatprep.subr.mxu0 0.0
    %2992 = vmatpush1.msra.mxu0 0.0
    %2993 = vmatprep.mubr.f32.mxu0 0.0
    %2994 = vmatmul.mubr.f32.gmra.mrb[0].mxu0 %v2927
    %v2995 = vpop.f32.mrb[0].mxu0
    %v2996 = vadd.f32 0.0, %v2995
    %v2997 = vpop.f32.mrb[0].mxu0
    %2998 = vdwg.mxu0
    %v2999 = vadd.f32 %v2757, %v2996
    %3000 = vrot.lane.b32.xlu0 %v2275, 80
    %v3001 = vpop.permute.xlu0 %3000
    %3002 = vrot.lane.b32.xlu0 %v2275, 16
    %v3003 = vpop.permute.xlu0 %3002
    %v3004 = vsel %vm226, %v3001, 0
    %v3006 = vsel %vm226, %v3003, 0
    %3008 = vmatprep.subr.mxu0 0.0
    %3009 = vmatpush1.xpose.msra.mxu0 %v3006
    %3010 = vmatprep.subr.mxu0 0.0
    %3011 = vmatpush1.xpose.msra.mxu0 0.0
    %3012 = vmatprep.subr.mxu0 0.0
    %3013 = vmatpush1.xpose.msra.mxu0 0.0
    %3014 = vmatprep.subr.mxu0 0.0
    %3015 = vmatpush1.xpose.msra.mxu0 0.0
    %3016 = vmatprep.subr.mxu0 0.0
    %3017 = vmatpush1.xpose.msra.mxu0 0.0
    %3018 = vmatprep.subr.mxu0 0.0
    %3019 = vmatpush1.xpose.msra.mxu0 0.0
    %3020 = vmatprep.subr.mxu0 0.0
    %3021 = vmatpush1.xpose.msra.mxu0 0.0
    %3022 = vmatprep.subr.mxu0 0.0
    %3023 = vmatpush1.xpose.msra.mxu0 0.0
    %3024 = vmatprep.subr.mxu0 0.0
    %3025 = vmatpush1.xpose.msra.mxu0 0.0
    %3026 = vmatprep.subr.mxu0 0.0
    %3027 = vmatpush1.xpose.msra.mxu0 0.0
    %3028 = vmatprep.subr.mxu0 0.0
    %3029 = vmatpush1.xpose.msra.mxu0 0.0
    %3030 = vmatprep.subr.mxu0 0.0
    %3031 = vmatpush1.xpose.msra.mxu0 0.0
    %3032 = vmatprep.subr.mxu0 0.0
    %3033 = vmatpush1.xpose.msra.mxu0 0.0
    %3034 = vmatprep.subr.mxu0 0.0
    %3035 = vmatpush1.xpose.msra.mxu0 0.0
    %3036 = vmatprep.subr.mxu0 0.0
    %3037 = vmatpush1.xpose.msra.mxu0 0.0
    %3038 = vmatprep.subr.mxu0 0.0
    %3039 = vmatpush1.xpose.msra.mxu0 0.0
    %3040 = vmatprep.subr.mxu0 0.0
    %3041 = vmatpush1.xpose.msra.mxu0 0.0
    %3042 = vmatprep.subr.mxu0 0.0
    %3043 = vmatpush1.xpose.msra.mxu0 0.0
    %3044 = vmatprep.subr.mxu0 0.0
    %3045 = vmatpush1.xpose.msra.mxu0 0.0
    %3046 = vmatprep.subr.mxu0 0.0
    %3047 = vmatpush1.xpose.msra.mxu0 0.0
    %3048 = vmatprep.subr.mxu0 0.0
    %3049 = vmatpush1.xpose.msra.mxu0 0.0
    %3050 = vmatprep.subr.mxu0 0.0
    %3051 = vmatpush1.xpose.msra.mxu0 0.0
    %3052 = vmatprep.subr.mxu0 0.0
    %3053 = vmatpush1.xpose.msra.mxu0 0.0
    %3054 = vmatprep.subr.mxu0 0.0
    %3055 = vmatpush1.xpose.msra.mxu0 0.0
    %3056 = vmatprep.subr.mxu0 0.0
    %3057 = vmatpush1.xpose.msra.mxu0 0.0
    %3058 = vmatprep.subr.mxu0 0.0
    %3059 = vmatpush1.xpose.msra.mxu0 0.0
    %3060 = vmatprep.subr.mxu0 0.0
    %3061 = vmatpush1.xpose.msra.mxu0 0.0
    %3062 = vmatprep.subr.mxu0 0.0
    %3063 = vmatpush1.xpose.msra.mxu0 0.0
    %3064 = vmatprep.subr.mxu0 0.0
    %3065 = vmatpush1.xpose.msra.mxu0 0.0
    %3066 = vmatprep.subr.mxu0 0.0
    %3067 = vmatpush1.xpose.msra.mxu0 0.0
    %3068 = vmatprep.subr.mxu0 0.0
    %3069 = vmatpush1.xpose.msra.mxu0 0.0
    %3070 = vmatprep.subr.mxu0 0.0
    %3071 = vmatpush1.xpose.msra.mxu0 0.0
    %3072 = vmatprep.mubr.f32.mxu0 0.0
    %3073 = vmatmul.mubr.f32.gmra.mrb[0].mxu0 %v3004
    %v3074 = vpop.f32.mrb[0].mxu0
    %v3075 = vadd.f32 0.0, %v3074
    %v3076 = vpop.f32.mrb[0].mxu0
    %3077 = vdwg.mxu0
    %v3078 = vmul.f32 %v3075, 0.25
    %v3079 = vsel %vm302, %v3078, -inf
    %3080 = vmax.xlane.f32.xlu0 %v3079
    %v3081 = vpop.xlane.xlu0 %3080
    %v3082 = vsub.f32 %v3078, %v3081
    %v3083 = vmul.f32 %v3082, 1.442695
    %v3084 = vpow.pop %v3083
    %v3085 = vsel %vm302, %v3084, 0.0
    %3086 = vadd.xlane.f32.xlu0 %v3085
    %v3087 = vpop.xlane.xlu0 %3086
    %v3088 = vrcp.pop %v3087
    %v3089 = vmul.f32 %v3084, %v3088
    %3090 = vrot.lane.b32.xlu0 %v2277, 80
    %v3091 = vpop.permute.xlu0 %3090
    %v3094 = vsel %vm302, %v3089, 0
    %3096 = vmatprep.subr.mxu0 0.0
    %3097 = vmatpush1.msra.mxu0 %v3091
    %3098 = vmatprep.subr.mxu0 0.0
    %3099 = vmatpush1.msra.mxu0 0.0
    %3100 = vmatprep.subr.mxu0 0.0
    %3101 = vmatpush1.msra.mxu0 0.0
    %3102 = vmatprep.subr.mxu0 0.0
    %3103 = vmatpush1.msra.mxu0 0.0
    %3104 = vmatprep.subr.mxu0 0.0
    %3105 = vmatpush1.msra.mxu0 0.0
    %3106 = vmatprep.subr.mxu0 0.0
    %3107 = vmatpush1.msra.mxu0 0.0
    %3108 = vmatprep.subr.mxu0 0.0
    %3109 = vmatpush1.msra.mxu0 0.0
    %3110 = vmatprep.subr.mxu0 0.0
    %3111 = vmatpush1.msra.mxu0 0.0
    %3112 = vmatprep.subr.mxu0 0.0
    %3113 = vmatpush1.msra.mxu0 0.0
    %3114 = vmatprep.subr.mxu0 0.0
    %3115 = vmatpush1.msra.mxu0 0.0
    %3116 = vmatprep.subr.mxu0 0.0
    %3117 = vmatpush1.msra.mxu0 0.0
    %3118 = vmatprep.subr.mxu0 0.0
    %3119 = vmatpush1.msra.mxu0 0.0
    %3120 = vmatprep.subr.mxu0 0.0
    %3121 = vmatpush1.msra.mxu0 0.0
    %3122 = vmatprep.subr.mxu0 0.0
    %3123 = vmatpush1.msra.mxu0 0.0
    %3124 = vmatprep.subr.mxu0 0.0
    %3125 = vmatpush1.msra.mxu0 0.0
    %3126 = vmatprep.subr.mxu0 0.0
    %3127 = vmatpush1.msra.mxu0 0.0
    %3128 = vmatprep.subr.mxu0 0.0
    %3129 = vmatpush1.msra.mxu0 0.0
    %3130 = vmatprep.subr.mxu0 0.0
    %3131 = vmatpush1.msra.mxu0 0.0
    %3132 = vmatprep.subr.mxu0 0.0
    %3133 = vmatpush1.msra.mxu0 0.0
    %3134 = vmatprep.subr.mxu0 0.0
    %3135 = vmatpush1.msra.mxu0 0.0
    %3136 = vmatprep.subr.mxu0 0.0
    %3137 = vmatpush1.msra.mxu0 0.0
    %3138 = vmatprep.subr.mxu0 0.0
    %3139 = vmatpush1.msra.mxu0 0.0
    %3140 = vmatprep.subr.mxu0 0.0
    %3141 = vmatpush1.msra.mxu0 0.0
    %3142 = vmatprep.subr.mxu0 0.0
    %3143 = vmatpush1.msra.mxu0 0.0
    %3144 = vmatprep.subr.mxu0 0.0
    %3145 = vmatpush1.msra.mxu0 0.0
    %3146 = vmatprep.subr.mxu0 0.0
    %3147 = vmatpush1.msra.mxu0 0.0
    %3148 = vmatprep.subr.mxu0 0.0
    %3149 = vmatpush1.msra.mxu0 0.0
    %3150 = vmatprep.subr.mxu0 0.0
    %3151 = vmatpush1.msra.mxu0 0.0
    %3152 = vmatprep.subr.mxu0 0.0
    %3153 = vmatpush1.msra.mxu0 0.0
    %3154 = vmatprep.subr.mxu0 0.0
    %3155 = vmatpush1.msra.mxu0 0.0
    %3156 = vmatprep.subr.mxu0 0.0
    %3157 = vmatpush1.msra.mxu0 0.0
    %3158 = vmatprep.subr.mxu0 0.0
    %3159 = vmatpush1.msra.mxu0 0.0
    %3160 = vmatprep.mubr.f32.mxu0 0.0
    %3161 = vmatmul.mubr.f32.gmra.mrb[0].mxu0 %v3094
    %v3162 = vpop.f32.mrb[0].mxu0
    %v3163 = vadd.f32 0.0, %v3162
    %v3164 = vpop.f32.mrb[0].mxu0
    %3165 = vdwg.mxu0
    %v3167 = vsel %vm226, %v3163, 0
    %3169 = vmatprep.subr.mxu0 0.0
    %3170 = vmatpush1.msra.mxu0 %v2200
    %3171 = vmatprep.subr.mxu0 0.0
    %3172 = vmatpush1.msra.mxu0 %v2201
    %3173 = vmatprep.subr.mxu0 0.0
    %3174 = vmatpush1.msra.mxu0 0.0
    %3175 = vmatprep.subr.mxu0 0.0
    %3176 = vmatpush1.msra.mxu0 0.0
    %3177 = vmatprep.subr.mxu0 0.0
    %3178 = vmatpush1.msra.mxu0 0.0
    %3179 = vmatprep.subr.mxu0 0.0
    %3180 = vmatpush1.msra.mxu0 0.0
    %3181 = vmatprep.subr.mxu0 0.0
    %3182 = vmatpush1.msra.mxu0 0.0
    %3183 = vmatprep.subr.mxu0 0.0
    %3184 = vmatpush1.msra.mxu0 0.0
    %3185 = vmatprep.subr.mxu0 0.0
    %3186 = vmatpush1.msra.mxu0 0.0
    %3187 = vmatprep.subr.mxu0 0.0
    %3188 = vmatpush1.msra.mxu0 0.0
    %3189 = vmatprep.subr.mxu0 0.0
    %3190 = vmatpush1.msra.mxu0 0.0
    %3191 = vmatprep.subr.mxu0 0.0
    %3192 = vmatpush1.msra.mxu0 0.0
    %3193 = vmatprep.subr.mxu0 0.0
    %3194 = vmatpush1.msra.mxu0 0.0
    %3195 = vmatprep.subr.mxu0 0.0
    %3196 = vmatpush1.msra.mxu0 0.0
    %3197 = vmatprep.subr.mxu0 0.0
    %3198 = vmatpush1.msra.mxu0 0.0
    %3199 = vmatprep.subr.mxu0 0.0
    %3200 = vmatpush1.msra.mxu0 0.0
    %3201 = vmatprep.subr.mxu0 0.0
    %3202 = vmatpush1.msra.mxu0 0.0
    %3203 = vmatprep.subr.mxu0 0.0
    %3204 = vmatpush1.msra.mxu0 0.0
    %3205 = vmatprep.subr.mxu0 0.0
    %3206 = vmatpush1.msra.mxu0 0.0
    %3207 = vmatprep.subr.mxu0 0.0
    %3208 = vmatpush1.msra.mxu0 0.0
    %3209 = vmatprep.subr.mxu0 0.0
    %3210 = vmatpush1.msra.mxu0 0.0
    %3211 = vmatprep.subr.mxu0 0.0
    %3212 = vmatpush1.msra.mxu0 0.0
    %3213 = vmatprep.subr.mxu0 0.0
    %3214 = vmatpush1.msra.mxu0 0.0
    %3215 = vmatprep.subr.mxu0 0.0
    %3216 = vmatpush1.msra.mxu0 0.0
    %3217 = vmatprep.subr.mxu0 0.0
    %3218 = vmatpush1.msra.mxu0 0.0
    %3219 = vmatprep.subr.mxu0 0.0
    %3220 = vmatpush1.msra.mxu0 0.0
    %3221 = vmatprep.subr.mxu0 0.0
    %3222 = vmatpush1.msra.mxu0 0.0
    %3223 = vmatprep.subr.mxu0 0.0
    %3224 = vmatpush1.msra.mxu0 0.0
    %3225 = vmatprep.subr.mxu0 0.0
    %3226 = vmatpush1.msra.mxu0 0.0
    %3227 = vmatprep.subr.mxu0 0.0
    %3228 = vmatpush1.msra.mxu0 0.0
    %3229 = vmatprep.subr.mxu0 0.0
    %3230 = vmatpush1.msra.mxu0 0.0
    %3231 = vmatprep.subr.mxu0 0.0
    %3232 = vmatpush1.msra.mxu0 0.0
    %3233 = vmatprep.mubr.f32.mxu0 0.0
    %3234 = vmatmul.mubr.f32.gmra.mrb[0].mxu0 %v3167
    %v3235 = vpop.f32.mrb[0].mxu0
    %v3236 = vadd.f32 0.0, %v3235
    %v3237 = vpop.f32.mrb[0].mxu0
    %3238 = vdwg.mxu0
    %v3239 = vadd.f32 %v2999, %v3236
    %3241 = vrot.lane.b32.xlu0 %v2281, 64
    %v3242 = vpop.permute.xlu0 %3241
    %v3243 = vsel %vm226, %v2281, 0
    %v3245 = vsel %vm226, %v3242, 0
    %3247 = vmatprep.subr.mxu0 0.0
    %3248 = vmatpush1.xpose.msra.mxu0 %v3245
    %3249 = vmatprep.subr.mxu0 0.0
    %3250 = vmatpush1.xpose.msra.mxu0 0.0
    %3251 = vmatprep.subr.mxu0 0.0
    %3252 = vmatpush1.xpose.msra.mxu0 0.0
    %3253 = vmatprep.subr.mxu0 0.0
    %3254 = vmatpush1.xpose.msra.mxu0 0.0
    %3255 = vmatprep.subr.mxu0 0.0
    %3256 = vmatpush1.xpose.msra.mxu0 0.0
    %3257 = vmatprep.subr.mxu0 0.0
    %3258 = vmatpush1.xpose.msra.mxu0 0.0
    %3259 = vmatprep.subr.mxu0 0.0
    %3260 = vmatpush1.xpose.msra.mxu0 0.0
    %3261 = vmatprep.subr.mxu0 0.0
    %3262 = vmatpush1.xpose.msra.mxu0 0.0
    %3263 = vmatprep.subr.mxu0 0.0
    %3264 = vmatpush1.xpose.msra.mxu0 0.0
    %3265 = vmatprep.subr.mxu0 0.0
    %3266 = vmatpush1.xpose.msra.mxu0 0.0
    %3267 = vmatprep.subr.mxu0 0.0
    %3268 = vmatpush1.xpose.msra.mxu0 0.0
    %3269 = vmatprep.subr.mxu0 0.0
    %3270 = vmatpush1.xpose.msra.mxu0 0.0
    %3271 = vmatprep.subr.mxu0 0.0
    %3272 = vmatpush1.xpose.msra.mxu0 0.0
    %3273 = vmatprep.subr.mxu0 0.0
    %3274 = vmatpush1.xpose.msra.mxu0 0.0
    %3275 = vmatprep.subr.mxu0 0.0
    %3276 = vmatpush1.xpose.msra.mxu0 0.0
    %3277 = vmatprep.subr.mxu0 0.0
    %3278 = vmatpush1.xpose.msra.mxu0 0.0
    %3279 = vmatprep.subr.mxu0 0.0
    %3280 = vmatpush1.xpose.msra.mxu0 0.0
    %3281 = vmatprep.subr.mxu0 0.0
    %3282 = vmatpush1.xpose.msra.mxu0 0.0
    %3283 = vmatprep.subr.mxu0 0.0
    %3284 = vmatpush1.xpose.msra.mxu0 0.0
    %3285 = vmatprep.subr.mxu0 0.0
    %3286 = vmatpush1.xpose.msra.mxu0 0.0
    %3287 = vmatprep.subr.mxu0 0.0
    %3288 = vmatpush1.xpose.msra.mxu0 0.0
    %3289 = vmatprep.subr.mxu0 0.0
    %3290 = vmatpush1.xpose.msra.mxu0 0.0
    %3291 = vmatprep.subr.mxu0 0.0
    %3292 = vmatpush1.xpose.msra.mxu0 0.0
    %3293 = vmatprep.subr.mxu0 0.0
    %3294 = vmatpush1.xpose.msra.mxu0 0.0
    %3295 = vmatprep.subr.mxu0 0.0
    %3296 = vmatpush1.xpose.msra.mxu0 0.0
    %3297 = vmatprep.subr.mxu0 0.0
    %3298 = vmatpush1.xpose.msra.mxu0 0.0
    %3299 = vmatprep.subr.mxu0 0.0
    %3300 = vmatpush1.xpose.msra.mxu0 0.0
    %3301 = vmatprep.subr.mxu0 0.0
    %3302 = vmatpush1.xpose.msra.mxu0 0.0
    %3303 = vmatprep.subr.mxu0 0.0
    %3304 = vmatpush1.xpose.msra.mxu0 0.0
    %3305 = vmatprep.subr.mxu0 0.0
    %3306 = vmatpush1.xpose.msra.mxu0 0.0
    %3307 = vmatprep.subr.mxu0 0.0
    %3308 = vmatpush1.xpose.msra.mxu0 0.0
    %3309 = vmatprep.subr.mxu0 0.0
    %3310 = vmatpush1.xpose.msra.mxu0 0.0
    %3311 = vmatprep.mubr.f32.mxu0 0.0
    %3312 = vmatmul.mubr.f32.gmra.mrb[0].mxu0 %v3243
    %v3313 = vpop.f32.mrb[0].mxu0
    %v3314 = vadd.f32 0.0, %v3313
    %v3315 = vpop.f32.mrb[0].mxu0
    %3316 = vdwg.mxu0
    %v3317 = vmul.f32 %v3314, 0.25
    %v3318 = vsel %vm302, %v3317, -inf
    %3319 = vmax.xlane.f32.xlu0 %v3318
    %v3320 = vpop.xlane.xlu0 %3319
    %v3321 = vsub.f32 %v3317, %v3320
    %v3322 = vmul.f32 %v3321, 1.442695
    %v3323 = vpow.pop %v3322
    %v3324 = vsel %vm302, %v3323, 0.0
    %3325 = vadd.xlane.f32.xlu0 %v3324
    %v3326 = vpop.xlane.xlu0 %3325
    %v3327 = vrcp.pop %v3326
    %v3328 = vmul.f32 %v3323, %v3327
    %v3330 = vsel %vm302, %v3328, 0
    %3332 = vmatprep.subr.mxu0 0.0
    %3333 = vmatpush1.msra.mxu0 %v2283
    %3334 = vmatprep.subr.mxu0 0.0
    %3335 = vmatpush1.msra.mxu0 0.0
    %3336 = vmatprep.subr.mxu0 0.0
    %3337 = vmatpush1.msra.mxu0 0.0
    %3338 = vmatprep.subr.mxu0 0.0
    %3339 = vmatpush1.msra.mxu0 0.0
    %3340 = vmatprep.subr.mxu0 0.0
    %3341 = vmatpush1.msra.mxu0 0.0
    %3342 = vmatprep.subr.mxu0 0.0
    %3343 = vmatpush1.msra.mxu0 0.0
    %3344 = vmatprep.subr.mxu0 0.0
    %3345 = vmatpush1.msra.mxu0 0.0
    %3346 = vmatprep.subr.mxu0 0.0
    %3347 = vmatpush1.msra.mxu0 0.0
    %3348 = vmatprep.subr.mxu0 0.0
    %3349 = vmatpush1.msra.mxu0 0.0
    %3350 = vmatprep.subr.mxu0 0.0
    %3351 = vmatpush1.msra.mxu0 0.0
    %3352 = vmatprep.subr.mxu0 0.0
    %3353 = vmatpush1.msra.mxu0 0.0
    %3354 = vmatprep.subr.mxu0 0.0
    %3355 = vmatpush1.msra.mxu0 0.0
    %3356 = vmatprep.subr.mxu0 0.0
    %3357 = vmatpush1.msra.mxu0 0.0
    %3358 = vmatprep.subr.mxu0 0.0
    %3359 = vmatpush1.msra.mxu0 0.0
    %3360 = vmatprep.subr.mxu0 0.0
    %3361 = vmatpush1.msra.mxu0 0.0
    %3362 = vmatprep.subr.mxu0 0.0
    %3363 = vmatpush1.msra.mxu0 0.0
    %3364 = vmatprep.subr.mxu0 0.0
    %3365 = vmatpush1.msra.mxu0 0.0
    %3366 = vmatprep.subr.mxu0 0.0
    %3367 = vmatpush1.msra.mxu0 0.0
    %3368 = vmatprep.subr.mxu0 0.0
    %3369 = vmatpush1.msra.mxu0 0.0
    %3370 = vmatprep.subr.mxu0 0.0
    %3371 = vmatpush1.msra.mxu0 0.0
    %3372 = vmatprep.subr.mxu0 0.0
    %3373 = vmatpush1.msra.mxu0 0.0
    %3374 = vmatprep.subr.mxu0 0.0
    %3375 = vmatpush1.msra.mxu0 0.0
    %3376 = vmatprep.subr.mxu0 0.0
    %3377 = vmatpush1.msra.mxu0 0.0
    %3378 = vmatprep.subr.mxu0 0.0
    %3379 = vmatpush1.msra.mxu0 0.0
    %3380 = vmatprep.subr.mxu0 0.0
    %3381 = vmatpush1.msra.mxu0 0.0
    %3382 = vmatprep.subr.mxu0 0.0
    %3383 = vmatpush1.msra.mxu0 0.0
    %3384 = vmatprep.subr.mxu0 0.0
    %3385 = vmatpush1.msra.mxu0 0.0
    %3386 = vmatprep.subr.mxu0 0.0
    %3387 = vmatpush1.msra.mxu0 0.0
    %3388 = vmatprep.subr.mxu0 0.0
    %3389 = vmatpush1.msra.mxu0 0.0
    %3390 = vmatprep.subr.mxu0 0.0
    %3391 = vmatpush1.msra.mxu0 0.0
    %3392 = vmatprep.subr.mxu0 0.0
    %3393 = vmatpush1.msra.mxu0 0.0
    %3394 = vmatprep.subr.mxu0 0.0
    %3395 = vmatpush1.msra.mxu0 0.0
    %3396 = vmatprep.mubr.f32.mxu0 0.0
    %3397 = vmatmul.mubr.f32.gmra.mrb[0].mxu0 %v3330
    %v3398 = vpop.f32.mrb[0].mxu0
    %v3399 = vadd.f32 0.0, %v3398
    %v3400 = vpop.f32.mrb[0].mxu0
    %3401 = vdwg.mxu0
    %3402 = vrot.lane.b32.xlu0 %v2281, 112
    %v3403 = vpop.permute.xlu0 %3402
    %3404 = vrot.lane.b32.xlu0 %v2281, 48
    %v3405 = vpop.permute.xlu0 %3404
    %v3406 = vsel %vm226, %v3403, 0
    %v3408 = vsel %vm226, %v3405, 0
    %3410 = vmatprep.subr.mxu0 0.0
    %3411 = vmatpush1.xpose.msra.mxu0 %v3408
    %3412 = vmatprep.subr.mxu0 0.0
    %3413 = vmatpush1.xpose.msra.mxu0 0.0
    %3414 = vmatprep.subr.mxu0 0.0
    %3415 = vmatpush1.xpose.msra.mxu0 0.0
    %3416 = vmatprep.subr.mxu0 0.0
    %3417 = vmatpush1.xpose.msra.mxu0 0.0
    %3418 = vmatprep.subr.mxu0 0.0
    %3419 = vmatpush1.xpose.msra.mxu0 0.0
    %3420 = vmatprep.subr.mxu0 0.0
    %3421 = vmatpush1.xpose.msra.mxu0 0.0
    %3422 = vmatprep.subr.mxu0 0.0
    %3423 = vmatpush1.xpose.msra.mxu0 0.0
    %3424 = vmatprep.subr.mxu0 0.0
    %3425 = vmatpush1.xpose.msra.mxu0 0.0
    %3426 = vmatprep.subr.mxu0 0.0
    %3427 = vmatpush1.xpose.msra.mxu0 0.0
    %3428 = vmatprep.subr.mxu0 0.0
    %3429 = vmatpush1.xpose.msra.mxu0 0.0
    %3430 = vmatprep.subr.mxu0 0.0
    %3431 = vmatpush1.xpose.msra.mxu0 0.0
    %3432 = vmatprep.subr.mxu0 0.0
    %3433 = vmatpush1.xpose.msra.mxu0 0.0
    %3434 = vmatprep.subr.mxu0 0.0
    %3435 = vmatpush1.xpose.msra.mxu0 0.0
    %3436 = vmatprep.subr.mxu0 0.0
    %3437 = vmatpush1.xpose.msra.mxu0 0.0
    %3438 = vmatprep.subr.mxu0 0.0
    %3439 = vmatpush1.xpose.msra.mxu0 0.0
    %3440 = vmatprep.subr.mxu0 0.0
    %3441 = vmatpush1.xpose.msra.mxu0 0.0
    %3442 = vmatprep.subr.mxu0 0.0
    %3443 = vmatpush1.xpose.msra.mxu0 0.0
    %3444 = vmatprep.subr.mxu0 0.0
    %3445 = vmatpush1.xpose.msra.mxu0 0.0
    %3446 = vmatprep.subr.mxu0 0.0
    %3447 = vmatpush1.xpose.msra.mxu0 0.0
    %3448 = vmatprep.subr.mxu0 0.0
    %3449 = vmatpush1.xpose.msra.mxu0 0.0
    %3450 = vmatprep.subr.mxu0 0.0
    %3451 = vmatpush1.xpose.msra.mxu0 0.0
    %3452 = vmatprep.subr.mxu0 0.0
    %3453 = vmatpush1.xpose.msra.mxu0 0.0
    %3454 = vmatprep.subr.mxu0 0.0
    %3455 = vmatpush1.xpose.msra.mxu0 0.0
    %3456 = vmatprep.subr.mxu0 0.0
    %3457 = vmatpush1.xpose.msra.mxu0 0.0
    %3458 = vmatprep.subr.mxu0 0.0
    %3459 = vmatpush1.xpose.msra.mxu0 0.0
    %3460 = vmatprep.subr.mxu0 0.0
    %3461 = vmatpush1.xpose.msra.mxu0 0.0
    %3462 = vmatprep.subr.mxu0 0.0
    %3463 = vmatpush1.xpose.msra.mxu0 0.0
    %3464 = vmatprep.subr.mxu0 0.0
    %3465 = vmatpush1.xpose.msra.mxu0 0.0
    %3466 = vmatprep.subr.mxu0 0.0
    %3467 = vmatpush1.xpose.msra.mxu0 0.0
    %3468 = vmatprep.subr.mxu0 0.0
    %3469 = vmatpush1.xpose.msra.mxu0 0.0
    %3470 = vmatprep.subr.mxu0 0.0
    %3471 = vmatpush1.xpose.msra.mxu0 0.0
    %3472 = vmatprep.subr.mxu0 0.0
    %3473 = vmatpush1.xpose.msra.mxu0 0.0
    %3474 = vmatprep.mubr.f32.mxu0 0.0
    %3475 = vmatmul.mubr.f32.gmra.mrb[0].mxu0 %v3406
    %v3476 = vpop.f32.mrb[0].mxu0
    %v3477 = vadd.f32 0.0, %v3476
    %v3478 = vpop.f32.mrb[0].mxu0
    %3479 = vdwg.mxu0
    %v3480 = vmul.f32 %v3477, 0.25
    %v3481 = vsel %vm302, %v3480, -inf
    %3482 = vmax.xlane.f32.xlu0 %v3481
    %v3483 = vpop.xlane.xlu0 %3482
    %v3484 = vsub.f32 %v3480, %v3483
    %v3485 = vmul.f32 %v3484, 1.442695
    %v3486 = vpow.pop %v3485
    %v3487 = vsel %vm302, %v3486, 0.0
    %3488 = vadd.xlane.f32.xlu0 %v3487
    %v3489 = vpop.xlane.xlu0 %3488
    %v3490 = vrcp.pop %v3489
    %v3491 = vmul.f32 %v3486, %v3490
    %3493 = vrot.lane.b32.xlu0 %v2283, 112
    %v3494 = vpop.permute.xlu0 %3493
    %v3497 = vsel %vm302, %v3491, 0
    %3499 = vmatprep.subr.mxu0 0.0
    %3500 = vmatpush1.msra.mxu0 %v3494
    %3501 = vmatprep.subr.mxu0 0.0
    %3502 = vmatpush1.msra.mxu0 0.0
    %3503 = vmatprep.subr.mxu0 0.0
    %3504 = vmatpush1.msra.mxu0 0.0
    %3505 = vmatprep.subr.mxu0 0.0
    %3506 = vmatpush1.msra.mxu0 0.0
    %3507 = vmatprep.subr.mxu0 0.0
    %3508 = vmatpush1.msra.mxu0 0.0
    %3509 = vmatprep.subr.mxu0 0.0
    %3510 = vmatpush1.msra.mxu0 0.0
    %3511 = vmatprep.subr.mxu0 0.0
    %3512 = vmatpush1.msra.mxu0 0.0
    %3513 = vmatprep.subr.mxu0 0.0
    %3514 = vmatpush1.msra.mxu0 0.0
    %3515 = vmatprep.subr.mxu0 0.0
    %3516 = vmatpush1.msra.mxu0 0.0
    %3517 = vmatprep.subr.mxu0 0.0
    %3518 = vmatpush1.msra.mxu0 0.0
    %3519 = vmatprep.subr.mxu0 0.0
    %3520 = vmatpush1.msra.mxu0 0.0
    %3521 = vmatprep.subr.mxu0 0.0
    %3522 = vmatpush1.msra.mxu0 0.0
    %3523 = vmatprep.subr.mxu0 0.0
    %3524 = vmatpush1.msra.mxu0 0.0
    %3525 = vmatprep.subr.mxu0 0.0
    %3526 = vmatpush1.msra.mxu0 0.0
    %3527 = vmatprep.subr.mxu0 0.0
    %3528 = vmatpush1.msra.mxu0 0.0
    %3529 = vmatprep.subr.mxu0 0.0
    %3530 = vmatpush1.msra.mxu0 0.0
    %3531 = vmatprep.subr.mxu0 0.0
    %3532 = vmatpush1.msra.mxu0 0.0
    %3533 = vmatprep.subr.mxu0 0.0
    %3534 = vmatpush1.msra.mxu0 0.0
    %3535 = vmatprep.subr.mxu0 0.0
    %3536 = vmatpush1.msra.mxu0 0.0
    %3537 = vmatprep.subr.mxu0 0.0
    %3538 = vmatpush1.msra.mxu0 0.0
    %3539 = vmatprep.subr.mxu0 0.0
    %3540 = vmatpush1.msra.mxu0 0.0
    %3541 = vmatprep.subr.mxu0 0.0
    %3542 = vmatpush1.msra.mxu0 0.0
    %3543 = vmatprep.subr.mxu0 0.0
    %3544 = vmatpush1.msra.mxu0 0.0
    %3545 = vmatprep.subr.mxu0 0.0
    %3546 = vmatpush1.msra.mxu0 0.0
    %3547 = vmatprep.subr.mxu0 0.0
    %3548 = vmatpush1.msra.mxu0 0.0
    %3549 = vmatprep.subr.mxu0 0.0
    %3550 = vmatpush1.msra.mxu0 0.0
    %3551 = vmatprep.subr.mxu0 0.0
    %3552 = vmatpush1.msra.mxu0 0.0
    %3553 = vmatprep.subr.mxu0 0.0
    %3554 = vmatpush1.msra.mxu0 0.0
    %3555 = vmatprep.subr.mxu0 0.0
    %3556 = vmatpush1.msra.mxu0 0.0
    %3557 = vmatprep.subr.mxu0 0.0
    %3558 = vmatpush1.msra.mxu0 0.0
    %3559 = vmatprep.subr.mxu0 0.0
    %3560 = vmatpush1.msra.mxu0 0.0
    %3561 = vmatprep.subr.mxu0 0.0
    %3562 = vmatpush1.msra.mxu0 0.0
    %3563 = vmatprep.mubr.f32.mxu0 0.0
    %3564 = vmatmul.mubr.f32.gmra.mrb[0].mxu0 %v3497
    %v3565 = vpop.f32.mrb[0].mxu0
    %v3566 = vadd.f32 0.0, %v3565
    %v3567 = vpop.f32.mrb[0].mxu0
    %3568 = vdwg.mxu0
    %v3570 = vsel %vm226, %v3566, 0
    %3572 = vmatprep.subr.mxu0 0.0
    %3573 = vmatpush1.msra.mxu0 %v2196
    %3574 = vmatprep.subr.mxu0 0.0
    %3575 = vmatpush1.msra.mxu0 %v2197
    %3576 = vmatprep.subr.mxu0 0.0
    %3577 = vmatpush1.msra.mxu0 0.0
    %3578 = vmatprep.subr.mxu0 0.0
    %3579 = vmatpush1.msra.mxu0 0.0
    %3580 = vmatprep.subr.mxu0 0.0
    %3581 = vmatpush1.msra.mxu0 0.0
    %3582 = vmatprep.subr.mxu0 0.0
    %3583 = vmatpush1.msra.mxu0 0.0
    %3584 = vmatprep.subr.mxu0 0.0
    %3585 = vmatpush1.msra.mxu0 0.0
    %3586 = vmatprep.subr.mxu0 0.0
    %3587 = vmatpush1.msra.mxu0 0.0
    %3588 = vmatprep.subr.mxu0 0.0
    %3589 = vmatpush1.msra.mxu0 0.0
    %3590 = vmatprep.subr.mxu0 0.0
    %3591 = vmatpush1.msra.mxu0 0.0
    %3592 = vmatprep.subr.mxu0 0.0
    %3593 = vmatpush1.msra.mxu0 0.0
    %3594 = vmatprep.subr.mxu0 0.0
    %3595 = vmatpush1.msra.mxu0 0.0
    %3596 = vmatprep.subr.mxu0 0.0
    %3597 = vmatpush1.msra.mxu0 0.0
    %3598 = vmatprep.subr.mxu0 0.0
    %3599 = vmatpush1.msra.mxu0 0.0
    %3600 = vmatprep.subr.mxu0 0.0
    %3601 = vmatpush1.msra.mxu0 0.0
    %3602 = vmatprep.subr.mxu0 0.0
    %3603 = vmatpush1.msra.mxu0 0.0
    %3604 = vmatprep.subr.mxu0 0.0
    %3605 = vmatpush1.msra.mxu0 0.0
    %3606 = vmatprep.subr.mxu0 0.0
    %3607 = vmatpush1.msra.mxu0 0.0
    %3608 = vmatprep.subr.mxu0 0.0
    %3609 = vmatpush1.msra.mxu0 0.0
    %3610 = vmatprep.subr.mxu0 0.0
    %3611 = vmatpush1.msra.mxu0 0.0
    %3612 = vmatprep.subr.mxu0 0.0
    %3613 = vmatpush1.msra.mxu0 0.0
    %3614 = vmatprep.subr.mxu0 0.0
    %3615 = vmatpush1.msra.mxu0 0.0
    %3616 = vmatprep.subr.mxu0 0.0
    %3617 = vmatpush1.msra.mxu0 0.0
    %3618 = vmatprep.subr.mxu0 0.0
    %3619 = vmatpush1.msra.mxu0 0.0
    %3620 = vmatprep.subr.mxu0 0.0
    %3621 = vmatpush1.msra.mxu0 0.0
    %3622 = vmatprep.subr.mxu0 0.0
    %3623 = vmatpush1.msra.mxu0 0.0
    %3624 = vmatprep.subr.mxu0 0.0
    %3625 = vmatpush1.msra.mxu0 0.0
    %3626 = vmatprep.subr.mxu0 0.0
    %3627 = vmatpush1.msra.mxu0 0.0
    %3628 = vmatprep.subr.mxu0 0.0
    %3629 = vmatpush1.msra.mxu0 0.0
    %3630 = vmatprep.subr.mxu0 0.0
    %3631 = vmatpush1.msra.mxu0 0.0
    %3632 = vmatprep.subr.mxu0 0.0
    %3633 = vmatpush1.msra.mxu0 0.0
    %3634 = vmatprep.subr.mxu0 0.0
    %3635 = vmatpush1.msra.mxu0 0.0
    %3636 = vmatprep.mubr.f32.mxu0 0.0
    %3637 = vmatmul.mubr.f32.gmra.mrb[0].mxu0 %v3570
    %v3638 = vpop.f32.mrb[0].mxu0
    %v3639 = vadd.f32 0.0, %v3638
    %v3640 = vpop.f32.mrb[0].mxu0
    %3641 = vdwg.mxu0
    %v3643 = vsel %vm226, %v3399, 0
    %3645 = vmatprep.subr.mxu0 0.0
    %3646 = vmatpush1.msra.mxu0 %v2194
    %3647 = vmatprep.subr.mxu0 0.0
    %3648 = vmatpush1.msra.mxu0 %v2195
    %3649 = vmatprep.subr.mxu0 0.0
    %3650 = vmatpush1.msra.mxu0 0.0
    %3651 = vmatprep.subr.mxu0 0.0
    %3652 = vmatpush1.msra.mxu0 0.0
    %3653 = vmatprep.subr.mxu0 0.0
    %3654 = vmatpush1.msra.mxu0 0.0
    %3655 = vmatprep.subr.mxu0 0.0
    %3656 = vmatpush1.msra.mxu0 0.0
    %3657 = vmatprep.subr.mxu0 0.0
    %3658 = vmatpush1.msra.mxu0 0.0
    %3659 = vmatprep.subr.mxu0 0.0
    %3660 = vmatpush1.msra.mxu0 0.0
    %3661 = vmatprep.subr.mxu0 0.0
    %3662 = vmatpush1.msra.mxu0 0.0
    %3663 = vmatprep.subr.mxu0 0.0
    %3664 = vmatpush1.msra.mxu0 0.0
    %3665 = vmatprep.subr.mxu0 0.0
    %3666 = vmatpush1.msra.mxu0 0.0
    %3667 = vmatprep.subr.mxu0 0.0
    %3668 = vmatpush1.msra.mxu0 0.0
    %3669 = vmatprep.subr.mxu0 0.0
    %3670 = vmatpush1.msra.mxu0 0.0
    %3671 = vmatprep.subr.mxu0 0.0
    %3672 = vmatpush1.msra.mxu0 0.0
    %3673 = vmatprep.subr.mxu0 0.0
    %3674 = vmatpush1.msra.mxu0 0.0
    %3675 = vmatprep.subr.mxu0 0.0
    %3676 = vmatpush1.msra.mxu0 0.0
    %3677 = vmatprep.subr.mxu0 0.0
    %3678 = vmatpush1.msra.mxu0 0.0
    %3679 = vmatprep.subr.mxu0 0.0
    %3680 = vmatpush1.msra.mxu0 0.0
    %3681 = vmatprep.subr.mxu0 0.0
    %3682 = vmatpush1.msra.mxu0 0.0
    %3683 = vmatprep.subr.mxu0 0.0
    %3684 = vmatpush1.msra.mxu0 0.0
    %3685 = vmatprep.subr.mxu0 0.0
    %3686 = vmatpush1.msra.mxu0 0.0
    %3687 = vmatprep.subr.mxu0 0.0
    %3688 = vmatpush1.msra.mxu0 0.0
    %3689 = vmatprep.subr.mxu0 0.0
    %3690 = vmatpush1.msra.mxu0 0.0
    %3691 = vmatprep.subr.mxu0 0.0
    %3692 = vmatpush1.msra.mxu0 0.0
    %3693 = vmatprep.subr.mxu0 0.0
    %3694 = vmatpush1.msra.mxu0 0.0
    %3695 = vmatprep.subr.mxu0 0.0
    %3696 = vmatpush1.msra.mxu0 0.0
    %3697 = vmatprep.subr.mxu0 0.0
    %3698 = vmatpush1.msra.mxu0 0.0
    %3699 = vmatprep.subr.mxu0 0.0
    %3700 = vmatpush1.msra.mxu0 0.0
    %3701 = vmatprep.subr.mxu0 0.0
    %3702 = vmatpush1.msra.mxu0 0.0
    %3703 = vmatprep.subr.mxu0 0.0
    %3704 = vmatpush1.msra.mxu0 0.0
    %3705 = vmatprep.subr.mxu0 0.0
    %3706 = vmatpush1.msra.mxu0 0.0
    %3707 = vmatprep.subr.mxu0 0.0
    %3708 = vmatpush1.msra.mxu0 0.0
    %3709 = vmatprep.mubr.f32.mxu0 0.0
    %3710 = vmatmul.mubr.f32.gmra.mrb[0].mxu0 %v3643
    %v3711 = vpop.f32.mrb[0].mxu0
    %v3712 = vadd.f32 %v3639, %v3711
    %v3713 = vpop.f32.mrb[0].mxu0
    %3714 = vdwg.mxu0
    %3715 = vrot.lane.b32.xlu0 %v2281, 96
    %v3716 = vpop.permute.xlu0 %3715
    %3717 = vrot.lane.b32.xlu0 %v2281, 32
    %v3718 = vpop.permute.xlu0 %3717
    %v3719 = vsel %vm226, %v3716, 0
    %v3721 = vsel %vm226, %v3718, 0
    %3723 = vmatprep.subr.mxu0 0.0
    %3724 = vmatpush1.xpose.msra.mxu0 %v3721
    %3725 = vmatprep.subr.mxu0 0.0
    %3726 = vmatpush1.xpose.msra.mxu0 0.0
    %3727 = vmatprep.subr.mxu0 0.0
    %3728 = vmatpush1.xpose.msra.mxu0 0.0
    %3729 = vmatprep.subr.mxu0 0.0
    %3730 = vmatpush1.xpose.msra.mxu0 0.0
    %3731 = vmatprep.subr.mxu0 0.0
    %3732 = vmatpush1.xpose.msra.mxu0 0.0
    %3733 = vmatprep.subr.mxu0 0.0
    %3734 = vmatpush1.xpose.msra.mxu0 0.0
    %3735 = vmatprep.subr.mxu0 0.0
    %3736 = vmatpush1.xpose.msra.mxu0 0.0
    %3737 = vmatprep.subr.mxu0 0.0
    %3738 = vmatpush1.xpose.msra.mxu0 0.0
    %3739 = vmatprep.subr.mxu0 0.0
    %3740 = vmatpush1.xpose.msra.mxu0 0.0
    %3741 = vmatprep.subr.mxu0 0.0
    %3742 = vmatpush1.xpose.msra.mxu0 0.0
    %3743 = vmatprep.subr.mxu0 0.0
    %3744 = vmatpush1.xpose.msra.mxu0 0.0
    %3745 = vmatprep.subr.mxu0 0.0
    %3746 = vmatpush1.xpose.msra.mxu0 0.0
    %3747 = vmatprep.subr.mxu0 0.0
    %3748 = vmatpush1.xpose.msra.mxu0 0.0
    %3749 = vmatprep.subr.mxu0 0.0
    %3750 = vmatpush1.xpose.msra.mxu0 0.0
    %3751 = vmatprep.subr.mxu0 0.0
    %3752 = vmatpush1.xpose.msra.mxu0 0.0
    %3753 = vmatprep.subr.mxu0 0.0
    %3754 = vmatpush1.xpose.msra.mxu0 0.0
    %3755 = vmatprep.subr.mxu0 0.0
    %3756 = vmatpush1.xpose.msra.mxu0 0.0
    %3757 = vmatprep.subr.mxu0 0.0
    %3758 = vmatpush1.xpose.msra.mxu0 0.0
    %3759 = vmatprep.subr.mxu0 0.0
    %3760 = vmatpush1.xpose.msra.mxu0 0.0
    %3761 = vmatprep.subr.mxu0 0.0
    %3762 = vmatpush1.xpose.msra.mxu0 0.0
    %3763 = vmatprep.subr.mxu0 0.0
    %3764 = vmatpush1.xpose.msra.mxu0 0.0
    %3765 = vmatprep.subr.mxu0 0.0
    %3766 = vmatpush1.xpose.msra.mxu0 0.0
    %3767 = vmatprep.subr.mxu0 0.0
    %3768 = vmatpush1.xpose.msra.mxu0 0.0
    %3769 = vmatprep.subr.mxu0 0.0
    %3770 = vmatpush1.xpose.msra.mxu0 0.0
    %3771 = vmatprep.subr.mxu0 0.0
    %3772 = vmatpush1.xpose.msra.mxu0 0.0
    %3773 = vmatprep.subr.mxu0 0.0
    %3774 = vmatpush1.xpose.msra.mxu0 0.0
    %3775 = vmatprep.subr.mxu0 0.0
    %3776 = vmatpush1.xpose.msra.mxu0 0.0
    %3777 = vmatprep.subr.mxu0 0.0
    %3778 = vmatpush1.xpose.msra.mxu0 0.0
    %3779 = vmatprep.subr.mxu0 0.0
    %3780 = vmatpush1.xpose.msra.mxu0 0.0
    %3781 = vmatprep.subr.mxu0 0.0
    %3782 = vmatpush1.xpose.msra.mxu0 0.0
    %3783 = vmatprep.subr.mxu0 0.0
    %3784 = vmatpush1.xpose.msra.mxu0 0.0
    %3785 = vmatprep.subr.mxu0 0.0
    %3786 = vmatpush1.xpose.msra.mxu0 0.0
    %3787 = vmatprep.mubr.f32.mxu0 0.0
    %3788 = vmatmul.mubr.f32.gmra.mrb[0].mxu0 %v3719
    %v3789 = vpop.f32.mrb[0].mxu0
    %v3790 = vadd.f32 0.0, %v3789
    %v3791 = vpop.f32.mrb[0].mxu0
    %3792 = vdwg.mxu0
    %v3793 = vmul.f32 %v3790, 0.25
    %v3794 = vsel %vm302, %v3793, -inf
    %3795 = vmax.xlane.f32.xlu0 %v3794
    %v3796 = vpop.xlane.xlu0 %3795
    %v3797 = vsub.f32 %v3793, %v3796
    %v3798 = vmul.f32 %v3797, 1.442695
    %v3799 = vpow.pop %v3798
    %v3800 = vsel %vm302, %v3799, 0.0
    %3801 = vadd.xlane.f32.xlu0 %v3800
    %v3802 = vpop.xlane.xlu0 %3801
    %v3803 = vrcp.pop %v3802
    %v3804 = vmul.f32 %v3799, %v3803
    %3805 = vrot.lane.b32.xlu0 %v2283, 96
    %v3806 = vpop.permute.xlu0 %3805
    %v3809 = vsel %vm302, %v3804, 0
    %3811 = vmatprep.subr.mxu0 0.0
    %3812 = vmatpush1.msra.mxu0 %v3806
    %3813 = vmatprep.subr.mxu0 0.0
    %3814 = vmatpush1.msra.mxu0 0.0
    %3815 = vmatprep.subr.mxu0 0.0
    %3816 = vmatpush1.msra.mxu0 0.0
    %3817 = vmatprep.subr.mxu0 0.0
    %3818 = vmatpush1.msra.mxu0 0.0
    %3819 = vmatprep.subr.mxu0 0.0
    %3820 = vmatpush1.msra.mxu0 0.0
    %3821 = vmatprep.subr.mxu0 0.0
    %3822 = vmatpush1.msra.mxu0 0.0
    %3823 = vmatprep.subr.mxu0 0.0
    %3824 = vmatpush1.msra.mxu0 0.0
    %3825 = vmatprep.subr.mxu0 0.0
    %3826 = vmatpush1.msra.mxu0 0.0
    %3827 = vmatprep.subr.mxu0 0.0
    %3828 = vmatpush1.msra.mxu0 0.0
    %3829 = vmatprep.subr.mxu0 0.0
    %3830 = vmatpush1.msra.mxu0 0.0
    %3831 = vmatprep.subr.mxu0 0.0
    %3832 = vmatpush1.msra.mxu0 0.0
    %3833 = vmatprep.subr.mxu0 0.0
    %3834 = vmatpush1.msra.mxu0 0.0
    %3835 = vmatprep.subr.mxu0 0.0
    %3836 = vmatpush1.msra.mxu0 0.0
    %3837 = vmatprep.subr.mxu0 0.0
    %3838 = vmatpush1.msra.mxu0 0.0
    %3839 = vmatprep.subr.mxu0 0.0
    %3840 = vmatpush1.msra.mxu0 0.0
    %3841 = vmatprep.subr.mxu0 0.0
    %3842 = vmatpush1.msra.mxu0 0.0
    %3843 = vmatprep.subr.mxu0 0.0
    %3844 = vmatpush1.msra.mxu0 0.0
    %3845 = vmatprep.subr.mxu0 0.0
    %3846 = vmatpush1.msra.mxu0 0.0
    %3847 = vmatprep.subr.mxu0 0.0
    %3848 = vmatpush1.msra.mxu0 0.0
    %3849 = vmatprep.subr.mxu0 0.0
    %3850 = vmatpush1.msra.mxu0 0.0
    %3851 = vmatprep.subr.mxu0 0.0
    %3852 = vmatpush1.msra.mxu0 0.0
    %3853 = vmatprep.subr.mxu0 0.0
    %3854 = vmatpush1.msra.mxu0 0.0
    %3855 = vmatprep.subr.mxu0 0.0
    %3856 = vmatpush1.msra.mxu0 0.0
    %3857 = vmatprep.subr.mxu0 0.0
    %3858 = vmatpush1.msra.mxu0 0.0
    %3859 = vmatprep.subr.mxu0 0.0
    %3860 = vmatpush1.msra.mxu0 0.0
    %3861 = vmatprep.subr.mxu0 0.0
    %3862 = vmatpush1.msra.mxu0 0.0
    %3863 = vmatprep.subr.mxu0 0.0
    %3864 = vmatpush1.msra.mxu0 0.0
    %3865 = vmatprep.subr.mxu0 0.0
    %3866 = vmatpush1.msra.mxu0 0.0
    %3867 = vmatprep.subr.mxu0 0.0
    %3868 = vmatpush1.msra.mxu0 0.0
    %3869 = vmatprep.subr.mxu0 0.0
    %3870 = vmatpush1.msra.mxu0 0.0
    %3871 = vmatprep.subr.mxu0 0.0
    %3872 = vmatpush1.msra.mxu0 0.0
    %3873 = vmatprep.subr.mxu0 0.0
    %3874 = vmatpush1.msra.mxu0 0.0
    %3875 = vmatprep.mubr.f32.mxu0 0.0
    %3876 = vmatmul.mubr.f32.gmra.mrb[0].mxu0 %v3809
    %v3877 = vpop.f32.mrb[0].mxu0
    %v3878 = vadd.f32 0.0, %v3877
    %v3879 = vpop.f32.mrb[0].mxu0
    %3880 = vdwg.mxu0
    %v3882 = vsel %vm226, %v3878, 0
    %3884 = vmatprep.subr.mxu0 0.0
    %3885 = vmatpush1.msra.mxu0 %v2198
    %3886 = vmatprep.subr.mxu0 0.0
    %3887 = vmatpush1.msra.mxu0 %v2199
    %3888 = vmatprep.subr.mxu0 0.0
    %3889 = vmatpush1.msra.mxu0 0.0
    %3890 = vmatprep.subr.mxu0 0.0
    %3891 = vmatpush1.msra.mxu0 0.0
    %3892 = vmatprep.subr.mxu0 0.0
    %3893 = vmatpush1.msra.mxu0 0.0
    %3894 = vmatprep.subr.mxu0 0.0
    %3895 = vmatpush1.msra.mxu0 0.0
    %3896 = vmatprep.subr.mxu0 0.0
    %3897 = vmatpush1.msra.mxu0 0.0
    %3898 = vmatprep.subr.mxu0 0.0
    %3899 = vmatpush1.msra.mxu0 0.0
    %3900 = vmatprep.subr.mxu0 0.0
    %3901 = vmatpush1.msra.mxu0 0.0
    %3902 = vmatprep.subr.mxu0 0.0
    %3903 = vmatpush1.msra.mxu0 0.0
    %3904 = vmatprep.subr.mxu0 0.0
    %3905 = vmatpush1.msra.mxu0 0.0
    %3906 = vmatprep.subr.mxu0 0.0
    %3907 = vmatpush1.msra.mxu0 0.0
    %3908 = vmatprep.subr.mxu0 0.0
    %3909 = vmatpush1.msra.mxu0 0.0
    %3910 = vmatprep.subr.mxu0 0.0
    %3911 = vmatpush1.msra.mxu0 0.0
    %3912 = vmatprep.subr.mxu0 0.0
    %3913 = vmatpush1.msra.mxu0 0.0
    %3914 = vmatprep.subr.mxu0 0.0
    %3915 = vmatpush1.msra.mxu0 0.0
    %3916 = vmatprep.subr.mxu0 0.0
    %3917 = vmatpush1.msra.mxu0 0.0
    %3918 = vmatprep.subr.mxu0 0.0
    %3919 = vmatpush1.msra.mxu0 0.0
    %3920 = vmatprep.subr.mxu0 0.0
    %3921 = vmatpush1.msra.mxu0 0.0
    %3922 = vmatprep.subr.mxu0 0.0
    %3923 = vmatpush1.msra.mxu0 0.0
    %3924 = vmatprep.subr.mxu0 0.0
    %3925 = vmatpush1.msra.mxu0 0.0
    %3926 = vmatprep.subr.mxu0 0.0
    %3927 = vmatpush1.msra.mxu0 0.0
    %3928 = vmatprep.subr.mxu0 0.0
    %3929 = vmatpush1.msra.mxu0 0.0
    %3930 = vmatprep.subr.mxu0 0.0
    %3931 = vmatpush1.msra.mxu0 0.0
    %3932 = vmatprep.subr.mxu0 0.0
    %3933 = vmatpush1.msra.mxu0 0.0
    %3934 = vmatprep.subr.mxu0 0.0
    %3935 = vmatpush1.msra.mxu0 0.0
    %3936 = vmatprep.subr.mxu0 0.0
    %3937 = vmatpush1.msra.mxu0 0.0
    %3938 = vmatprep.subr.mxu0 0.0
    %3939 = vmatpush1.msra.mxu0 0.0
    %3940 = vmatprep.subr.mxu0 0.0
    %3941 = vmatpush1.msra.mxu0 0.0
    %3942 = vmatprep.subr.mxu0 0.0
    %3943 = vmatpush1.msra.mxu0 0.0
    %3944 = vmatprep.subr.mxu0 0.0
    %3945 = vmatpush1.msra.mxu0 0.0
    %3946 = vmatprep.subr.mxu0 0.0
    %3947 = vmatpush1.msra.mxu0 0.0
    %3948 = vmatprep.mubr.f32.mxu0 0.0
    %3949 = vmatmul.mubr.f32.gmra.mrb[0].mxu0 %v3882
    %v3950 = vpop.f32.mrb[0].mxu0
    %v3951 = vadd.f32 0.0, %v3950
    %v3952 = vpop.f32.mrb[0].mxu0
    %3953 = vdwg.mxu0
    %v3954 = vadd.f32 %v3712, %v3951
    %3955 = vrot.lane.b32.xlu0 %v2281, 80
    %v3956 = vpop.permute.xlu0 %3955
    %3957 = vrot.lane.b32.xlu0 %v2281, 16
    %v3958 = vpop.permute.xlu0 %3957
    %v3959 = vsel %vm226, %v3956, 0
    %v3961 = vsel %vm226, %v3958, 0
    %3963 = vmatprep.subr.mxu0 0.0
    %3964 = vmatpush1.xpose.msra.mxu0 %v3961
    %3965 = vmatprep.subr.mxu0 0.0
    %3966 = vmatpush1.xpose.msra.mxu0 0.0
    %3967 = vmatprep.subr.mxu0 0.0
    %3968 = vmatpush1.xpose.msra.mxu0 0.0
    %3969 = vmatprep.subr.mxu0 0.0
    %3970 = vmatpush1.xpose.msra.mxu0 0.0
    %3971 = vmatprep.subr.mxu0 0.0
    %3972 = vmatpush1.xpose.msra.mxu0 0.0
    %3973 = vmatprep.subr.mxu0 0.0
    %3974 = vmatpush1.xpose.msra.mxu0 0.0
    %3975 = vmatprep.subr.mxu0 0.0
    %3976 = vmatpush1.xpose.msra.mxu0 0.0
    %3977 = vmatprep.subr.mxu0 0.0
    %3978 = vmatpush1.xpose.msra.mxu0 0.0
    %3979 = vmatprep.subr.mxu0 0.0
    %3980 = vmatpush1.xpose.msra.mxu0 0.0
    %3981 = vmatprep.subr.mxu0 0.0
    %3982 = vmatpush1.xpose.msra.mxu0 0.0
    %3983 = vmatprep.subr.mxu0 0.0
    %3984 = vmatpush1.xpose.msra.mxu0 0.0
    %3985 = vmatprep.subr.mxu0 0.0
    %3986 = vmatpush1.xpose.msra.mxu0 0.0
    %3987 = vmatprep.subr.mxu0 0.0
    %3988 = vmatpush1.xpose.msra.mxu0 0.0
    %3989 = vmatprep.subr.mxu0 0.0
    %3990 = vmatpush1.xpose.msra.mxu0 0.0
    %3991 = vmatprep.subr.mxu0 0.0
    %3992 = vmatpush1.xpose.msra.mxu0 0.0
    %3993 = vmatprep.subr.mxu0 0.0
    %3994 = vmatpush1.xpose.msra.mxu0 0.0
    %3995 = vmatprep.subr.mxu0 0.0
    %3996 = vmatpush1.xpose.msra.mxu0 0.0
    %3997 = vmatprep.subr.mxu0 0.0
    %3998 = vmatpush1.xpose.msra.mxu0 0.0
    %3999 = vmatprep.subr.mxu0 0.0
    %4000 = vmatpush1.xpose.msra.mxu0 0.0
    %4001 = vmatprep.subr.mxu0 0.0
    %4002 = vmatpush1.xpose.msra.mxu0 0.0
    %4003 = vmatprep.subr.mxu0 0.0
    %4004 = vmatpush1.xpose.msra.mxu0 0.0
    %4005 = vmatprep.subr.mxu0 0.0
    %4006 = vmatpush1.xpose.msra.mxu0 0.0
    %4007 = vmatprep.subr.mxu0 0.0
    %4008 = vmatpush1.xpose.msra.mxu0 0.0
    %4009 = vmatprep.subr.mxu0 0.0
    %4010 = vmatpush1.xpose.msra.mxu0 0.0
    %4011 = vmatprep.subr.mxu0 0.0
    %4012 = vmatpush1.xpose.msra.mxu0 0.0
    %4013 = vmatprep.subr.mxu0 0.0
    %4014 = vmatpush1.xpose.msra.mxu0 0.0
    %4015 = vmatprep.subr.mxu0 0.0
    %4016 = vmatpush1.xpose.msra.mxu0 0.0
    %4017 = vmatprep.subr.mxu0 0.0
    %4018 = vmatpush1.xpose.msra.mxu0 0.0
    %4019 = vmatprep.subr.mxu0 0.0
    %4020 = vmatpush1.xpose.msra.mxu0 0.0
    %4021 = vmatprep.subr.mxu0 0.0
    %4022 = vmatpush1.xpose.msra.mxu0 0.0
    %4023 = vmatprep.subr.mxu0 0.0
    %4024 = vmatpush1.xpose.msra.mxu0 0.0
    %4025 = vmatprep.subr.mxu0 0.0
    %4026 = vmatpush1.xpose.msra.mxu0 0.0
    %4027 = vmatprep.mubr.f32.mxu0 0.0
    %4028 = vmatmul.mubr.f32.gmra.mrb[0].mxu0 %v3959
    %v4029 = vpop.f32.mrb[0].mxu0
    %v4030 = vadd.f32 0.0, %v4029
    %v4031 = vpop.f32.mrb[0].mxu0
    %4032 = vdwg.mxu0
    %v4033 = vmul.f32 %v4030, 0.25
    %v4034 = vsel %vm302, %v4033, -inf
    %4035 = vmax.xlane.f32.xlu0 %v4034
    %v4036 = vpop.xlane.xlu0 %4035
    %v4037 = vsub.f32 %v4033, %v4036
    %v4038 = vmul.f32 %v4037, 1.442695
    %v4039 = vpow.pop %v4038
    %v4040 = vsel %vm302, %v4039, 0.0
    %4041 = vadd.xlane.f32.xlu0 %v4040
    %v4042 = vpop.xlane.xlu0 %4041
    %v4043 = vrcp.pop %v4042
    %v4044 = vmul.f32 %v4039, %v4043
    %4045 = vrot.lane.b32.xlu0 %v2283, 80
    %v4046 = vpop.permute.xlu0 %4045
    %v4049 = vsel %vm302, %v4044, 0
    %4051 = vmatprep.subr.mxu0 0.0
    %4052 = vmatpush1.msra.mxu0 %v4046
    %4053 = vmatprep.subr.mxu0 0.0
    %4054 = vmatpush1.msra.mxu0 0.0
    %4055 = vmatprep.subr.mxu0 0.0
    %4056 = vmatpush1.msra.mxu0 0.0
    %4057 = vmatprep.subr.mxu0 0.0
    %4058 = vmatpush1.msra.mxu0 0.0
    %4059 = vmatprep.subr.mxu0 0.0
    %4060 = vmatpush1.msra.mxu0 0.0
    %4061 = vmatprep.subr.mxu0 0.0
    %4062 = vmatpush1.msra.mxu0 0.0
    %4063 = vmatprep.subr.mxu0 0.0
    %4064 = vmatpush1.msra.mxu0 0.0
    %4065 = vmatprep.subr.mxu0 0.0
    %4066 = vmatpush1.msra.mxu0 0.0
    %4067 = vmatprep.subr.mxu0 0.0
    %4068 = vmatpush1.msra.mxu0 0.0
    %4069 = vmatprep.subr.mxu0 0.0
    %4070 = vmatpush1.msra.mxu0 0.0
    %4071 = vmatprep.subr.mxu0 0.0
    %4072 = vmatpush1.msra.mxu0 0.0
    %4073 = vmatprep.subr.mxu0 0.0
    %4074 = vmatpush1.msra.mxu0 0.0
    %4075 = vmatprep.subr.mxu0 0.0
    %4076 = vmatpush1.msra.mxu0 0.0
    %4077 = vmatprep.subr.mxu0 0.0
    %4078 = vmatpush1.msra.mxu0 0.0
    %4079 = vmatprep.subr.mxu0 0.0
    %4080 = vmatpush1.msra.mxu0 0.0
    %4081 = vmatprep.subr.mxu0 0.0
    %4082 = vmatpush1.msra.mxu0 0.0
    %4083 = vmatprep.subr.mxu0 0.0
    %4084 = vmatpush1.msra.mxu0 0.0
    %4085 = vmatprep.subr.mxu0 0.0
    %4086 = vmatpush1.msra.mxu0 0.0
    %4087 = vmatprep.subr.mxu0 0.0
    %4088 = vmatpush1.msra.mxu0 0.0
    %4089 = vmatprep.subr.mxu0 0.0
    %4090 = vmatpush1.msra.mxu0 0.0
    %4091 = vmatprep.subr.mxu0 0.0
    %4092 = vmatpush1.msra.mxu0 0.0
    %4093 = vmatprep.subr.mxu0 0.0
    %4094 = vmatpush1.msra.mxu0 0.0
    %4095 = vmatprep.subr.mxu0 0.0
    %4096 = vmatpush1.msra.mxu0 0.0
    %4097 = vmatprep.subr.mxu0 0.0
    %4098 = vmatpush1.msra.mxu0 0.0
    %4099 = vmatprep.subr.mxu0 0.0
    %4100 = vmatpush1.msra.mxu0 0.0
    %4101 = vmatprep.subr.mxu0 0.0
    %4102 = vmatpush1.msra.mxu0 0.0
    %4103 = vmatprep.subr.mxu0 0.0
    %4104 = vmatpush1.msra.mxu0 0.0
    %4105 = vmatprep.subr.mxu0 0.0
    %4106 = vmatpush1.msra.mxu0 0.0
    %4107 = vmatprep.subr.mxu0 0.0
    %4108 = vmatpush1.msra.mxu0 0.0
    %4109 = vmatprep.subr.mxu0 0.0
    %4110 = vmatpush1.msra.mxu0 0.0
    %4111 = vmatprep.subr.mxu0 0.0
    %4112 = vmatpush1.msra.mxu0 0.0
    %4113 = vmatprep.subr.mxu0 0.0
    %4114 = vmatpush1.msra.mxu0 0.0
    %4115 = vmatprep.mubr.f32.mxu0 0.0
    %4116 = vmatmul.mubr.f32.gmra.mrb[0].mxu0 %v4049
    %v4117 = vpop.f32.mrb[0].mxu0
    %v4118 = vadd.f32 0.0, %v4117
    %v4119 = vpop.f32.mrb[0].mxu0
    %4120 = vdwg.mxu0
    %v4122 = vsel %vm226, %v4118, 0
    %4124 = vmatprep.subr.mxu0 0.0
    %4125 = vmatpush1.msra.mxu0 %v2200
    %4126 = vmatprep.subr.mxu0 0.0
    %4127 = vmatpush1.msra.mxu0 %v2201
    %4128 = vmatprep.subr.mxu0 0.0
    %4129 = vmatpush1.msra.mxu0 0.0
    %4130 = vmatprep.subr.mxu0 0.0
    %4131 = vmatpush1.msra.mxu0 0.0
    %4132 = vmatprep.subr.mxu0 0.0
    %4133 = vmatpush1.msra.mxu0 0.0
    %4134 = vmatprep.subr.mxu0 0.0
    %4135 = vmatpush1.msra.mxu0 0.0
    %4136 = vmatprep.subr.mxu0 0.0
    %4137 = vmatpush1.msra.mxu0 0.0
    %4138 = vmatprep.subr.mxu0 0.0
    %4139 = vmatpush1.msra.mxu0 0.0
    %4140 = vmatprep.subr.mxu0 0.0
    %4141 = vmatpush1.msra.mxu0 0.0
    %4142 = vmatprep.subr.mxu0 0.0
    %4143 = vmatpush1.msra.mxu0 0.0
    %4144 = vmatprep.subr.mxu0 0.0
    %4145 = vmatpush1.msra.mxu0 0.0
    %4146 = vmatprep.subr.mxu0 0.0
    %4147 = vmatpush1.msra.mxu0 0.0
    %4148 = vmatprep.subr.mxu0 0.0
    %4149 = vmatpush1.msra.mxu0 0.0
    %4150 = vmatprep.subr.mxu0 0.0
    %4151 = vmatpush1.msra.mxu0 0.0
    %4152 = vmatprep.subr.mxu0 0.0
    %4153 = vmatpush1.msra.mxu0 0.0
    %4154 = vmatprep.subr.mxu0 0.0
    %4155 = vmatpush1.msra.mxu0 0.0
    %4156 = vmatprep.subr.mxu0 0.0
    %4157 = vmatpush1.msra.mxu0 0.0
    %4158 = vmatprep.subr.mxu0 0.0
    %4159 = vmatpush1.msra.mxu0 0.0
    %4160 = vmatprep.subr.mxu0 0.0
    %4161 = vmatpush1.msra.mxu0 0.0
    %4162 = vmatprep.subr.mxu0 0.0
    %4163 = vmatpush1.msra.mxu0 0.0
    %4164 = vmatprep.subr.mxu0 0.0
    %4165 = vmatpush1.msra.mxu0 0.0
    %4166 = vmatprep.subr.mxu0 0.0
    %4167 = vmatpush1.msra.mxu0 0.0
    %4168 = vmatprep.subr.mxu0 0.0
    %4169 = vmatpush1.msra.mxu0 0.0
    %4170 = vmatprep.subr.mxu0 0.0
    %4171 = vmatpush1.msra.mxu0 0.0
    %4172 = vmatprep.subr.mxu0 0.0
    %4173 = vmatpush1.msra.mxu0 0.0
    %4174 = vmatprep.subr.mxu0 0.0
    %4175 = vmatpush1.msra.mxu0 0.0
    %4176 = vmatprep.subr.mxu0 0.0
    %4177 = vmatpush1.msra.mxu0 0.0
    %4178 = vmatprep.subr.mxu0 0.0
    %4179 = vmatpush1.msra.mxu0 0.0
    %4180 = vmatprep.subr.mxu0 0.0
    %4181 = vmatpush1.msra.mxu0 0.0
    %4182 = vmatprep.subr.mxu0 0.0
    %4183 = vmatpush1.msra.mxu0 0.0
    %4184 = vmatprep.subr.mxu0 0.0
    %4185 = vmatpush1.msra.mxu0 0.0
    %4186 = vmatprep.subr.mxu0 0.0
    %4187 = vmatpush1.msra.mxu0 0.0
    %4188 = vmatprep.mubr.f32.mxu0 0.0
    %4189 = vmatmul.mubr.f32.gmra.mrb[0].mxu0 %v4122
    %v4190 = vpop.f32.mrb[0].mxu0
    %v4191 = vadd.f32 0.0, %v4190
    %v4192 = vpop.f32.mrb[0].mxu0
    %4193 = vdwg.mxu0
    %v4194 = vadd.f32 %v3954, %v4191
    %v4195 = vadd.f32 %v2182, %v3239
    %v4196 = vadd.f32 %v2183, %v4194
    %v4197 = vsel %vm139, %v4195, 0.0
    %v4198 = vsel %vm139, %v4196, 0.0
    %v4199 = vadd.f32 %v4197, %v4198
    %v4200 = vrot.slane %v4199, 4
    %v4201 = vadd.f32 %v4199, %v4200
    %v4202 = vrot.slane %v4201, 2
    %v4203 = vadd.f32 %v4201, %v4202
    %v4204 = vrot.slane %v4203, 1
    %v4205 = vadd.f32 %v4203, %v4204
    %v4206 = vmul.f32 %v4205, %v2146
    %v4207 = vsub.f32 %v4195, %v4206
    %v4208 = vsub.f32 %v4196, %v4206
    %v4209 = vmul.f32 %v4207, %v4207
    %v4210 = vmul.f32 %v4208, %v4208
    %v4211 = vsel %vm139, %v4209, 0.0
    %v4212 = vsel %vm139, %v4210, 0.0
    %v4213 = vadd.f32 %v4211, %v4212
    %v4214 = vrot.slane %v4213, 4
    %v4215 = vadd.f32 %v4213, %v4214
    %v4216 = vrot.slane %v4215, 2
    %v4217 = vadd.f32 %v4215, %v4216
    %v4218 = vrot.slane %v4217, 1
    %v4219 = vadd.f32 %v4217, %v4218
    %v4220 = vmul.f32 %v4219, %v2146
    %v4221 = vadd.f32 %v4220, 1e-05
    %v4222 = vrsqrt.pop %v4221
    %v4223 = vmul.f32 %v4207, %v4222
    %v4224 = vmul.f32 %v4208, %v4222
    %s4225 = scalar_lea.vmem %s5, 1
    %v4226 = vld [vmem:[%s4225] sm:$0x1]
    %v4228 = vlaneseq
    %v4229 = vshrl.u32 %v4228, 7
    %v4230 = vsub.s32 0, %v4229
    %v4231 = vrot.slane %v4226, %v4230
    %v4233 = vmul.f32 %v4223, %v4231
    %v4234 = vmul.f32 %v4224, %v4231
    %s4235 = scalar_lea.vmem %s6, 1
    %v4236 = vld [vmem:[%s4235] sm:$0x1]
    %v4238 = vlaneseq
    %v4239 = vshrl.u32 %v4238, 7
    %v4240 = vsub.s32 0, %v4239
    %v4241 = vrot.slane %v4236, %v4240
    %v4243 = vadd.f32 %v4233, %v4241
    %v4244 = vadd.f32 %v4234, %v4241
    %4245 = vst.msk [vmem:[#allocation2] sm:$0xff] %vm139, %v4243
    %4246 = vst.msk [vmem:[#allocation2 + $0x8] sm:$0xff] %vm139, %v4244
    // Predicated region
    $region30: #{tpu_custom_call.1} parent=1 // pred_check
      _
    $region31: #{tpu_custom_call.1} parent=1 // pred_check_branch
      %4248 = sbr.rel (0) target = $region33
    $region32: #{tpu_custom_call.1} parent=1 // pred_region
      %s4250 = ssub.s32 256, 256
      %4251 = vsyncadd [#allocation3], %s4250
      %s4252 = sshll.u32 [#allocation2], 4
      %s4253 = int_to_ptr.vmem [resolvable:$true] %s4252
      %4258 = dma.vmem_to_hbm [thread:$0]  %s4253, 256, %s7, [#allocation3], 128, 128, 8
    $region33: #{tpu_custom_call.1} parent=1 // pred_fallthru
      _
    // Predicated region
    $region34: #{tpu_custom_call.1} parent=1 // pred_check
      _
    $region35: #{tpu_custom_call.1} parent=1 // pred_check_branch
      %4260 = sbr.rel (0) target = $region37
    $region36: #{tpu_custom_call.1} parent=1 // pred_region
      %4261 = dma.done [#allocation3], 256
    $region37: #{tpu_custom_call.1} parent=1 // pred_fallthru
      _
    %4262 = vsyncpa [#allocation3], 1

</llo_original>
